<compile_context>
chip_gen: v7x
topology: tpu7x:2x2x1
jax: 0.10.0
libtpu: 0.0.40
codegen_flags: <defaults>
</compile_context>

<pallas_src>
import functools

import jax
import jax.numpy as jnp
from jax import lax
from jax.experimental import pallas as pl
from jax.experimental.pallas import tpu as pltpu

COMPUTE_DTYPE = jnp.bfloat16      # MXU input dtype; accumulation stays float32


# ----------------------------------------------------------------------------
# in-kernel helpers
# ----------------------------------------------------------------------------
def _conv3x3_valid(xp, w9, b, *, relu):
    """VALID 3x3 conv of an already padded/haloed VMEM tile (im2col in VMEM).

    xp : (R+2, W+2, Cin) f32   activation tile (halo / SAME padding included)
    w9 : (9, Cin, Cout)  bf16  taps in (ky, kx) row-major order
    b  : (1, Cout)       f32
    ->   (R, W, Cout)    f32   (bias added, optional ReLU), f32 accumulation
    """
    Rext, Wext, Cin = xp.shape
    R, Wo = Rext - 2, Wext - 2
    Cout = w9.shape[-1]
    acc = jnp.zeros((R * Wo, Cout), jnp.float32)
    for dy in range(3):
        for dx in range(3):
            tap = xp[dy:dy + R, dx:dx + Wo, :].reshape(R * Wo, Cin)
            acc = acc + jnp.dot(tap.astype(COMPUTE_DTYPE), w9[dy * 3 + dx],
                                preferred_element_type=jnp.float32)
    acc = acc + b
    if relu:
        acc = jnp.maximum(acc, 0.0)
    return acc.reshape(R, Wo, Cout)


def _row_validity(r_start, nrows, w, h):
    """(nrows, w, 1) f32 mask: 1.0 where the global row index lies in [0, h)."""
    g = r_start + lax.broadcasted_iota(jnp.int32, (nrows, w), 0)
    return ((g >= 0) & (g < h)).astype(jnp.float32).reshape(nrows, w, 1)


# ----------------------------------------------------------------------------
# fused forward kernel:  conv -> conv [-> concat] -> conv -> GAP -> fc
# ----------------------------------------------------------------------------
def _fused_forward_kernel(x_ref, w1_ref, b1_ref, w2_ref, b2_ref,
                          w3_ref, b3_ref, fcw_ref, fcb_ref, *rest,
                          H, W, TR, concat, write_mask, write_feat):
    rest = list(rest)
    logits_ref = rest.pop(0)
    mask_ref = rest.pop(0) if write_mask else None
    feat_ref = rest.pop(0) if write_feat else None
    acc_ref = rest.pop(0)                      # (1, C3) f32 GAP accumulator

    rt = pl.program_id(1)
    num_rt = pl.num_programs(1)
    r0 = rt * TR

    # ---- input row window: TR rows + 3-row halo each side --------------------
    # x_ref holds the whole zero-padded image for this batch element (bf16).
    start = pl.multiple_of(r0, TR)
    xwin = x_ref[pl.ds(start, TR + 6), :, :].astype(jnp.float32)   # (TR+6, W+2, Cin)

    # ---- segmentation conv1: Cin -> C1, ReLU   (rows [r0-2, r0+TR+2)) --------
    h1 = _conv3x3_valid(xwin, w1_ref[...], b1_ref[...], relu=True)
    h1 = h1 * _row_validity(r0 - 2, TR + 4, W, H)   # out-of-image rows act as
    zc1 = jnp.zeros((TR + 4, 1, h1.shape[-1]), h1.dtype)   # conv2 zero padding
    h1 = jnp.concatenate([zc1, h1, zc1], axis=1)           # SAME pad columns

    # ---- segmentation conv2 (mask head): C1 -> C2   (rows [r0-1, r0+TR+1)) ---
    m = _conv3x3_valid(h1, w2_ref[...], b2_ref[...], relu=False)
    m = m * _row_validity(r0 - 1, TR + 2, W, H)
    zc2 = jnp.zeros((TR + 2, 1, m.shape[-1]), m.dtype)
    m = jnp.concatenate([zc2, m, zc2], axis=1)
    if concat:
        # torch.cat([x, mask], dim=1): x channels first.
        x_part = xwin[2:2 + TR + 2, :, :]                  # rows [r0-1, r0+TR+1)
        m = jnp.concatenate([x_part, m], axis=-1)

    # ---- classification conv1: -> C3, ReLU   (rows [r0, r0+TR)) --------------
    f = _conv3x3_valid(m, w3_ref[...], b3_ref[...], relu=True)

    # ---- global-average-pool partial sum + fc at the last row tile -----------
    part = jnp.sum(f.reshape(TR * W, f.shape[-1]), axis=0, keepdims=True)

    @pl.when(rt == 0)
    def _():
        acc_ref[...] = jnp.zeros_like(acc_ref)

    acc_ref[...] += part

    @pl.when(rt == num_rt - 1)
    def _():
        pooled = acc_ref[...] * (1.0 / (H * W))            # (1, C3) f32
        logits = jnp.dot(pooled.astype(COMPUTE_DTYPE), fcw_ref[...],
                         preferred_element_type=jnp.float32) + fcb_ref[...]
        logits_ref[...] = logits.astype(logits_ref.dtype)

    # optional writebacks (only compiled in when the caller asks for them;
    # TODO(synk): these are narrow-lane stores - pack lane-dense if they ever
    # become hot).
    if write_mask:
        mask_ref[...] = m[1:TR + 1, 1:W + 1, :].astype(mask_ref.dtype)
    if write_feat:
        feat_ref[...] = f.astype(feat_ref.dtype)


def _fused_forward(xp, params, *, H, W, TR, concat, want_mask, want_feat):
    N, Hp, Wp, Cin = xp.shape
    assert Hp == H + 6 and Wp == W + 2 and H % TR == 0
    w1, b1 = params["seg_w1"], params["seg_b1"]
    w2, b2 = params["seg_w2"], params["seg_b2"]
    w3, b3 = params["cls_w1"], params["cls_b1"]
    fcw, fcb = params["fc_w"], params["fc_b"]
    C2, C3, K = w2.shape[-1], w3.shape[-1], fcw.shape[-1]
    Cmask = Cin + C2 if concat else C2
    RT = H // TR

    full3 = lambda n, rt: (0, 0, 0)
    full2 = lambda n, rt: (0, 0)
    in_specs = [
        # whole padded image: block index constant in rt -> DMA'd once per n,
        # auto double-buffered across the batch ("parallel") axis.
        pl.BlockSpec((None, H + 6, W + 2, Cin), lambda n, rt: (n, 0, 0, 0)),
        pl.BlockSpec(w1.shape, full3), pl.BlockSpec(b1.shape, full2),
        pl.BlockSpec(w2.shape, full3), pl.BlockSpec(b2.shape, full2),
        pl.BlockSpec(w3.shape, full3), pl.BlockSpec(b3.shape, full2),
        pl.BlockSpec(fcw.shape, full2), pl.BlockSpec(fcb.shape, full2),
    ]
    out_shapes = [jax.ShapeDtypeStruct((N, 1, K), jnp.float32)]
    out_specs = [pl.BlockSpec((None, 1, K), lambda n, rt: (n, 0, 0))]
    if want_mask:
        out_shapes.append(jax.ShapeDtypeStruct((N, H, W, Cmask), jnp.float32))
        out_specs.append(
            pl.BlockSpec((None, TR, W, Cmask), lambda n, rt: (n, rt, 0, 0)))
    if want_feat:
        out_shapes.append(jax.ShapeDtypeStruct((N, H, W, C3), jnp.float32))
        out_specs.append(
            pl.BlockSpec((None, TR, W, C3), lambda n, rt: (n, rt, 0, 0)))

    kernel = functools.partial(
        _fused_forward_kernel, H=H, W=W, TR=TR, concat=concat,
        write_mask=want_mask, write_feat=want_feat)

    return pl.pallas_call(
        kernel,
        out_shape=tuple(out_shapes),
        grid=(N, RT),                      # reduction (row-tile / GAP) axis last
        in_specs=in_specs,
        out_specs=tuple(out_specs),
        scratch_shapes=[pltpu.VMEM((1, C3), jnp.float32)],   # GAP accumulator
        compiler_params=pltpu.CompilerParams(
            dimension_semantics=("parallel", "arbitrary")),  # v7x: shard batch
    )(xp, w1, b1, w2, b2, w3, b3, fcw, fcb)


# ----------------------------------------------------------------------------
# parameters + public forward (mirrors SegmentationAndClassification.forward)
# ----------------------------------------------------------------------------
def init_params(key, in_channels=3, seg_hidden=16, segmentation_classes=5,
                cls_hidden=32, classification_classes=11,
                concat_original=False):
    ks = jax.random.split(key, 8)

    def conv_w(k, cout, cin):
        # torch (Cout, Cin, 3, 3) -> packed (9, Cin, Cout) once at init (no
        # per-forward transpose), cast to the MXU input dtype.
        w = jax.random.normal(k, (cout, cin, 3, 3), jnp.float32)
        w = w * (1.0 / (9.0 * cin) ** 0.5)
        return jnp.transpose(w, (2, 3, 1, 0)).reshape(9, cin, cout).astype(COMPUTE_DTYPE)

    def bias(k, c):
        return 0.1 * jax.random.normal(k, (1, c), jnp.float32)

    cls_in = (in_channels + segmentation_classes) if concat_original \
        else segmentation_classes
    return dict(
        # TODO(synk): smp.Unet(se_resnext50_32x4d) encoder/decoder is not
        # reproduced; a conv-relu-conv surrogate with identical I/O is used.
        seg_w1=conv_w(ks[0], seg_hidden, in_channels),
        seg_b1=bias(ks[1], seg_hidden),
        seg_w2=conv_w(ks[2], segmentation_classes, seg_hidden),
        seg_b2=bias(ks[3], segmentation_classes),
        # TODO(synk): timm resnet18 backbone is not reproduced; conv-relu ->
        # global_pool -> fc (pool_fc semantics, drop_rate=0) is used.
        cls_w1=conv_w(ks[4], cls_hidden, cls_in),
        cls_b1=bias(ks[5], cls_hidden),
        fc_w=(jax.random.normal(ks[6], (cls_hidden, classification_classes),
                                jnp.float32)
              * (1.0 / cls_hidden ** 0.5)).astype(COMPUTE_DTYPE),
        fc_b=bias(ks[7], classification_classes),
    )


def segmentation_and_classification(params, x_nchw, *, return_mask=False,
                                    return_feature=False,
                                    concat_original=False, row_tile=8):
    """Inference forward pass.  x_nchw: (N, C, H, W) float32 (torch layout)."""
    x = jnp.transpose(x_nchw, (0, 2, 3, 1))                      # NCHW -> NHWC
    N, H, W, Cin = x.shape
    TR = row_tile if (row_tile > 0 and H % row_tile == 0) else H
    # TODO(synk): mask a ragged last row-tile instead of falling back to TR=H.

    # one cheap HBM pad: 3 halo rows (one per chained 3x3 conv) + 1 SAME-pad
    # column; stored bf16 to halve input DMA bytes.
    xp = jnp.pad(x, ((0, 0), (3, 3), (1, 1), (0, 0))).astype(COMPUTE_DTYPE)

    outs = _fused_forward(xp, params, H=H, W=W, TR=TR, concat=concat_original,
                          want_mask=return_mask, want_feat=return_feature)
    logits = outs[0].reshape(N, -1)

    i = 1
    mask = feat = None
    if return_mask:            # NHWC -> NCHW only when actually requested
        mask = jnp.transpose(outs[i], (0, 3, 1, 2)); i += 1
    if return_feature:
        feat = jnp.transpose(outs[i], (0, 3, 1, 2)); i += 1

    if return_mask and return_feature:
        return mask, feat, logits
    if return_mask:
        return mask, logits
    if return_feature:
        return feat, logits
    return logits


# ----------------------------------------------------------------------------
# pure-JAX reference (same bf16 rounding points as the kernel)
# ----------------------------------------------------------------------------
def _reference_forward(params, x_nchw, *, concat=False):
    f32 = jnp.float32

    def rnd(a):
        return a.astype(COMPUTE_DTYPE).astype(f32)

    def conv(h, w9, b, relu):
        cin, cout = w9.shape[1], w9.shape[2]
        w = w9.astype(f32).reshape(3, 3, cin, cout)              # HWIO
        y = lax.conv_general_dilated(
            h, w, window_strides=(1, 1), padding="SAME",
            dimension_numbers=("NHWC", "HWIO", "NHWC")) + b.reshape(1, 1, 1, -1)
        return jnp.maximum(y, 0.0) if relu else y

    x = rnd(jnp.transpose(x_nchw, (0, 2, 3, 1)))
    h1 = conv(x, params["seg_w1"], params["seg_b1"], True)
    m = conv(rnd(h1), params["seg_w2"], params["seg_b2"], False)
    if concat:
        m = jnp.concatenate([x, m], axis=-1)
    f = conv(rnd(m), params["cls_w1"], params["cls_b1"], True)
    pooled = jnp.mean(f, axis=(1, 2))
    logits = rnd(pooled) @ params["fc_w"].astype(f32) + params["fc_b"]
    return logits, jnp.transpose(m, (0, 3, 1, 2)), jnp.transpose(f, (0, 3, 1, 2))


# ----------------------------------------------------------------------------
if __name__ == "__main__":
    key = jax.random.PRNGKey(0)
    pkey, xkey = jax.random.split(key)

    params = init_params(pkey)                               # concat_original=False
    x = jax.random.normal(xkey, (2, 3, 16, 16), jnp.float32)  # NCHW, like torch

    # default forward(): classification logits only
    fwd = jax.jit(lambda p, xx: segmentation_and_classification(p, xx))
    logits = jax.block_until_ready(fwd(params, x))
    assert logits.shape == (2, 11), logits.shape
    assert bool(jnp.all(jnp.isfinite(logits)))

    ref_logits, ref_mask, ref_feat = _reference_forward(params, x)
    assert jnp.allclose(logits, ref_logits, rtol=2e-3, atol=2e-3), (
        float(jnp.max(jnp.abs(logits - ref_logits))))

    # exercise the mask / feature output paths as well
    fwd_mf = jax.jit(functools.partial(segmentation_and_classification,
                                       return_mask=True, return_feature=True))
    mask, feat, logits2 = jax.block_until_ready(fwd_mf(params, x))
    assert mask.shape == (2, 5, 16, 16) and feat.shape == (2, 32, 16, 16)
    assert jnp.allclose(logits2, ref_logits, rtol=2e-3, atol=2e-3)
    assert jnp.allclose(mask, ref_mask, rtol=2e-3, atol=2e-3)
    assert jnp.allclose(feat, ref_feat, rtol=2e-3, atol=2e-3)

    print("KERNEL_OK")
</pallas_src>

<mosaic_0001>
module attributes {stable_mosaic.version = 11 : i64} {
  func.func @_fused_forward_kernel(%arg0: i32, %arg1: i32, %arg2: memref<1x22x18x3xbf16, #tpu.memory_space<vmem>>, %arg3: memref<9x3x16xbf16, #tpu.memory_space<vmem>>, %arg4: memref<1x16xf32, #tpu.memory_space<vmem>>, %arg5: memref<9x16x5xbf16, #tpu.memory_space<vmem>>, %arg6: memref<1x5xf32, #tpu.memory_space<vmem>>, %arg7: memref<9x5x32xbf16, #tpu.memory_space<vmem>>, %arg8: memref<1x32xf32, #tpu.memory_space<vmem>>, %arg9: memref<32x11xbf16, #tpu.memory_space<vmem>>, %arg10: memref<1x11xf32, #tpu.memory_space<vmem>>, %arg11: memref<1x1x11xf32, #tpu.memory_space<vmem>>, %arg12: memref<1x32xf32, #tpu.memory_space<vmem>>) attributes {dimension_semantics = [#tpu.dimension_semantics<parallel>, #tpu.dimension_semantics<arbitrary>], iteration_bounds = array<i64: 2, 2>, scalar_prefetch = 0 : i64, scratch_operands = 1 : i64, tpu.core_type = #tpu.core_type<tc>, window_params = [{transform_indices = @transform_0, window_bounds = array<i64: 1, 22, 18, 3>}, {pipeline_mode = #tpu.pipeline_mode<synchronous>, transform_indices = @transform_1, window_bounds = array<i64: 9, 3, 16>}, {pipeline_mode = #tpu.pipeline_mode<synchronous>, transform_indices = @transform_2, window_bounds = array<i64: 1, 16>}, {pipeline_mode = #tpu.pipeline_mode<synchronous>, transform_indices = @transform_3, window_bounds = array<i64: 9, 16, 5>}, {pipeline_mode = #tpu.pipeline_mode<synchronous>, transform_indices = @transform_4, window_bounds = array<i64: 1, 5>}, {pipeline_mode = #tpu.pipeline_mode<synchronous>, transform_indices = @transform_5, window_bounds = array<i64: 9, 5, 32>}, {pipeline_mode = #tpu.pipeline_mode<synchronous>, transform_indices = @transform_6, window_bounds = array<i64: 1, 32>}, {pipeline_mode = #tpu.pipeline_mode<synchronous>, transform_indices = @transform_7, window_bounds = array<i64: 32, 11>}, {pipeline_mode = #tpu.pipeline_mode<synchronous>, transform_indices = @transform_8, window_bounds = array<i64: 1, 11>}, {transform_indices = @transform_9, window_bounds = array<i64: 1, 1, 11>}]} {
    %c8_i32 = arith.constant 8 : i32
    %0 = arith.muli %arg1, %c8_i32 : i32
    %1 = tpu.assume_multiple %0, 8 : i32
    %c0 = arith.constant 0 : index
    %2 = arith.index_cast %1 : i32 to index
    %c0_0 = arith.constant 0 : index
    %c0_1 = arith.constant 0 : index
    %3 = vector.load %arg2[%c0, %2, %c0_0, %c0_1] : memref<1x22x18x3xbf16, #tpu.memory_space<vmem>>, vector<1x14x18x3xbf16>
    %4 = vector.shape_cast %3 : vector<1x14x18x3xbf16> to vector<14x18x3xbf16>
    %5 = arith.extf %4 : vector<14x18x3xbf16> to vector<14x18x3xf32>
    %c0_2 = arith.constant 0 : index
    %c0_3 = arith.constant 0 : index
    %c0_4 = arith.constant 0 : index
    %6 = vector.load %arg3[%c0_2, %c0_3, %c0_4] : memref<9x3x16xbf16, #tpu.memory_space<vmem>>, vector<9x3x16xbf16>
    %c0_5 = arith.constant 0 : index
    %c0_6 = arith.constant 0 : index
    %7 = vector.load %arg4[%c0_5, %c0_6] : memref<1x16xf32, #tpu.memory_space<vmem>>, vector<1x16xf32>
    %cst = arith.constant 0.000000e+00 : f32
    %8 = vector.broadcast %cst : f32 to vector<192x16xf32>
    %9 = vector.extract_strided_slice %5 {offsets = [0, 0, 0], sizes = [12, 16, 3], strides = [1, 1, 1]} : vector<14x18x3xf32> to vector<12x16x3xf32>
    %10 = vector.shape_cast %9 : vector<12x16x3xf32> to vector<192x3xf32>
    %11 = arith.truncf %10 : vector<192x3xf32> to vector<192x3xbf16>
    %12 = vector.extract_strided_slice %6 {offsets = [0, 0, 0], sizes = [1, 3, 16], strides = [1, 1, 1]} : vector<9x3x16xbf16> to vector<1x3x16xbf16>
    %13 = vector.shape_cast %12 : vector<1x3x16xbf16> to vector<3x16xbf16>
    %cst_7 = arith.constant dense<0.000000e+00> : vector<192x16xf32>
    %14 = tpu.matmul %11, %13, %cst_7 {dimension_numbers = #tpu.dot_dimension_numbers<[1], [0], [0], [1], [0, 0, 1, 1], [], []>} : vector<192x3xbf16>, vector<3x16xbf16>, vector<192x16xf32> -> vector<192x16xf32>
    %15 = arith.addf %8, %14 : vector<192x16xf32>
    %16 = vector.extract_strided_slice %5 {offsets = [0, 1, 0], sizes = [12, 16, 3], strides = [1, 1, 1]} : vector<14x18x3xf32> to vector<12x16x3xf32>
    %17 = vector.shape_cast %16 : vector<12x16x3xf32> to vector<192x3xf32>
    %18 = arith.truncf %17 : vector<192x3xf32> to vector<192x3xbf16>
    %19 = vector.extract_strided_slice %6 {offsets = [1, 0, 0], sizes = [1, 3, 16], strides = [1, 1, 1]} : vector<9x3x16xbf16> to vector<1x3x16xbf16>
    %20 = vector.shape_cast %19 : vector<1x3x16xbf16> to vector<3x16xbf16>
    %cst_8 = arith.constant dense<0.000000e+00> : vector<192x16xf32>
    %21 = tpu.matmul %18, %20, %cst_8 {dimension_numbers = #tpu.dot_dimension_numbers<[1], [0], [0], [1], [0, 0, 1, 1], [], []>} : vector<192x3xbf16>, vector<3x16xbf16>, vector<192x16xf32> -> vector<192x16xf32>
    %22 = arith.addf %15, %21 : vector<192x16xf32>
    %23 = vector.extract_strided_slice %5 {offsets = [0, 2, 0], sizes = [12, 16, 3], strides = [1, 1, 1]} : vector<14x18x3xf32> to vector<12x16x3xf32>
    %24 = vector.shape_cast %23 : vector<12x16x3xf32> to vector<192x3xf32>
    %25 = arith.truncf %24 : vector<192x3xf32> to vector<192x3xbf16>
    %26 = vector.extract_strided_slice %6 {offsets = [2, 0, 0], sizes = [1, 3, 16], strides = [1, 1, 1]} : vector<9x3x16xbf16> to vector<1x3x16xbf16>
    %27 = vector.shape_cast %26 : vector<1x3x16xbf16> to vector<3x16xbf16>
    %cst_9 = arith.constant dense<0.000000e+00> : vector<192x16xf32>
    %28 = tpu.matmul %25, %27, %cst_9 {dimension_numbers = #tpu.dot_dimension_numbers<[1], [0], [0], [1], [0, 0, 1, 1], [], []>} : vector<192x3xbf16>, vector<3x16xbf16>, vector<192x16xf32> -> vector<192x16xf32>
    %29 = arith.addf %22, %28 : vector<192x16xf32>
    %30 = vector.extract_strided_slice %5 {offsets = [1, 0, 0], sizes = [12, 16, 3], strides = [1, 1, 1]} : vector<14x18x3xf32> to vector<12x16x3xf32>
    %31 = vector.shape_cast %30 : vector<12x16x3xf32> to vector<192x3xf32>
    %32 = arith.truncf %31 : vector<192x3xf32> to vector<192x3xbf16>
    %33 = vector.extract_strided_slice %6 {offsets = [3, 0, 0], sizes = [1, 3, 16], strides = [1, 1, 1]} : vector<9x3x16xbf16> to vector<1x3x16xbf16>
    %34 = vector.shape_cast %33 : vector<1x3x16xbf16> to vector<3x16xbf16>
    %cst_10 = arith.constant dense<0.000000e+00> : vector<192x16xf32>
    %35 = tpu.matmul %32, %34, %cst_10 {dimension_numbers = #tpu.dot_dimension_numbers<[1], [0], [0], [1], [0, 0, 1, 1], [], []>} : vector<192x3xbf16>, vector<3x16xbf16>, vector<192x16xf32> -> vector<192x16xf32>
    %36 = arith.addf %29, %35 : vector<192x16xf32>
    %37 = vector.extract_strided_slice %5 {offsets = [1, 1, 0], sizes = [12, 16, 3], strides = [1, 1, 1]} : vector<14x18x3xf32> to vector<12x16x3xf32>
    %38 = vector.shape_cast %37 : vector<12x16x3xf32> to vector<192x3xf32>
    %39 = arith.truncf %38 : vector<192x3xf32> to vector<192x3xbf16>
    %40 = vector.extract_strided_slice %6 {offsets = [4, 0, 0], sizes = [1, 3, 16], strides = [1, 1, 1]} : vector<9x3x16xbf16> to vector<1x3x16xbf16>
    %41 = vector.shape_cast %40 : vector<1x3x16xbf16> to vector<3x16xbf16>
    %cst_11 = arith.constant dense<0.000000e+00> : vector<192x16xf32>
    %42 = tpu.matmul %39, %41, %cst_11 {dimension_numbers = #tpu.dot_dimension_numbers<[1], [0], [0], [1], [0, 0, 1, 1], [], []>} : vector<192x3xbf16>, vector<3x16xbf16>, vector<192x16xf32> -> vector<192x16xf32>
    %43 = arith.addf %36, %42 : vector<192x16xf32>
    %44 = vector.extract_strided_slice %5 {offsets = [1, 2, 0], sizes = [12, 16, 3], strides = [1, 1, 1]} : vector<14x18x3xf32> to vector<12x16x3xf32>
    %45 = vector.shape_cast %44 : vector<12x16x3xf32> to vector<192x3xf32>
    %46 = arith.truncf %45 : vector<192x3xf32> to vector<192x3xbf16>
    %47 = vector.extract_strided_slice %6 {offsets = [5, 0, 0], sizes = [1, 3, 16], strides = [1, 1, 1]} : vector<9x3x16xbf16> to vector<1x3x16xbf16>
    %48 = vector.shape_cast %47 : vector<1x3x16xbf16> to vector<3x16xbf16>
    %cst_12 = arith.constant dense<0.000000e+00> : vector<192x16xf32>
    %49 = tpu.matmul %46, %48, %cst_12 {dimension_numbers = #tpu.dot_dimension_numbers<[1], [0], [0], [1], [0, 0, 1, 1], [], []>} : vector<192x3xbf16>, vector<3x16xbf16>, vector<192x16xf32> -> vector<192x16xf32>
    %50 = arith.addf %43, %49 : vector<192x16xf32>
    %51 = vector.extract_strided_slice %5 {offsets = [2, 0, 0], sizes = [12, 16, 3], strides = [1, 1, 1]} : vector<14x18x3xf32> to vector<12x16x3xf32>
    %52 = vector.shape_cast %51 : vector<12x16x3xf32> to vector<192x3xf32>
    %53 = arith.truncf %52 : vector<192x3xf32> to vector<192x3xbf16>
    %54 = vector.extract_strided_slice %6 {offsets = [6, 0, 0], sizes = [1, 3, 16], strides = [1, 1, 1]} : vector<9x3x16xbf16> to vector<1x3x16xbf16>
    %55 = vector.shape_cast %54 : vector<1x3x16xbf16> to vector<3x16xbf16>
    %cst_13 = arith.constant dense<0.000000e+00> : vector<192x16xf32>
    %56 = tpu.matmul %53, %55, %cst_13 {dimension_numbers = #tpu.dot_dimension_numbers<[1], [0], [0], [1], [0, 0, 1, 1], [], []>} : vector<192x3xbf16>, vector<3x16xbf16>, vector<192x16xf32> -> vector<192x16xf32>
    %57 = arith.addf %50, %56 : vector<192x16xf32>
    %58 = vector.extract_strided_slice %5 {offsets = [2, 1, 0], sizes = [12, 16, 3], strides = [1, 1, 1]} : vector<14x18x3xf32> to vector<12x16x3xf32>
    %59 = vector.shape_cast %58 : vector<12x16x3xf32> to vector<192x3xf32>
    %60 = arith.truncf %59 : vector<192x3xf32> to vector<192x3xbf16>
    %61 = vector.extract_strided_slice %6 {offsets = [7, 0, 0], sizes = [1, 3, 16], strides = [1, 1, 1]} : vector<9x3x16xbf16> to vector<1x3x16xbf16>
    %62 = vector.shape_cast %61 : vector<1x3x16xbf16> to vector<3x16xbf16>
    %cst_14 = arith.constant dense<0.000000e+00> : vector<192x16xf32>
    %63 = tpu.matmul %60, %62, %cst_14 {dimension_numbers = #tpu.dot_dimension_numbers<[1], [0], [0], [1], [0, 0, 1, 1], [], []>} : vector<192x3xbf16>, vector<3x16xbf16>, vector<192x16xf32> -> vector<192x16xf32>
    %64 = arith.addf %57, %63 : vector<192x16xf32>
    %65 = vector.extract_strided_slice %5 {offsets = [2, 2, 0], sizes = [12, 16, 3], strides = [1, 1, 1]} : vector<14x18x3xf32> to vector<12x16x3xf32>
    %66 = vector.shape_cast %65 : vector<12x16x3xf32> to vector<192x3xf32>
    %67 = arith.truncf %66 : vector<192x3xf32> to vector<192x3xbf16>
    %68 = vector.extract_strided_slice %6 {offsets = [8, 0, 0], sizes = [1, 3, 16], strides = [1, 1, 1]} : vector<9x3x16xbf16> to vector<1x3x16xbf16>
    %69 = vector.shape_cast %68 : vector<1x3x16xbf16> to vector<3x16xbf16>
    %cst_15 = arith.constant dense<0.000000e+00> : vector<192x16xf32>
    %70 = tpu.matmul %67, %69, %cst_15 {dimension_numbers = #tpu.dot_dimension_numbers<[1], [0], [0], [1], [0, 0, 1, 1], [], []>} : vector<192x3xbf16>, vector<3x16xbf16>, vector<192x16xf32> -> vector<192x16xf32>
    %71 = arith.addf %64, %70 : vector<192x16xf32>
    %72 = vector.broadcast %7 : vector<1x16xf32> to vector<192x16xf32>
    %73 = arith.addf %71, %72 : vector<192x16xf32>
    %cst_16 = arith.constant 0.000000e+00 : f32
    %74 = vector.broadcast %cst_16 : f32 to vector<192x16xf32>
    %75 = arith.maximumf %73, %74 : vector<192x16xf32>
    %76 = vector.shape_cast %75 : vector<192x16xf32> to vector<12x16x16xf32>
    %c2_i32 = arith.constant 2 : i32
    %77 = arith.subi %0, %c2_i32 : i32
    %78 = tpu.iota {dimensions = array<i32: 0>} : vector<12x16xi32>
    %79 = vector.broadcast %77 : i32 to vector<12x16xi32>
    %80 = arith.addi %79, %78 : vector<12x16xi32>
    %c0_i32 = arith.constant 0 : i32
    %81 = vector.broadcast %c0_i32 : i32 to vector<12x16xi32>
    %82 = arith.cmpi sge, %80, %81 : vector<12x16xi32>
    %c16_i32 = arith.constant 16 : i32
    %83 = vector.broadcast %c16_i32 : i32 to vector<12x16xi32>
    %84 = arith.cmpi slt, %80, %83 : vector<12x16xi32>
    %85 = arith.andi %82, %84 : vector<12x16xi1>
    %86 = arith.extui %85 : vector<12x16xi1> to vector<12x16xi32>
    %87 = arith.sitofp %86 : vector<12x16xi32> to vector<12x16xf32>
    %88 = vector.shape_cast %87 : vector<12x16xf32> to vector<12x16x1xf32>
    %89 = vector.broadcast %88 : vector<12x16x1xf32> to vector<12x16x16xf32>
    %90 = arith.mulf %76, %89 : vector<12x16x16xf32>
    %cst_17 = arith.constant 0.000000e+00 : f32
    %91 = vector.broadcast %cst_17 : f32 to vector<12x1x16xf32>
    %92 = tpu.concatenate %91, %90, %91 in 1 : vector<12x1x16xf32>, vector<12x16x16xf32>, vector<12x1x16xf32> -> vector<12x18x16xf32>
    %c0_18 = arith.constant 0 : index
    %c0_19 = arith.constant 0 : index
    %c0_20 = arith.constant 0 : index
    %93 = vector.load %arg5[%c0_18, %c0_19, %c0_20] : memref<9x16x5xbf16, #tpu.memory_space<vmem>>, vector<9x16x5xbf16>
    %c0_21 = arith.constant 0 : index
    %c0_22 = arith.constant 0 : index
    %94 = vector.load %arg6[%c0_21, %c0_22] : memref<1x5xf32, #tpu.memory_space<vmem>>, vector<1x5xf32>
    %cst_23 = arith.constant 0.000000e+00 : f32
    %95 = vector.broadcast %cst_23 : f32 to vector<160x5xf32>
    %96 = vector.extract_strided_slice %92 {offsets = [0, 0, 0], sizes = [10, 16, 16], strides = [1, 1, 1]} : vector<12x18x16xf32> to vector<10x16x16xf32>
    %97 = vector.shape_cast %96 : vector<10x16x16xf32> to vector<160x16xf32>
    %98 = arith.truncf %97 : vector<160x16xf32> to vector<160x16xbf16>
    %99 = vector.extract_strided_slice %93 {offsets = [0, 0, 0], sizes = [1, 16, 5], strides = [1, 1, 1]} : vector<9x16x5xbf16> to vector<1x16x5xbf16>
    %100 = vector.shape_cast %99 : vector<1x16x5xbf16> to vector<16x5xbf16>
    %cst_24 = arith.constant dense<0.000000e+00> : vector<160x5xf32>
    %101 = tpu.matmul %98, %100, %cst_24 {dimension_numbers = #tpu.dot_dimension_numbers<[1], [0], [0], [1], [0, 0, 1, 1], [], []>} : vector<160x16xbf16>, vector<16x5xbf16>, vector<160x5xf32> -> vector<160x5xf32>
    %102 = arith.addf %95, %101 : vector<160x5xf32>
    %103 = vector.extract_strided_slice %92 {offsets = [0, 1, 0], sizes = [10, 16, 16], strides = [1, 1, 1]} : vector<12x18x16xf32> to vector<10x16x16xf32>
    %104 = vector.shape_cast %103 : vector<10x16x16xf32> to vector<160x16xf32>
    %105 = arith.truncf %104 : vector<160x16xf32> to vector<160x16xbf16>
    %106 = vector.extract_strided_slice %93 {offsets = [1, 0, 0], sizes = [1, 16, 5], strides = [1, 1, 1]} : vector<9x16x5xbf16> to vector<1x16x5xbf16>
    %107 = vector.shape_cast %106 : vector<1x16x5xbf16> to vector<16x5xbf16>
    %cst_25 = arith.constant dense<0.000000e+00> : vector<160x5xf32>
    %108 = tpu.matmul %105, %107, %cst_25 {dimension_numbers = #tpu.dot_dimension_numbers<[1], [0], [0], [1], [0, 0, 1, 1], [], []>} : vector<160x16xbf16>, vector<16x5xbf16>, vector<160x5xf32> -> vector<160x5xf32>
    %109 = arith.addf %102, %108 : vector<160x5xf32>
    %110 = vector.extract_strided_slice %92 {offsets = [0, 2, 0], sizes = [10, 16, 16], strides = [1, 1, 1]} : vector<12x18x16xf32> to vector<10x16x16xf32>
    %111 = vector.shape_cast %110 : vector<10x16x16xf32> to vector<160x16xf32>
    %112 = arith.truncf %111 : vector<160x16xf32> to vector<160x16xbf16>
    %113 = vector.extract_strided_slice %93 {offsets = [2, 0, 0], sizes = [1, 16, 5], strides = [1, 1, 1]} : vector<9x16x5xbf16> to vector<1x16x5xbf16>
    %114 = vector.shape_cast %113 : vector<1x16x5xbf16> to vector<16x5xbf16>
    %cst_26 = arith.constant dense<0.000000e+00> : vector<160x5xf32>
    %115 = tpu.matmul %112, %114, %cst_26 {dimension_numbers = #tpu.dot_dimension_numbers<[1], [0], [0], [1], [0, 0, 1, 1], [], []>} : vector<160x16xbf16>, vector<16x5xbf16>, vector<160x5xf32> -> vector<160x5xf32>
    %116 = arith.addf %109, %115 : vector<160x5xf32>
    %117 = vector.extract_strided_slice %92 {offsets = [1, 0, 0], sizes = [10, 16, 16], strides = [1, 1, 1]} : vector<12x18x16xf32> to vector<10x16x16xf32>
    %118 = vector.shape_cast %117 : vector<10x16x16xf32> to vector<160x16xf32>
    %119 = arith.truncf %118 : vector<160x16xf32> to vector<160x16xbf16>
    %120 = vector.extract_strided_slice %93 {offsets = [3, 0, 0], sizes = [1, 16, 5], strides = [1, 1, 1]} : vector<9x16x5xbf16> to vector<1x16x5xbf16>
    %121 = vector.shape_cast %120 : vector<1x16x5xbf16> to vector<16x5xbf16>
    %cst_27 = arith.constant dense<0.000000e+00> : vector<160x5xf32>
    %122 = tpu.matmul %119, %121, %cst_27 {dimension_numbers = #tpu.dot_dimension_numbers<[1], [0], [0], [1], [0, 0, 1, 1], [], []>} : vector<160x16xbf16>, vector<16x5xbf16>, vector<160x5xf32> -> vector<160x5xf32>
    %123 = arith.addf %116, %122 : vector<160x5xf32>
    %124 = vector.extract_strided_slice %92 {offsets = [1, 1, 0], sizes = [10, 16, 16], strides = [1, 1, 1]} : vector<12x18x16xf32> to vector<10x16x16xf32>
    %125 = vector.shape_cast %124 : vector<10x16x16xf32> to vector<160x16xf32>
    %126 = arith.truncf %125 : vector<160x16xf32> to vector<160x16xbf16>
    %127 = vector.extract_strided_slice %93 {offsets = [4, 0, 0], sizes = [1, 16, 5], strides = [1, 1, 1]} : vector<9x16x5xbf16> to vector<1x16x5xbf16>
    %128 = vector.shape_cast %127 : vector<1x16x5xbf16> to vector<16x5xbf16>
    %cst_28 = arith.constant dense<0.000000e+00> : vector<160x5xf32>
    %129 = tpu.matmul %126, %128, %cst_28 {dimension_numbers = #tpu.dot_dimension_numbers<[1], [0], [0], [1], [0, 0, 1, 1], [], []>} : vector<160x16xbf16>, vector<16x5xbf16>, vector<160x5xf32> -> vector<160x5xf32>
    %130 = arith.addf %123, %129 : vector<160x5xf32>
    %131 = vector.extract_strided_slice %92 {offsets = [1, 2, 0], sizes = [10, 16, 16], strides = [1, 1, 1]} : vector<12x18x16xf32> to vector<10x16x16xf32>
    %132 = vector.shape_cast %131 : vector<10x16x16xf32> to vector<160x16xf32>
    %133 = arith.truncf %132 : vector<160x16xf32> to vector<160x16xbf16>
    %134 = vector.extract_strided_slice %93 {offsets = [5, 0, 0], sizes = [1, 16, 5], strides = [1, 1, 1]} : vector<9x16x5xbf16> to vector<1x16x5xbf16>
    %135 = vector.shape_cast %134 : vector<1x16x5xbf16> to vector<16x5xbf16>
    %cst_29 = arith.constant dense<0.000000e+00> : vector<160x5xf32>
    %136 = tpu.matmul %133, %135, %cst_29 {dimension_numbers = #tpu.dot_dimension_numbers<[1], [0], [0], [1], [0, 0, 1, 1], [], []>} : vector<160x16xbf16>, vector<16x5xbf16>, vector<160x5xf32> -> vector<160x5xf32>
    %137 = arith.addf %130, %136 : vector<160x5xf32>
    %138 = vector.extract_strided_slice %92 {offsets = [2, 0, 0], sizes = [10, 16, 16], strides = [1, 1, 1]} : vector<12x18x16xf32> to vector<10x16x16xf32>
    %139 = vector.shape_cast %138 : vector<10x16x16xf32> to vector<160x16xf32>
    %140 = arith.truncf %139 : vector<160x16xf32> to vector<160x16xbf16>
    %141 = vector.extract_strided_slice %93 {offsets = [6, 0, 0], sizes = [1, 16, 5], strides = [1, 1, 1]} : vector<9x16x5xbf16> to vector<1x16x5xbf16>
    %142 = vector.shape_cast %141 : vector<1x16x5xbf16> to vector<16x5xbf16>
    %cst_30 = arith.constant dense<0.000000e+00> : vector<160x5xf32>
    %143 = tpu.matmul %140, %142, %cst_30 {dimension_numbers = #tpu.dot_dimension_numbers<[1], [0], [0], [1], [0, 0, 1, 1], [], []>} : vector<160x16xbf16>, vector<16x5xbf16>, vector<160x5xf32> -> vector<160x5xf32>
    %144 = arith.addf %137, %143 : vector<160x5xf32>
    %145 = vector.extract_strided_slice %92 {offsets = [2, 1, 0], sizes = [10, 16, 16], strides = [1, 1, 1]} : vector<12x18x16xf32> to vector<10x16x16xf32>
    %146 = vector.shape_cast %145 : vector<10x16x16xf32> to vector<160x16xf32>
    %147 = arith.truncf %146 : vector<160x16xf32> to vector<160x16xbf16>
    %148 = vector.extract_strided_slice %93 {offsets = [7, 0, 0], sizes = [1, 16, 5], strides = [1, 1, 1]} : vector<9x16x5xbf16> to vector<1x16x5xbf16>
    %149 = vector.shape_cast %148 : vector<1x16x5xbf16> to vector<16x5xbf16>
    %cst_31 = arith.constant dense<0.000000e+00> : vector<160x5xf32>
    %150 = tpu.matmul %147, %149, %cst_31 {dimension_numbers = #tpu.dot_dimension_numbers<[1], [0], [0], [1], [0, 0, 1, 1], [], []>} : vector<160x16xbf16>, vector<16x5xbf16>, vector<160x5xf32> -> vector<160x5xf32>
    %151 = arith.addf %144, %150 : vector<160x5xf32>
    %152 = vector.extract_strided_slice %92 {offsets = [2, 2, 0], sizes = [10, 16, 16], strides = [1, 1, 1]} : vector<12x18x16xf32> to vector<10x16x16xf32>
    %153 = vector.shape_cast %152 : vector<10x16x16xf32> to vector<160x16xf32>
    %154 = arith.truncf %153 : vector<160x16xf32> to vector<160x16xbf16>
    %155 = vector.extract_strided_slice %93 {offsets = [8, 0, 0], sizes = [1, 16, 5], strides = [1, 1, 1]} : vector<9x16x5xbf16> to vector<1x16x5xbf16>
    %156 = vector.shape_cast %155 : vector<1x16x5xbf16> to vector<16x5xbf16>
    %cst_32 = arith.constant dense<0.000000e+00> : vector<160x5xf32>
    %157 = tpu.matmul %154, %156, %cst_32 {dimension_numbers = #tpu.dot_dimension_numbers<[1], [0], [0], [1], [0, 0, 1, 1], [], []>} : vector<160x16xbf16>, vector<16x5xbf16>, vector<160x5xf32> -> vector<160x5xf32>
    %158 = arith.addf %151, %157 : vector<160x5xf32>
    %159 = vector.broadcast %94 : vector<1x5xf32> to vector<160x5xf32>
    %160 = arith.addf %158, %159 : vector<160x5xf32>
    %161 = vector.shape_cast %160 : vector<160x5xf32> to vector<10x16x5xf32>
    %c1_i32 = arith.constant 1 : i32
    %162 = arith.subi %0, %c1_i32 : i32
    %163 = tpu.iota {dimensions = array<i32: 0>} : vector<10x16xi32>
    %164 = vector.broadcast %162 : i32 to vector<10x16xi32>
    %165 = arith.addi %164, %163 : vector<10x16xi32>
    %c0_i32_33 = arith.constant 0 : i32
    %166 = vector.broadcast %c0_i32_33 : i32 to vector<10x16xi32>
    %167 = arith.cmpi sge, %165, %166 : vector<10x16xi32>
    %c16_i32_34 = arith.constant 16 : i32
    %168 = vector.broadcast %c16_i32_34 : i32 to vector<10x16xi32>
    %169 = arith.cmpi slt, %165, %168 : vector<10x16xi32>
    %170 = arith.andi %167, %169 : vector<10x16xi1>
    %171 = arith.extui %170 : vector<10x16xi1> to vector<10x16xi32>
    %172 = arith.sitofp %171 : vector<10x16xi32> to vector<10x16xf32>
    %173 = vector.shape_cast %172 : vector<10x16xf32> to vector<10x16x1xf32>
    %174 = vector.broadcast %173 : vector<10x16x1xf32> to vector<10x16x5xf32>
    %175 = arith.mulf %161, %174 : vector<10x16x5xf32>
    %cst_35 = arith.constant 0.000000e+00 : f32
    %176 = vector.broadcast %cst_35 : f32 to vector<10x1x5xf32>
    %177 = tpu.concatenate %176, %175, %176 in 1 : vector<10x1x5xf32>, vector<10x16x5xf32>, vector<10x1x5xf32> -> vector<10x18x5xf32>
    %c0_36 = arith.constant 0 : index
    %c0_37 = arith.constant 0 : index
    %c0_38 = arith.constant 0 : index
    %178 = vector.load %arg7[%c0_36, %c0_37, %c0_38] : memref<9x5x32xbf16, #tpu.memory_space<vmem>>, vector<9x5x32xbf16>
    %c0_39 = arith.constant 0 : index
    %c0_40 = arith.constant 0 : index
    %179 = vector.load %arg8[%c0_39, %c0_40] : memref<1x32xf32, #tpu.memory_space<vmem>>, vector<1x32xf32>
    %cst_41 = arith.constant 0.000000e+00 : f32
    %180 = vector.broadcast %cst_41 : f32 to vector<128x32xf32>
    %181 = vector.extract_strided_slice %177 {offsets = [0, 0, 0], sizes = [8, 16, 5], strides = [1, 1, 1]} : vector<10x18x5xf32> to vector<8x16x5xf32>
    %182 = vector.shape_cast %181 : vector<8x16x5xf32> to vector<128x5xf32>
    %183 = arith.truncf %182 : vector<128x5xf32> to vector<128x5xbf16>
    %184 = vector.extract_strided_slice %178 {offsets = [0, 0, 0], sizes = [1, 5, 32], strides = [1, 1, 1]} : vector<9x5x32xbf16> to vector<1x5x32xbf16>
    %185 = vector.shape_cast %184 : vector<1x5x32xbf16> to vector<5x32xbf16>
    %cst_42 = arith.constant dense<0.000000e+00> : vector<128x32xf32>
    %186 = tpu.matmul %183, %185, %cst_42 {dimension_numbers = #tpu.dot_dimension_numbers<[1], [0], [0], [1], [0, 0, 1, 1], [], []>} : vector<128x5xbf16>, vector<5x32xbf16>, vector<128x32xf32> -> vector<128x32xf32>
    %187 = arith.addf %180, %186 : vector<128x32xf32>
    %188 = vector.extract_strided_slice %177 {offsets = [0, 1, 0], sizes = [8, 16, 5], strides = [1, 1, 1]} : vector<10x18x5xf32> to vector<8x16x5xf32>
    %189 = vector.shape_cast %188 : vector<8x16x5xf32> to vector<128x5xf32>
    %190 = arith.truncf %189 : vector<128x5xf32> to vector<128x5xbf16>
    %191 = vector.extract_strided_slice %178 {offsets = [1, 0, 0], sizes = [1, 5, 32], strides = [1, 1, 1]} : vector<9x5x32xbf16> to vector<1x5x32xbf16>
    %192 = vector.shape_cast %191 : vector<1x5x32xbf16> to vector<5x32xbf16>
    %cst_43 = arith.constant dense<0.000000e+00> : vector<128x32xf32>
    %193 = tpu.matmul %190, %192, %cst_43 {dimension_numbers = #tpu.dot_dimension_numbers<[1], [0], [0], [1], [0, 0, 1, 1], [], []>} : vector<128x5xbf16>, vector<5x32xbf16>, vector<128x32xf32> -> vector<128x32xf32>
    %194 = arith.addf %187, %193 : vector<128x32xf32>
    %195 = vector.extract_strided_slice %177 {offsets = [0, 2, 0], sizes = [8, 16, 5], strides = [1, 1, 1]} : vector<10x18x5xf32> to vector<8x16x5xf32>
    %196 = vector.shape_cast %195 : vector<8x16x5xf32> to vector<128x5xf32>
    %197 = arith.truncf %196 : vector<128x5xf32> to vector<128x5xbf16>
    %198 = vector.extract_strided_slice %178 {offsets = [2, 0, 0], sizes = [1, 5, 32], strides = [1, 1, 1]} : vector<9x5x32xbf16> to vector<1x5x32xbf16>
    %199 = vector.shape_cast %198 : vector<1x5x32xbf16> to vector<5x32xbf16>
    %cst_44 = arith.constant dense<0.000000e+00> : vector<128x32xf32>
    %200 = tpu.matmul %197, %199, %cst_44 {dimension_numbers = #tpu.dot_dimension_numbers<[1], [0], [0], [1], [0, 0, 1, 1], [], []>} : vector<128x5xbf16>, vector<5x32xbf16>, vector<128x32xf32> -> vector<128x32xf32>
    %201 = arith.addf %194, %200 : vector<128x32xf32>
    %202 = vector.extract_strided_slice %177 {offsets = [1, 0, 0], sizes = [8, 16, 5], strides = [1, 1, 1]} : vector<10x18x5xf32> to vector<8x16x5xf32>
    %203 = vector.shape_cast %202 : vector<8x16x5xf32> to vector<128x5xf32>
    %204 = arith.truncf %203 : vector<128x5xf32> to vector<128x5xbf16>
    %205 = vector.extract_strided_slice %178 {offsets = [3, 0, 0], sizes = [1, 5, 32], strides = [1, 1, 1]} : vector<9x5x32xbf16> to vector<1x5x32xbf16>
    %206 = vector.shape_cast %205 : vector<1x5x32xbf16> to vector<5x32xbf16>
    %cst_45 = arith.constant dense<0.000000e+00> : vector<128x32xf32>
    %207 = tpu.matmul %204, %206, %cst_45 {dimension_numbers = #tpu.dot_dimension_numbers<[1], [0], [0], [1], [0, 0, 1, 1], [], []>} : vector<128x5xbf16>, vector<5x32xbf16>, vector<128x32xf32> -> vector<128x32xf32>
    %208 = arith.addf %201, %207 : vector<128x32xf32>
    %209 = vector.extract_strided_slice %177 {offsets = [1, 1, 0], sizes = [8, 16, 5], strides = [1, 1, 1]} : vector<10x18x5xf32> to vector<8x16x5xf32>
    %210 = vector.shape_cast %209 : vector<8x16x5xf32> to vector<128x5xf32>
    %211 = arith.truncf %210 : vector<128x5xf32> to vector<128x5xbf16>
    %212 = vector.extract_strided_slice %178 {offsets = [4, 0, 0], sizes = [1, 5, 32], strides = [1, 1, 1]} : vector<9x5x32xbf16> to vector<1x5x32xbf16>
    %213 = vector.shape_cast %212 : vector<1x5x32xbf16> to vector<5x32xbf16>
    %cst_46 = arith.constant dense<0.000000e+00> : vector<128x32xf32>
    %214 = tpu.matmul %211, %213, %cst_46 {dimension_numbers = #tpu.dot_dimension_numbers<[1], [0], [0], [1], [0, 0, 1, 1], [], []>} : vector<128x5xbf16>, vector<5x32xbf16>, vector<128x32xf32> -> vector<128x32xf32>
    %215 = arith.addf %208, %214 : vector<128x32xf32>
    %216 = vector.extract_strided_slice %177 {offsets = [1, 2, 0], sizes = [8, 16, 5], strides = [1, 1, 1]} : vector<10x18x5xf32> to vector<8x16x5xf32>
    %217 = vector.shape_cast %216 : vector<8x16x5xf32> to vector<128x5xf32>
    %218 = arith.truncf %217 : vector<128x5xf32> to vector<128x5xbf16>
    %219 = vector.extract_strided_slice %178 {offsets = [5, 0, 0], sizes = [1, 5, 32], strides = [1, 1, 1]} : vector<9x5x32xbf16> to vector<1x5x32xbf16>
    %220 = vector.shape_cast %219 : vector<1x5x32xbf16> to vector<5x32xbf16>
    %cst_47 = arith.constant dense<0.000000e+00> : vector<128x32xf32>
    %221 = tpu.matmul %218, %220, %cst_47 {dimension_numbers = #tpu.dot_dimension_numbers<[1], [0], [0], [1], [0, 0, 1, 1], [], []>} : vector<128x5xbf16>, vector<5x32xbf16>, vector<128x32xf32> -> vector<128x32xf32>
    %222 = arith.addf %215, %221 : vector<128x32xf32>
    %223 = vector.extract_strided_slice %177 {offsets = [2, 0, 0], sizes = [8, 16, 5], strides = [1, 1, 1]} : vector<10x18x5xf32> to vector<8x16x5xf32>
    %224 = vector.shape_cast %223 : vector<8x16x5xf32> to vector<128x5xf32>
    %225 = arith.truncf %224 : vector<128x5xf32> to vector<128x5xbf16>
    %226 = vector.extract_strided_slice %178 {offsets = [6, 0, 0], sizes = [1, 5, 32], strides = [1, 1, 1]} : vector<9x5x32xbf16> to vector<1x5x32xbf16>
    %227 = vector.shape_cast %226 : vector<1x5x32xbf16> to vector<5x32xbf16>
    %cst_48 = arith.constant dense<0.000000e+00> : vector<128x32xf32>
    %228 = tpu.matmul %225, %227, %cst_48 {dimension_numbers = #tpu.dot_dimension_numbers<[1], [0], [0], [1], [0, 0, 1, 1], [], []>} : vector<128x5xbf16>, vector<5x32xbf16>, vector<128x32xf32> -> vector<128x32xf32>
    %229 = arith.addf %222, %228 : vector<128x32xf32>
    %230 = vector.extract_strided_slice %177 {offsets = [2, 1, 0], sizes = [8, 16, 5], strides = [1, 1, 1]} : vector<10x18x5xf32> to vector<8x16x5xf32>
    %231 = vector.shape_cast %230 : vector<8x16x5xf32> to vector<128x5xf32>
    %232 = arith.truncf %231 : vector<128x5xf32> to vector<128x5xbf16>
    %233 = vector.extract_strided_slice %178 {offsets = [7, 0, 0], sizes = [1, 5, 32], strides = [1, 1, 1]} : vector<9x5x32xbf16> to vector<1x5x32xbf16>
    %234 = vector.shape_cast %233 : vector<1x5x32xbf16> to vector<5x32xbf16>
    %cst_49 = arith.constant dense<0.000000e+00> : vector<128x32xf32>
    %235 = tpu.matmul %232, %234, %cst_49 {dimension_numbers = #tpu.dot_dimension_numbers<[1], [0], [0], [1], [0, 0, 1, 1], [], []>} : vector<128x5xbf16>, vector<5x32xbf16>, vector<128x32xf32> -> vector<128x32xf32>
    %236 = arith.addf %229, %235 : vector<128x32xf32>
    %237 = vector.extract_strided_slice %177 {offsets = [2, 2, 0], sizes = [8, 16, 5], strides = [1, 1, 1]} : vector<10x18x5xf32> to vector<8x16x5xf32>
    %238 = vector.shape_cast %237 : vector<8x16x5xf32> to vector<128x5xf32>
    %239 = arith.truncf %238 : vector<128x5xf32> to vector<128x5xbf16>
    %240 = vector.extract_strided_slice %178 {offsets = [8, 0, 0], sizes = [1, 5, 32], strides = [1, 1, 1]} : vector<9x5x32xbf16> to vector<1x5x32xbf16>
    %241 = vector.shape_cast %240 : vector<1x5x32xbf16> to vector<5x32xbf16>
    %cst_50 = arith.constant dense<0.000000e+00> : vector<128x32xf32>
    %242 = tpu.matmul %239, %241, %cst_50 {dimension_numbers = #tpu.dot_dimension_numbers<[1], [0], [0], [1], [0, 0, 1, 1], [], []>} : vector<128x5xbf16>, vector<5x32xbf16>, vector<128x32xf32> -> vector<128x32xf32>
    %243 = arith.addf %236, %242 : vector<128x32xf32>
    %244 = vector.broadcast %179 : vector<1x32xf32> to vector<128x32xf32>
    %245 = arith.addf %243, %244 : vector<128x32xf32>
    %cst_51 = arith.constant 0.000000e+00 : f32
    %246 = vector.broadcast %cst_51 : f32 to vector<128x32xf32>
    %247 = arith.maximumf %245, %246 : vector<128x32xf32>
    %248 = vector.shape_cast %247 : vector<128x32xf32> to vector<8x16x32xf32>
    %249 = vector.shape_cast %248 : vector<8x16x32xf32> to vector<128x32xf32>
    %cst_52 = arith.constant dense<0.000000e+00> : vector<32xf32>
    %250 = vector.multi_reduction <add>, %249, %cst_52 [0] : vector<128x32xf32> to vector<32xf32>
    %251 = vector.shape_cast %250 : vector<32xf32> to vector<1x32xf32>
    %c0_i32_53 = arith.constant 0 : i32
    %252 = arith.cmpi eq, %arg1, %c0_i32_53 : i32
    %253 = arith.extui %252 : i1 to i32
    %c0_i32_54 = arith.constant 0 : i32
    %254 = arith.cmpi ne, %253, %c0_i32_54 : i32
    scf.if %254 {
      %cst_61 = arith.constant 0.000000e+00 : f32
      %261 = vector.broadcast %cst_61 : f32 to vector<1x32xf32>
      %c0_62 = arith.constant 0 : index
      %c0_63 = arith.constant 0 : index
      %262 = vector.load %arg12[%c0_62, %c0_63] : memref<1x32xf32, #tpu.memory_space<vmem>>, vector<1x32xf32>
      tpu.vector_store %arg12[%c0_62, %c0_63], %261 {strides = array<i32>} : memref<1x32xf32, #tpu.memory_space<vmem>>, vector<1x32xf32>,
    } else {
    }
    %c0_55 = arith.constant 0 : index
    %c0_56 = arith.constant 0 : index
    %255 = vector.load %arg12[%c0_55, %c0_56] : memref<1x32xf32, #tpu.memory_space<vmem>>, vector<1x32xf32>
    %256 = arith.addf %255, %251 : vector<1x32xf32>
    %c0_57 = arith.constant 0 : index
    %c0_58 = arith.constant 0 : index
    %257 = vector.load %arg12[%c0_57, %c0_58] : memref<1x32xf32, #tpu.memory_space<vmem>>, vector<1x32xf32>
    tpu.vector_store %arg12[%c0_57, %c0_58], %256 {strides = array<i32>} : memref<1x32xf32, #tpu.memory_space<vmem>>, vector<1x32xf32>,
    %c1_i32_59 = arith.constant 1 : i32
    %258 = arith.cmpi eq, %arg1, %c1_i32_59 : i32
    %259 = arith.extui %258 : i1 to i32
    %c0_i32_60 = arith.constant 0 : i32
    %260 = arith.cmpi ne, %259, %c0_i32_60 : i32
    scf.if %260 {
      %c0_61 = arith.constant 0 : index
      %c0_62 = arith.constant 0 : index
      %261 = vector.load %arg12[%c0_61, %c0_62] : memref<1x32xf32, #tpu.memory_space<vmem>>, vector<1x32xf32>
      %cst_63 = arith.constant 3.906250e-03 : f32
      %262 = vector.broadcast %cst_63 : f32 to vector<1x32xf32>
      %263 = arith.mulf %261, %262 : vector<1x32xf32>
      %264 = arith.truncf %263 : vector<1x32xf32> to vector<1x32xbf16>
      %c0_64 = arith.constant 0 : index
      %c0_65 = arith.constant 0 : index
      %265 = vector.load %arg9[%c0_64, %c0_65] : memref<32x11xbf16, #tpu.memory_space<vmem>>, vector<32x11xbf16>
      %cst_66 = arith.constant dense<0.000000e+00> : vector<1x11xf32>
      %266 = tpu.matmul %264, %265, %cst_66 {dimension_numbers = #tpu.dot_dimension_numbers<[1], [0], [0], [1], [0, 0, 1, 1], [], []>} : vector<1x32xbf16>, vector<32x11xbf16>, vector<1x11xf32> -> vector<1x11xf32>
      %c0_67 = arith.constant 0 : index
      %c0_68 = arith.constant 0 : index
      %267 = vector.load %arg10[%c0_67, %c0_68] : memref<1x11xf32, #tpu.memory_space<vmem>>, vector<1x11xf32>
      %268 = arith.addf %266, %267 : vector<1x11xf32>
      %c0_69 = arith.constant 0 : index
      %c0_70 = arith.constant 0 : index
      %c0_71 = arith.constant 0 : index
      %269 = vector.load %arg11[%c0_69, %c0_70, %c0_71] : memref<1x1x11xf32, #tpu.memory_space<vmem>>, vector<1x1x11xf32>
      %270 = vector.shape_cast %269 : vector<1x1x11xf32> to vector<1x11xf32>
      %271 = vector.shape_cast %268 : vector<1x11xf32> to vector<1x1x11xf32>
      tpu.vector_store %arg11[%c0_69, %c0_70, %c0_71], %271 {strides = array<i32>} : memref<1x1x11xf32, #tpu.memory_space<vmem>>, vector<1x1x11xf32>,
    } else {
    }
    return
  }
  func.func @transform_0(%arg0: i32, %arg1: i32) -> (i32, i32, i32, i32) {
    %c0_i32 = arith.constant 0 : i32
    %c0_i32_0 = arith.constant 0 : i32
    %c0_i32_1 = arith.constant 0 : i32
    %c0_i32_2 = arith.constant 0 : i32
    return %arg0, %c0_i32, %c0_i32_0, %c0_i32_1 : i32, i32, i32, i32
  }
  func.func @transform_1(%arg0: i32, %arg1: i32) -> (i32, i32, i32) {
    %c0_i32 = arith.constant 0 : i32
    %c0_i32_0 = arith.constant 0 : i32
    %c0_i32_1 = arith.constant 0 : i32
    %c0_i32_2 = arith.constant 0 : i32
    return %c0_i32, %c0_i32_0, %c0_i32_1 : i32, i32, i32
  }
  func.func @transform_2(%arg0: i32, %arg1: i32) -> (i32, i32) {
    %c0_i32 = arith.constant 0 : i32
    %c0_i32_0 = arith.constant 0 : i32
    %c0_i32_1 = arith.constant 0 : i32
    return %c0_i32, %c0_i32_0 : i32, i32
  }
  func.func @transform_3(%arg0: i32, %arg1: i32) -> (i32, i32, i32) {
    %c0_i32 = arith.constant 0 : i32
    %c0_i32_0 = arith.constant 0 : i32
    %c0_i32_1 = arith.constant 0 : i32
    %c0_i32_2 = arith.constant 0 : i32
    return %c0_i32, %c0_i32_0, %c0_i32_1 : i32, i32, i32
  }
  func.func @transform_4(%arg0: i32, %arg1: i32) -> (i32, i32) {
    %c0_i32 = arith.constant 0 : i32
    %c0_i32_0 = arith.constant 0 : i32
    %c0_i32_1 = arith.constant 0 : i32
    return %c0_i32, %c0_i32_0 : i32, i32
  }
  func.func @transform_5(%arg0: i32, %arg1: i32) -> (i32, i32, i32) {
    %c0_i32 = arith.constant 0 : i32
    %c0_i32_0 = arith.constant 0 : i32
    %c0_i32_1 = arith.constant 0 : i32
    %c0_i32_2 = arith.constant 0 : i32
    return %c0_i32, %c0_i32_0, %c0_i32_1 : i32, i32, i32
  }
  func.func @transform_6(%arg0: i32, %arg1: i32) -> (i32, i32) {
    %c0_i32 = arith.constant 0 : i32
    %c0_i32_0 = arith.constant 0 : i32
    %c0_i32_1 = arith.constant 0 : i32
    return %c0_i32, %c0_i32_0 : i32, i32
  }
  func.func @transform_7(%arg0: i32, %arg1: i32) -> (i32, i32) {
    %c0_i32 = arith.constant 0 : i32
    %c0_i32_0 = arith.constant 0 : i32
    %c0_i32_1 = arith.constant 0 : i32
    return %c0_i32, %c0_i32_0 : i32, i32
  }
  func.func @transform_8(%arg0: i32, %arg1: i32) -> (i32, i32) {
    %c0_i32 = arith.constant 0 : i32
    %c0_i32_0 = arith.constant 0 : i32
    %c0_i32_1 = arith.constant 0 : i32
    return %c0_i32, %c0_i32_0 : i32, i32
  }
  func.func @transform_9(%arg0: i32, %arg1: i32) -> (i32, i32, i32) {
    %c0_i32 = arith.constant 0 : i32
    %c0_i32_0 = arith.constant 0 : i32
    %c0_i32_1 = arith.constant 0 : i32
    return %arg0, %c0_i32, %c0_i32_0 : i32, i32, i32
  }
}

</mosaic_0001>

<llo_original>
// kernel: _lambda_.1
$region0: #{_lambda_.1}
  #allocation0 [shape = 'u32[]', space=smem, size = 0x4, offset = 0x4, fixed_abs, tag = 'smem constant byte address 0x4 - core index']
  #allocation1 [shape = 'u32[144,128]{1,0:T(1,128)}', space=vmem, size = 0x12000, scoped, tag = 'internal scratch']
  #allocation2 [shape = 'f32[1,32]{1,0:T(1,128)}', space=vmem, size = 0x200, scoped, tag = 'scratch operand']
  %s0 = inlined_call_operand.vmem [shape: bf16[2,22,18,3], index: 0, kind: input, shape index: {}]
  %s1 = inlined_call_operand.vmem [shape: bf16[9,3,16], index: 1, kind: input, shape index: {}]
  %s2 = inlined_call_operand.vmem [shape: f32[1,16], index: 2, kind: input, shape index: {}]
  %s3 = inlined_call_operand.vmem [shape: bf16[9,16,5], index: 3, kind: input, shape index: {}]
  %s4 = inlined_call_operand.vmem [shape: f32[1,5], index: 4, kind: input, shape index: {}]
  %s5 = inlined_call_operand.vmem [shape: bf16[9,5,32], index: 5, kind: input, shape index: {}]
  %s6 = inlined_call_operand.vmem [shape: f32[1,32], index: 6, kind: input, shape index: {}]
  %s7 = inlined_call_operand.vmem [shape: bf16[32,11], index: 7, kind: input, shape index: {}]
  %s8 = inlined_call_operand.vmem [shape: f32[1,11], index: 8, kind: input, shape index: {}]
  %s9 = inlined_call_operand.hbm [shape: f32[2,1,11], index: 9, kind: output, shape index: {}]
  %s10 = sld [smem:[#allocation0]]
  $region77: #{_lambda_.1} parent=0
    _
  %s12 = ssub.s32 1, %s10
  %s13 = scalar_select 0, %s12, %s10
  $region1: #{_lambda_.1} parent=0
    #allocation3 [shape = 'u8[1024]{0}', space=vmem, size = 0x400, scoped, tag = 'output window, operand 0']
    #allocation4 [shape = 's32[2]{0}', space=sflag, size = 0x8, scoped, tag = 'scoped memory for _lambda_.1']
    %14 = vsyncpa [#allocation4], 0
    %s15 = scalar_lea.sflag [#allocation4], 1
    %16 = vsyncpa %s15, 0
    loop: start=0, step=1, limit=6
    $region2: #{_lambda_.1} parent=1 // loop_pre_header
      _
    $region3: #{_lambda_.1} parent=1 // loop_header
      %s18 = sphi 0, %s22
      %p19 = scmp.ge.s32.totalorder %s18, 6
      %s25 = sphi 0, %s37
      %s26 = sphi 0, %s33
      %s27 = sphi 0, %s25
      %s28 = sphi 0, %s26
      %s29 = sphi 0, %s27
      %s30 = sphi 0, %s28
      %s40 = sphi 0, %s42
      %s43 = sphi 0, %s40
      %s44 = sphi 0, %s43
      %s60 = sphi 0, %s44
      %s64 = sphi 0, %s64
      %s66 = sphi 0, %s64
      %s67 = sphi 0, %s66
      %s81 = sphi 0, %s67
      %s85 = sphi 0, %s85
      %s87 = sphi 0, %s85
      %s88 = sphi 0, %s87
      %s102 = sphi 0, %s88
      %s106 = sphi 0, %s106
      %s108 = sphi 0, %s106
      %s109 = sphi 0, %s108
      %s123 = sphi 0, %s109
      %s127 = sphi 0, %s127
      %s129 = sphi 0, %s127
      %s130 = sphi 0, %s129
      %s144 = sphi 0, %s130
      %s148 = sphi 0, %s148
      %s150 = sphi 0, %s148
      %s151 = sphi 0, %s150
      %s165 = sphi 0, %s151
      %s169 = sphi 0, %s169
      %s171 = sphi 0, %s169
      %s172 = sphi 0, %s171
      %s186 = sphi 0, %s172
      %s190 = sphi 0, %s190
      %s192 = sphi 0, %s190
      %s193 = sphi 0, %s192
      %s207 = sphi 0, %s193
      %s211 = sphi 0, %s211
      %s213 = sphi 0, %s211
      %s214 = sphi 0, %s213
      %s228 = sphi 0, %s214
      %s234 = sphi 0, %s236
      %s237 = sphi 0, %s234
      %s238 = sphi 0, %s237
      %s254 = sphi 0, %s238
    $region4: #{_lambda_.1} parent=1 // loop_header_branch
      %21 = sbr.rel (%p19) target = $region8
    $region5: #{_lambda_.1} parent=1 // loop_body
      %s23 = ssub.s32 %s18, 1
      %s24 = ssub.s32 %s18, 2
      %s31 = sadd.s32 1, %s26
      %p32 = scmp.ge.s32.totalorder %s31, 2
      %s33 = scalar_select %p32, 0, %s31
      %s34 = sadd.s32 1, %s25
      %s35 = scalar_select %p32, %s34, %s25
      %p36 = scmp.ge.s32.totalorder %s35, 2
      %s37 = scalar_select %p36, 0, %s35
      %s38 = ssub.s32 %s25, %s37
      %p39 = scmp.eq.s32.totalorder %s38, 0
      %s41 = sadd.s32 %s40, 1
      %s42 = scalar_select %p39, %s40, %s41
      %p45 = pneg %p39
      %p46 = scmp.eq.s32.totalorder %s18, 3
      %p47 = por %p45, %p46
      %p48 = scmp.ne.s32.totalorder %s40, %s43
      %p49 = scmp.eq.s32.totalorder %s18, 0
      %p50 = por %p48, %p49
      %p51 = scmp.ne.s32.totalorder %s40, %s43
      %p52 = scmp.eq.s32.totalorder %s23, 3
      %p53 = por %p51, %p52
      %p54 = scmp.ne.s32.totalorder %s43, %s44
      %p55 = scmp.eq.s32.totalorder %s23, 0
      %p56 = por %p54, %p55
      %p57 = scmp.ne.s32.totalorder %s43, %s44
      %p58 = scmp.eq.s32.totalorder %s24, 3
      %p59 = por %p57, %p58
      %p61 = scmp.ne.s32.totalorder %s44, %s60
      %p62 = scmp.eq.s32.totalorder %s24, 0
      %p63 = por %p61, %p62
      %s65 = sadd.s32 %s64, 1
      %p68 = scmp.eq.s32.totalorder %s18, 3
      %p69 = scmp.ne.s32.totalorder %s64, %s66
      %p70 = scmp.eq.s32.totalorder %s18, 0
      %p71 = por %p69, %p70
      %p72 = scmp.ne.s32.totalorder %s64, %s66
      %p73 = scmp.eq.s32.totalorder %s23, 3
      %p74 = por %p72, %p73
      %p75 = scmp.ne.s32.totalorder %s66, %s67
      %p76 = scmp.eq.s32.totalorder %s23, 0
      %p77 = por %p75, %p76
      %p78 = scmp.ne.s32.totalorder %s66, %s67
      %p79 = scmp.eq.s32.totalorder %s24, 3
      %p80 = por %p78, %p79
      %p82 = scmp.ne.s32.totalorder %s67, %s81
      %p83 = scmp.eq.s32.totalorder %s24, 0
      %p84 = por %p82, %p83
      %s86 = sadd.s32 %s85, 1
      %p89 = scmp.eq.s32.totalorder %s18, 3
      %p90 = scmp.ne.s32.totalorder %s85, %s87
      %p91 = scmp.eq.s32.totalorder %s18, 0
      %p92 = por %p90, %p91
      %p93 = scmp.ne.s32.totalorder %s85, %s87
      %p94 = scmp.eq.s32.totalorder %s23, 3
      %p95 = por %p93, %p94
      %p96 = scmp.ne.s32.totalorder %s87, %s88
      %p97 = scmp.eq.s32.totalorder %s23, 0
      %p98 = por %p96, %p97
      %p99 = scmp.ne.s32.totalorder %s87, %s88
      %p100 = scmp.eq.s32.totalorder %s24, 3
      %p101 = por %p99, %p100
      %p103 = scmp.ne.s32.totalorder %s88, %s102
      %p104 = scmp.eq.s32.totalorder %s24, 0
      %p105 = por %p103, %p104
      %s107 = sadd.s32 %s106, 1
      %p110 = scmp.eq.s32.totalorder %s18, 3
      %p111 = scmp.ne.s32.totalorder %s106, %s108
      %p112 = scmp.eq.s32.totalorder %s18, 0
      %p113 = por %p111, %p112
      %p114 = scmp.ne.s32.totalorder %s106, %s108
      %p115 = scmp.eq.s32.totalorder %s23, 3
      %p116 = por %p114, %p115
      %p117 = scmp.ne.s32.totalorder %s108, %s109
      %p118 = scmp.eq.s32.totalorder %s23, 0
      %p119 = por %p117, %p118
      %p120 = scmp.ne.s32.totalorder %s108, %s109
      %p121 = scmp.eq.s32.totalorder %s24, 3
      %p122 = por %p120, %p121
      %p124 = scmp.ne.s32.totalorder %s109, %s123
      %p125 = scmp.eq.s32.totalorder %s24, 0
      %p126 = por %p124, %p125
      %s128 = sadd.s32 %s127, 1
      %p131 = scmp.eq.s32.totalorder %s18, 3
      %p132 = scmp.ne.s32.totalorder %s127, %s129
      %p133 = scmp.eq.s32.totalorder %s18, 0
      %p134 = por %p132, %p133
      %p135 = scmp.ne.s32.totalorder %s127, %s129
      %p136 = scmp.eq.s32.totalorder %s23, 3
      %p137 = por %p135, %p136
      %p138 = scmp.ne.s32.totalorder %s129, %s130
      %p139 = scmp.eq.s32.totalorder %s23, 0
      %p140 = por %p138, %p139
      %p141 = scmp.ne.s32.totalorder %s129, %s130
      %p142 = scmp.eq.s32.totalorder %s24, 3
      %p143 = por %p141, %p142
      %p145 = scmp.ne.s32.totalorder %s130, %s144
      %p146 = scmp.eq.s32.totalorder %s24, 0
      %p147 = por %p145, %p146
      %s149 = sadd.s32 %s148, 1
      %p152 = scmp.eq.s32.totalorder %s18, 3
      %p153 = scmp.ne.s32.totalorder %s148, %s150
      %p154 = scmp.eq.s32.totalorder %s18, 0
      %p155 = por %p153, %p154
      %p156 = scmp.ne.s32.totalorder %s148, %s150
      %p157 = scmp.eq.s32.totalorder %s23, 3
      %p158 = por %p156, %p157
      %p159 = scmp.ne.s32.totalorder %s150, %s151
      %p160 = scmp.eq.s32.totalorder %s23, 0
      %p161 = por %p159, %p160
      %p162 = scmp.ne.s32.totalorder %s150, %s151
      %p163 = scmp.eq.s32.totalorder %s24, 3
      %p164 = por %p162, %p163
      %p166 = scmp.ne.s32.totalorder %s151, %s165
      %p167 = scmp.eq.s32.totalorder %s24, 0
      %p168 = por %p166, %p167
      %s170 = sadd.s32 %s169, 1
      %p173 = scmp.eq.s32.totalorder %s18, 3
      %p174 = scmp.ne.s32.totalorder %s169, %s171
      %p175 = scmp.eq.s32.totalorder %s18, 0
      %p176 = por %p174, %p175
      %p177 = scmp.ne.s32.totalorder %s169, %s171
      %p178 = scmp.eq.s32.totalorder %s23, 3
      %p179 = por %p177, %p178
      %p180 = scmp.ne.s32.totalorder %s171, %s172
      %p181 = scmp.eq.s32.totalorder %s23, 0
      %p182 = por %p180, %p181
      %p183 = scmp.ne.s32.totalorder %s171, %s172
      %p184 = scmp.eq.s32.totalorder %s24, 3
      %p185 = por %p183, %p184
      %p187 = scmp.ne.s32.totalorder %s172, %s186
      %p188 = scmp.eq.s32.totalorder %s24, 0
      %p189 = por %p187, %p188
      %s191 = sadd.s32 %s190, 1
      %p194 = scmp.eq.s32.totalorder %s18, 3
      %p195 = scmp.ne.s32.totalorder %s190, %s192
      %p196 = scmp.eq.s32.totalorder %s18, 0
      %p197 = por %p195, %p196
      %p198 = scmp.ne.s32.totalorder %s190, %s192
      %p199 = scmp.eq.s32.totalorder %s23, 3
      %p200 = por %p198, %p199
      %p201 = scmp.ne.s32.totalorder %s192, %s193
      %p202 = scmp.eq.s32.totalorder %s23, 0
      %p203 = por %p201, %p202
      %p204 = scmp.ne.s32.totalorder %s192, %s193
      %p205 = scmp.eq.s32.totalorder %s24, 3
      %p206 = por %p204, %p205
      %p208 = scmp.ne.s32.totalorder %s193, %s207
      %p209 = scmp.eq.s32.totalorder %s24, 0
      %p210 = por %p208, %p209
      %s212 = sadd.s32 %s211, 1
      %p215 = scmp.eq.s32.totalorder %s18, 3
      %p216 = scmp.ne.s32.totalorder %s211, %s213
      %p217 = scmp.eq.s32.totalorder %s18, 0
      %p218 = por %p216, %p217
      %p219 = scmp.ne.s32.totalorder %s211, %s213
      %p220 = scmp.eq.s32.totalorder %s23, 3
      %p221 = por %p219, %p220
      %p222 = scmp.ne.s32.totalorder %s213, %s214
      %p223 = scmp.eq.s32.totalorder %s23, 0
      %p224 = por %p222, %p223
      %p225 = scmp.ne.s32.totalorder %s213, %s214
      %p226 = scmp.eq.s32.totalorder %s24, 3
      %p227 = por %p225, %p226
      %p229 = scmp.ne.s32.totalorder %s214, %s228
      %p230 = scmp.eq.s32.totalorder %s24, 0
      %p231 = por %p229, %p230
      %s232 = ssub.s32 %s25, %s37
      %p233 = scmp.eq.s32.totalorder %s232, 0
      %s235 = sadd.s32 %s234, 1
      %s236 = scalar_select %p233, %s234, %s235
      %p239 = pneg %p233
      %p240 = scmp.eq.s32.totalorder %s18, 3
      %p241 = por %p239, %p240
      %p242 = scmp.ne.s32.totalorder %s234, %s237
      %p243 = scmp.eq.s32.totalorder %s18, 0
      %p244 = por %p242, %p243
      %p245 = scmp.ne.s32.totalorder %s234, %s237
      %p246 = scmp.eq.s32.totalorder %s23, 3
      %p247 = por %p245, %p246
      %p248 = scmp.ne.s32.totalorder %s237, %s238
      %p249 = scmp.eq.s32.totalorder %s23, 0
      %p250 = por %p248, %p249
      %p251 = scmp.ne.s32.totalorder %s237, %s238
      %p252 = scmp.eq.s32.totalorder %s24, 3
      %p253 = por %p251, %p252
      %p255 = scmp.ne.s32.totalorder %s238, %s254
      %p256 = scmp.eq.s32.totalorder %s24, 0
      %p257 = por %p255, %p256
      %p258 = scmp.le.s32.totalorder 1, %s18
      %p259 = scmp.lt.s32.totalorder %s18, 5
      %p260 = pnand %p258, %p259
      %p261 = pneg %p260
      // Predicated region
      $region9: #{_lambda_.1} parent=5 // pred_check
        _
      $region10: #{_lambda_.1} parent=5 // pred_check_branch
        %263 = sbr.rel (%p260) target = $region12
      $region11: #{_lambda_.1} parent=5 // pred_region
        %s264 = ssub.s32 %s18, 1
        // Predicated region
        $region13: #{_lambda_.1} parent=11 // pred_check
          %p265 = pneg %p77
        $region14: #{_lambda_.1} parent=11 // pred_check_branch
          %267 = sbr.rel (%p265) target = $region16
        $region15: #{_lambda_.1} parent=11 // pred_region
          _
        $region16: #{_lambda_.1} parent=11 // pred_fallthru
          _
        // Predicated region
        $region17: #{_lambda_.1} parent=11 // pred_check
          %p268 = pneg %p98
        $region18: #{_lambda_.1} parent=11 // pred_check_branch
          %270 = sbr.rel (%p268) target = $region20
        $region19: #{_lambda_.1} parent=11 // pred_region
          _
        $region20: #{_lambda_.1} parent=11 // pred_fallthru
          _
        // Predicated region
        $region21: #{_lambda_.1} parent=11 // pred_check
          %p271 = pneg %p119
        $region22: #{_lambda_.1} parent=11 // pred_check_branch
          %273 = sbr.rel (%p271) target = $region24
        $region23: #{_lambda_.1} parent=11 // pred_region
          _
        $region24: #{_lambda_.1} parent=11 // pred_fallthru
          _
        // Predicated region
        $region25: #{_lambda_.1} parent=11 // pred_check
          %p274 = pneg %p140
        $region26: #{_lambda_.1} parent=11 // pred_check_branch
          %276 = sbr.rel (%p274) target = $region28
        $region27: #{_lambda_.1} parent=11 // pred_region
          _
        $region28: #{_lambda_.1} parent=11 // pred_fallthru
          _
        // Predicated region
        $region29: #{_lambda_.1} parent=11 // pred_check
          %p277 = pneg %p161
        $region30: #{_lambda_.1} parent=11 // pred_check_branch
          %279 = sbr.rel (%p277) target = $region32
        $region31: #{_lambda_.1} parent=11 // pred_region
          _
        $region32: #{_lambda_.1} parent=11 // pred_fallthru
          _
        // Predicated region
        $region33: #{_lambda_.1} parent=11 // pred_check
          %p280 = pneg %p182
        $region34: #{_lambda_.1} parent=11 // pred_check_branch
          %282 = sbr.rel (%p280) target = $region36
        $region35: #{_lambda_.1} parent=11 // pred_region
          _
        $region36: #{_lambda_.1} parent=11 // pred_fallthru
          _
        // Predicated region
        $region37: #{_lambda_.1} parent=11 // pred_check
          %p283 = pneg %p203
        $region38: #{_lambda_.1} parent=11 // pred_check_branch
          %285 = sbr.rel (%p283) target = $region40
        $region39: #{_lambda_.1} parent=11 // pred_region
          _
        $region40: #{_lambda_.1} parent=11 // pred_fallthru
          _
        // Predicated region
        $region41: #{_lambda_.1} parent=11 // pred_check
          %p286 = pneg %p224
        $region42: #{_lambda_.1} parent=11 // pred_check_branch
          %288 = sbr.rel (%p286) target = $region44
        $region43: #{_lambda_.1} parent=11 // pred_region
          _
        $region44: #{_lambda_.1} parent=11 // pred_fallthru
          _
      $region12: #{_lambda_.1} parent=5 // pred_fallthru
        _
      %p289 = scmp.lt.s32.totalorder %s18, 4
      // Predicated region
      $region45: #{_lambda_.1} parent=5 // pred_check
        %p290 = pneg %p289
      $region46: #{_lambda_.1} parent=5 // pred_check_branch
        %292 = sbr.rel (%p290) target = $region48
      $region47: #{_lambda_.1} parent=5 // pred_region
        // Predicated region
        $region49: #{_lambda_.1} parent=47 // pred_check
          %p293 = pneg %p50
        $region50: #{_lambda_.1} parent=47 // pred_check_branch
          %295 = sbr.rel (%p293) target = $region52
        $region51: #{_lambda_.1} parent=47 // pred_region
          %p296 = scmp.lt.s32.totalorder %s25, 1
          %s297 = scalar_select %p296, %s25, 1
          %s298 = smul.addr %s297, 66
          %s299 = smul.addr %s298, 4
          %s300 = scalar_lea.vmem %s0, %s299
        $region52: #{_lambda_.1} parent=47 // pred_fallthru
          _
      $region48: #{_lambda_.1} parent=5 // pred_fallthru
        _
      %p301 = scmp.le.s32.totalorder 1, %s18
      %p302 = scmp.lt.s32.totalorder %s18, 5
      %p303 = pnand %p301, %p302
      %p304 = pneg %p303
      // Predicated region
      $region53: #{_lambda_.1} parent=5 // pred_check
        _
      $region54: #{_lambda_.1} parent=5 // pred_check_branch
        %306 = sbr.rel (%p303) target = $region56
      $region55: #{_lambda_.1} parent=5 // pred_region
        %s307 = ssub.s32 %s18, 1
        %p308 = scmp.lt.s32.totalorder %s27, 1
        %s309 = scalar_select %p308, %s27, 1
        %s310 = smul.addr %s309, 66
        %s311 = smul.addr %s310, 4
        %s312 = scalar_lea.vmem %s0, %s311
        %p313 = pneg %p56
        %p314 = pneg %p53
        %p315 = pneg %p77
        %p316 = pneg %p74
        %p317 = pneg %p98
        %p318 = pneg %p95
        %p319 = pneg %p119
        %p320 = pneg %p116
        %p321 = pneg %p140
        %p322 = pneg %p137
        %p323 = pneg %p161
        %p324 = pneg %p158
        %p325 = pneg %p182
        %p326 = pneg %p179
        %p327 = pneg %p203
        %p328 = pneg %p200
        %p329 = pneg %p224
        %p330 = pneg %p221
        %p331 = pneg %p250
        %p332 = pneg %p247
        %s333 = sand.u32 %s237, 1
        %s334 = scalar_lea.sflag [#allocation4], %s333
        %s335 = sand.u32 %s237, 1
        %s336 = scalar_lea.vmem [#allocation3], %s335
        %p337 = scmp.lt.s32.totalorder %s27, 1
        %s338 = scalar_select %p337, %s27, 1
        %s339 = smul.addr %s338, 66
        %s340 = smul.addr %s339, 4
        %s341 = scalar_lea.vmem %s0, %s340
        %s343 = smul.u32 %s28, 8
        %s344 = smul.u32 %s343, 3
        %s345 = smul.addr %s344, 4
        %s346 = scalar_lea.vmem %s341, %s345
        %v347 = vld [vmem:[%s346] sm:$0xf]
        %v348 = vld [vmem:[%s346 + $0x4] sm:$0xf]
        %v349 = vld [vmem:[%s346 + $0x8] sm:$0x1]
        %v350 = vld [vmem:[%s346 + $0xc] sm:$0xf]
        %v351 = vld [vmem:[%s346 + $0x10] sm:$0xf]
        %v352 = vld [vmem:[%s346 + $0x14] sm:$0x1]
        %v353 = vld [vmem:[%s346 + $0x18] sm:$0xf]
        %v354 = vld [vmem:[%s346 + $0x1c] sm:$0xf]
        %v355 = vld [vmem:[%s346 + $0x20] sm:$0x1]
        %v356 = vld [vmem:[%s346 + $0x24] sm:$0xf]
        %v357 = vld [vmem:[%s346 + $0x28] sm:$0xf]
        %v358 = vld [vmem:[%s346 + $0x2c] sm:$0x1]
        %v359 = vld [vmem:[%s346 + $0x30] sm:$0xf]
        %v360 = vld [vmem:[%s346 + $0x34] sm:$0xf]
        %v361 = vld [vmem:[%s346 + $0x38] sm:$0x1]
        %v362 = vld [vmem:[%s346 + $0x3c] sm:$0xf]
        %v363 = vld [vmem:[%s346 + $0x40] sm:$0xf]
        %v364 = vld [vmem:[%s346 + $0x44] sm:$0x1]
        %v365 = vld [vmem:[%s346 + $0x48] sm:$0xf]
        %v366 = vld [vmem:[%s346 + $0x4c] sm:$0xf]
        %v367 = vld [vmem:[%s346 + $0x50] sm:$0x1]
        %v368 = vld [vmem:[%s346 + $0x54] sm:$0xf]
        %v369 = vld [vmem:[%s346 + $0x58] sm:$0xf]
        %v370 = vld [vmem:[%s346 + $0x5c] sm:$0x1]
        %v371 = vld [vmem:[%s346 + $0x60] sm:$0xf]
        %v372 = vld [vmem:[%s346 + $0x64] sm:$0xf]
        %v373 = vld [vmem:[%s346 + $0x68] sm:$0x1]
        %v374 = vld [vmem:[%s346 + $0x6c] sm:$0xf]
        %v375 = vld [vmem:[%s346 + $0x70] sm:$0xf]
        %v376 = vld [vmem:[%s346 + $0x74] sm:$0x1]
        %v377 = vld [vmem:[%s346 + $0x78] sm:$0xf]
        %v378 = vld [vmem:[%s346 + $0x7c] sm:$0xf]
        %v379 = vld [vmem:[%s346 + $0x80] sm:$0x1]
        %v380 = vld [vmem:[%s346 + $0x84] sm:$0xf]
        %v381 = vld [vmem:[%s346 + $0x88] sm:$0xf]
        %v382 = vld [vmem:[%s346 + $0x8c] sm:$0x1]
        %v383 = vld [vmem:[%s346 + $0x90] sm:$0xf]
        %v384 = vld [vmem:[%s346 + $0x94] sm:$0xf]
        %v385 = vld [vmem:[%s346 + $0x98] sm:$0x1]
        %v386 = vld [vmem:[%s346 + $0x9c] sm:$0xf]
        %v387 = vld [vmem:[%s346 + $0xa0] sm:$0xf]
        %v388 = vld [vmem:[%s346 + $0xa4] sm:$0x1]
        %v389 = vunpack.c.l.bf16 %v347
        %v390 = vunpack.c.l.bf16 %v348
        %v391 = vunpack.c.l.bf16 %v349
        %v392 = vunpack.c.l.bf16 %v350
        %v393 = vunpack.c.l.bf16 %v351
        %v394 = vunpack.c.l.bf16 %v352
        %v395 = vunpack.c.l.bf16 %v353
        %v396 = vunpack.c.l.bf16 %v354
        %v397 = vunpack.c.l.bf16 %v355
        %v398 = vunpack.c.l.bf16 %v356
        %v399 = vunpack.c.l.bf16 %v357
        %v400 = vunpack.c.l.bf16 %v358
        %v401 = vunpack.c.l.bf16 %v359
        %v402 = vunpack.c.l.bf16 %v360
        %v403 = vunpack.c.l.bf16 %v361
        %v404 = vunpack.c.l.bf16 %v362
        %v405 = vunpack.c.l.bf16 %v363
        %v406 = vunpack.c.l.bf16 %v364
        %v407 = vunpack.c.l.bf16 %v365
        %v408 = vunpack.c.l.bf16 %v366
        %v409 = vunpack.c.l.bf16 %v367
        %v410 = vunpack.c.l.bf16 %v368
        %v411 = vunpack.c.l.bf16 %v369
        %v412 = vunpack.c.l.bf16 %v370
        %v413 = vunpack.c.l.bf16 %v371
        %v414 = vunpack.c.l.bf16 %v372
        %v415 = vunpack.c.l.bf16 %v373
        %v416 = vunpack.c.l.bf16 %v374
        %v417 = vunpack.c.l.bf16 %v375
        %v418 = vunpack.c.l.bf16 %v376
        %v419 = vunpack.c.l.bf16 %v377
        %v420 = vunpack.c.l.bf16 %v378
        %v421 = vunpack.c.l.bf16 %v379
        %v422 = vunpack.c.l.bf16 %v380
        %v423 = vunpack.c.l.bf16 %v381
        %v424 = vunpack.c.l.bf16 %v382
        %v425 = vunpack.c.l.bf16 %v383
        %v426 = vunpack.c.l.bf16 %v384
        %v427 = vunpack.c.l.bf16 %v385
        %v428 = vunpack.c.l.bf16 %v386
        %v429 = vunpack.c.l.bf16 %v387
        %v430 = vunpack.c.l.bf16 %v388
        %v431 = vld [vmem:[%s1] sm:$0x3]
        %v432 = vld [vmem:[%s1 + $0x2] sm:$0x3]
        %v433 = vld [vmem:[%s1 + $0x4] sm:$0x3]
        %v434 = vld [vmem:[%s1 + $0x6] sm:$0x3]
        %v435 = vld [vmem:[%s1 + $0x8] sm:$0x3]
        %v436 = vld [vmem:[%s1 + $0xa] sm:$0x3]
        %v437 = vld [vmem:[%s1 + $0xc] sm:$0x3]
        %v438 = vld [vmem:[%s1 + $0xe] sm:$0x3]
        %v439 = vld [vmem:[%s1 + $0x10] sm:$0x3]
        %v440 = vld [vmem:[%s2] sm:$0x1]
        %v441 = vpack.c.bf16 %v390, %v389
        %v442 = vpack.c.bf16 %v393, %v392
        %v443 = vpack.c.bf16 %v396, %v395
        %v444 = vpack.c.bf16 %v399, %v398
        %v445 = vpack.c.bf16 %v402, %v401
        %v446 = vpack.c.bf16 %v405, %v404
        %v447 = vpack.c.bf16 %v408, %v407
        %v448 = vpack.c.bf16 %v411, %v410
        %v449 = vpack.c.bf16 %v414, %v413
        %v450 = vpack.c.bf16 %v417, %v416
        %v451 = vpack.c.bf16 %v420, %v419
        %v452 = vpack.c.bf16 %v423, %v422
        %vm489 = vcmask 1046528
        %v490 = vrot.slane %v389, 1
        %v491 = vrot.slane %v390, 1
        %v492 = vsel %vm489, %v490, %v491
        %v493 = vrot.slane %v391, 1
        %v494 = vsel %vm489, %v491, %v493
        %v495 = vrot.slane %v392, 1
        %v496 = vrot.slane %v393, 1
        %v497 = vsel %vm489, %v495, %v496
        %v498 = vrot.slane %v394, 1
        %v499 = vsel %vm489, %v496, %v498
        %v500 = vrot.slane %v395, 1
        %v501 = vrot.slane %v396, 1
        %v502 = vsel %vm489, %v500, %v501
        %v503 = vrot.slane %v397, 1
        %v504 = vsel %vm489, %v501, %v503
        %v505 = vrot.slane %v398, 1
        %v506 = vrot.slane %v399, 1
        %v507 = vsel %vm489, %v505, %v506
        %v508 = vrot.slane %v400, 1
        %v509 = vsel %vm489, %v506, %v508
        %v510 = vrot.slane %v401, 1
        %v511 = vrot.slane %v402, 1
        %v512 = vsel %vm489, %v510, %v511
        %v513 = vrot.slane %v403, 1
        %v514 = vsel %vm489, %v511, %v513
        %v515 = vrot.slane %v404, 1
        %v516 = vrot.slane %v405, 1
        %v517 = vsel %vm489, %v515, %v516
        %v518 = vrot.slane %v406, 1
        %v519 = vsel %vm489, %v516, %v518
        %v520 = vrot.slane %v407, 1
        %v521 = vrot.slane %v408, 1
        %v522 = vsel %vm489, %v520, %v521
        %v523 = vrot.slane %v409, 1
        %v524 = vsel %vm489, %v521, %v523
        %v525 = vrot.slane %v410, 1
        %v526 = vrot.slane %v411, 1
        %v527 = vsel %vm489, %v525, %v526
        %v528 = vrot.slane %v412, 1
        %v529 = vsel %vm489, %v526, %v528
        %v530 = vrot.slane %v413, 1
        %v531 = vrot.slane %v414, 1
        %v532 = vsel %vm489, %v530, %v531
        %v533 = vrot.slane %v415, 1
        %v534 = vsel %vm489, %v531, %v533
        %v535 = vrot.slane %v416, 1
        %v536 = vrot.slane %v417, 1
        %v537 = vsel %vm489, %v535, %v536
        %v538 = vrot.slane %v418, 1
        %v539 = vsel %vm489, %v536, %v538
        %v540 = vrot.slane %v419, 1
        %v541 = vrot.slane %v420, 1
        %v542 = vsel %vm489, %v540, %v541
        %v543 = vrot.slane %v421, 1
        %v544 = vsel %vm489, %v541, %v543
        %v545 = vrot.slane %v422, 1
        %v546 = vrot.slane %v423, 1
        %v547 = vsel %vm489, %v545, %v546
        %v548 = vrot.slane %v424, 1
        %v549 = vsel %vm489, %v546, %v548
        %v574 = vpack.c.bf16 %v494, %v492
        %v575 = vpack.c.bf16 %v499, %v497
        %v576 = vpack.c.bf16 %v504, %v502
        %v577 = vpack.c.bf16 %v509, %v507
        %v578 = vpack.c.bf16 %v514, %v512
        %v579 = vpack.c.bf16 %v519, %v517
        %v580 = vpack.c.bf16 %v524, %v522
        %v581 = vpack.c.bf16 %v529, %v527
        %v582 = vpack.c.bf16 %v534, %v532
        %v583 = vpack.c.bf16 %v539, %v537
        %v584 = vpack.c.bf16 %v544, %v542
        %v585 = vpack.c.bf16 %v549, %v547
        %vm586 = vcmask 23552
        %v588 = vsel %vm586, %v574, 0
        %v591 = vsel %vm586, %v575, 0
        %v594 = vsel %vm586, %v576, 0
        %v597 = vsel %vm586, %v577, 0
        %v600 = vsel %vm586, %v578, 0
        %v603 = vsel %vm586, %v579, 0
        %v606 = vsel %vm586, %v580, 0
        %v609 = vsel %vm586, %v581, 0
        %v612 = vsel %vm586, %v582, 0
        %v615 = vsel %vm586, %v583, 0
        %v618 = vsel %vm586, %v584, 0
        %v621 = vsel %vm586, %v585, 0
        %vm623 = vcmask 1040384
        %vm624 = vcmask 1041408
        %v625 = vsel %vm623, 4294967295, 65535
        %v626 = vsel %vm624, %v625, 0
        %v628 = vand.u32 %v432, %v626
        %630 = vmatprep.subr.bf16.mxu0 0
        %631 = vmatpush1.bf16.msra.mxu0 %v628
        %632 = vmatprep.subr.bf16.mxu0 0
        %633 = vmatpush1.bf16.msra.mxu0 0
        %634 = vmatprep.subr.bf16.mxu0 0
        %635 = vmatpush1.bf16.msra.mxu0 0
        %636 = vmatprep.subr.bf16.mxu0 0
        %637 = vmatpush1.bf16.msra.mxu0 0
        %638 = vmatprep.subr.bf16.mxu0 0
        %639 = vmatpush1.bf16.msra.mxu0 0
        %640 = vmatprep.subr.bf16.mxu0 0
        %641 = vmatpush1.bf16.msra.mxu0 0
        %642 = vmatprep.subr.bf16.mxu0 0
        %643 = vmatpush1.bf16.msra.mxu0 0
        %644 = vmatprep.subr.bf16.mxu0 0
        %645 = vmatpush1.bf16.msra.mxu0 0
        %646 = vmatprep.subr.bf16.mxu0 0
        %647 = vmatpush1.bf16.msra.mxu0 0
        %648 = vmatprep.subr.bf16.mxu0 0
        %649 = vmatpush1.bf16.msra.mxu0 0
        %650 = vmatprep.subr.bf16.mxu0 0
        %651 = vmatpush1.bf16.msra.mxu0 0
        %652 = vmatprep.subr.bf16.mxu0 0
        %653 = vmatpush1.bf16.msra.mxu0 0
        %654 = vmatprep.subr.bf16.mxu0 0
        %655 = vmatpush1.bf16.msra.mxu0 0
        %656 = vmatprep.subr.bf16.mxu0 0
        %657 = vmatpush1.bf16.msra.mxu0 0
        %658 = vmatprep.subr.bf16.mxu0 0
        %659 = vmatpush1.bf16.msra.mxu0 0
        %660 = vmatprep.subr.bf16.mxu0 0
        %661 = vmatpush1.bf16.msra.mxu0 0
        %662 = vmatprep.mubr.bf16.mxu0 0
        %663 = vmatmul.mubr.bf16.gmra.mrb[0].mxu0 %v588
        %v664 = vpop.f32.mrb[0].mxu0
        %v665 = vadd.f32 0.0, %v664
        %v666 = vpop.f32.mrb[0].mxu0
        %v667 = vpop.f32.mrb[0].mxu0
        %v668 = vadd.f32 0.0, %v667
        %v669 = vpop.f32.mrb[0].mxu0
        %670 = vmatprep.mubr.bf16.mxu0 0
        %671 = vmatmul.mubr.bf16.gmra.mrb[0].mxu0 %v591
        %v672 = vpop.f32.mrb[0].mxu0
        %v673 = vadd.f32 0.0, %v672
        %v674 = vpop.f32.mrb[0].mxu0
        %v675 = vpop.f32.mrb[0].mxu0
        %v676 = vadd.f32 0.0, %v675
        %v677 = vpop.f32.mrb[0].mxu0
        %678 = vmatprep.mubr.bf16.mxu0 0
        %679 = vmatmul.mubr.bf16.gmra.mrb[0].mxu0 %v594
        %v680 = vpop.f32.mrb[0].mxu0
        %v681 = vadd.f32 0.0, %v680
        %v682 = vpop.f32.mrb[0].mxu0
        %v683 = vpop.f32.mrb[0].mxu0
        %v684 = vadd.f32 0.0, %v683
        %v685 = vpop.f32.mrb[0].mxu0
        %686 = vmatprep.mubr.bf16.mxu0 0
        %687 = vmatmul.mubr.bf16.gmra.mrb[0].mxu0 %v597
        %v688 = vpop.f32.mrb[0].mxu0
        %v689 = vadd.f32 0.0, %v688
        %v690 = vpop.f32.mrb[0].mxu0
        %v691 = vpop.f32.mrb[0].mxu0
        %v692 = vadd.f32 0.0, %v691
        %v693 = vpop.f32.mrb[0].mxu0
        %694 = vmatprep.mubr.bf16.mxu0 0
        %695 = vmatmul.mubr.bf16.gmra.mrb[0].mxu0 %v600
        %v696 = vpop.f32.mrb[0].mxu0
        %v697 = vadd.f32 0.0, %v696
        %v698 = vpop.f32.mrb[0].mxu0
        %v699 = vpop.f32.mrb[0].mxu0
        %v700 = vadd.f32 0.0, %v699
        %v701 = vpop.f32.mrb[0].mxu0
        %702 = vmatprep.mubr.bf16.mxu0 0
        %703 = vmatmul.mubr.bf16.gmra.mrb[0].mxu0 %v603
        %v704 = vpop.f32.mrb[0].mxu0
        %v705 = vadd.f32 0.0, %v704
        %v706 = vpop.f32.mrb[0].mxu0
        %v707 = vpop.f32.mrb[0].mxu0
        %v708 = vadd.f32 0.0, %v707
        %v709 = vpop.f32.mrb[0].mxu0
        %710 = vmatprep.mubr.bf16.mxu0 0
        %711 = vmatmul.mubr.bf16.gmra.mrb[0].mxu0 %v606
        %v712 = vpop.f32.mrb[0].mxu0
        %v713 = vadd.f32 0.0, %v712
        %v714 = vpop.f32.mrb[0].mxu0
        %v715 = vpop.f32.mrb[0].mxu0
        %v716 = vadd.f32 0.0, %v715
        %v717 = vpop.f32.mrb[0].mxu0
        %718 = vmatprep.mubr.bf16.mxu0 0
        %719 = vmatmul.mubr.bf16.gmra.mrb[0].mxu0 %v609
        %v720 = vpop.f32.mrb[0].mxu0
        %v721 = vadd.f32 0.0, %v720
        %v722 = vpop.f32.mrb[0].mxu0
        %v723 = vpop.f32.mrb[0].mxu0
        %v724 = vadd.f32 0.0, %v723
        %v725 = vpop.f32.mrb[0].mxu0
        %726 = vmatprep.mubr.bf16.mxu0 0
        %727 = vmatmul.mubr.bf16.gmra.mrb[0].mxu0 %v612
        %v728 = vpop.f32.mrb[0].mxu0
        %v729 = vadd.f32 0.0, %v728
        %v730 = vpop.f32.mrb[0].mxu0
        %v731 = vpop.f32.mrb[0].mxu0
        %v732 = vadd.f32 0.0, %v731
        %v733 = vpop.f32.mrb[0].mxu0
        %734 = vmatprep.mubr.bf16.mxu0 0
        %735 = vmatmul.mubr.bf16.gmra.mrb[0].mxu0 %v615
        %v736 = vpop.f32.mrb[0].mxu0
        %v737 = vadd.f32 0.0, %v736
        %v738 = vpop.f32.mrb[0].mxu0
        %v739 = vpop.f32.mrb[0].mxu0
        %v740 = vadd.f32 0.0, %v739
        %v741 = vpop.f32.mrb[0].mxu0
        %742 = vmatprep.mubr.bf16.mxu0 0
        %743 = vmatmul.mubr.bf16.gmra.mrb[0].mxu0 %v618
        %v744 = vpop.f32.mrb[0].mxu0
        %v745 = vadd.f32 0.0, %v744
        %v746 = vpop.f32.mrb[0].mxu0
        %v747 = vpop.f32.mrb[0].mxu0
        %v748 = vadd.f32 0.0, %v747
        %v749 = vpop.f32.mrb[0].mxu0
        %750 = vmatprep.mubr.bf16.mxu0 0
        %751 = vmatmul.mubr.bf16.gmra.mrb[0].mxu0 %v621
        %v752 = vpop.f32.mrb[0].mxu0
        %v753 = vadd.f32 0.0, %v752
        %v754 = vpop.f32.mrb[0].mxu0
        %v755 = vpop.f32.mrb[0].mxu0
        %v756 = vadd.f32 0.0, %v755
        %v757 = vpop.f32.mrb[0].mxu0
        %758 = vdwg.mxu0
        %v760 = vsel %vm586, %v441, 0
        %v763 = vsel %vm586, %v442, 0
        %v766 = vsel %vm586, %v443, 0
        %v769 = vsel %vm586, %v444, 0
        %v772 = vsel %vm586, %v445, 0
        %v775 = vsel %vm586, %v446, 0
        %v778 = vsel %vm586, %v447, 0
        %v781 = vsel %vm586, %v448, 0
        %v784 = vsel %vm586, %v449, 0
        %v787 = vsel %vm586, %v450, 0
        %v790 = vsel %vm586, %v451, 0
        %v793 = vsel %vm586, %v452, 0
        %v796 = vand.u32 %v431, %v626
        %798 = vmatprep.subr.bf16.mxu0 0
        %799 = vmatpush1.bf16.msra.mxu0 %v796
        %800 = vmatprep.subr.bf16.mxu0 0
        %801 = vmatpush1.bf16.msra.mxu0 0
        %802 = vmatprep.subr.bf16.mxu0 0
        %803 = vmatpush1.bf16.msra.mxu0 0
        %804 = vmatprep.subr.bf16.mxu0 0
        %805 = vmatpush1.bf16.msra.mxu0 0
        %806 = vmatprep.subr.bf16.mxu0 0
        %807 = vmatpush1.bf16.msra.mxu0 0
        %808 = vmatprep.subr.bf16.mxu0 0
        %809 = vmatpush1.bf16.msra.mxu0 0
        %810 = vmatprep.subr.bf16.mxu0 0
        %811 = vmatpush1.bf16.msra.mxu0 0
        %812 = vmatprep.subr.bf16.mxu0 0
        %813 = vmatpush1.bf16.msra.mxu0 0
        %814 = vmatprep.subr.bf16.mxu0 0
        %815 = vmatpush1.bf16.msra.mxu0 0
        %816 = vmatprep.subr.bf16.mxu0 0
        %817 = vmatpush1.bf16.msra.mxu0 0
        %818 = vmatprep.subr.bf16.mxu0 0
        %819 = vmatpush1.bf16.msra.mxu0 0
        %820 = vmatprep.subr.bf16.mxu0 0
        %821 = vmatpush1.bf16.msra.mxu0 0
        %822 = vmatprep.subr.bf16.mxu0 0
        %823 = vmatpush1.bf16.msra.mxu0 0
        %824 = vmatprep.subr.bf16.mxu0 0
        %825 = vmatpush1.bf16.msra.mxu0 0
        %826 = vmatprep.subr.bf16.mxu0 0
        %827 = vmatpush1.bf16.msra.mxu0 0
        %828 = vmatprep.subr.bf16.mxu0 0
        %829 = vmatpush1.bf16.msra.mxu0 0
        %830 = vmatprep.mubr.bf16.mxu0 0
        %831 = vmatmul.mubr.bf16.gmra.mrb[0].mxu0 %v760
        %v832 = vpop.f32.mrb[0].mxu0
        %v833 = vadd.f32 %v665, %v832
        %v834 = vpop.f32.mrb[0].mxu0
        %v835 = vpop.f32.mrb[0].mxu0
        %v836 = vadd.f32 %v668, %v835
        %v837 = vpop.f32.mrb[0].mxu0
        %838 = vmatprep.mubr.bf16.mxu0 0
        %839 = vmatmul.mubr.bf16.gmra.mrb[0].mxu0 %v763
        %v840 = vpop.f32.mrb[0].mxu0
        %v841 = vadd.f32 %v673, %v840
        %v842 = vpop.f32.mrb[0].mxu0
        %v843 = vpop.f32.mrb[0].mxu0
        %v844 = vadd.f32 %v676, %v843
        %v845 = vpop.f32.mrb[0].mxu0
        %846 = vmatprep.mubr.bf16.mxu0 0
        %847 = vmatmul.mubr.bf16.gmra.mrb[0].mxu0 %v766
        %v848 = vpop.f32.mrb[0].mxu0
        %v849 = vadd.f32 %v681, %v848
        %v850 = vpop.f32.mrb[0].mxu0
        %v851 = vpop.f32.mrb[0].mxu0
        %v852 = vadd.f32 %v684, %v851
        %v853 = vpop.f32.mrb[0].mxu0
        %854 = vmatprep.mubr.bf16.mxu0 0
        %855 = vmatmul.mubr.bf16.gmra.mrb[0].mxu0 %v769
        %v856 = vpop.f32.mrb[0].mxu0
        %v857 = vadd.f32 %v689, %v856
        %v858 = vpop.f32.mrb[0].mxu0
        %v859 = vpop.f32.mrb[0].mxu0
        %v860 = vadd.f32 %v692, %v859
        %v861 = vpop.f32.mrb[0].mxu0
        %862 = vmatprep.mubr.bf16.mxu0 0
        %863 = vmatmul.mubr.bf16.gmra.mrb[0].mxu0 %v772
        %v864 = vpop.f32.mrb[0].mxu0
        %v865 = vadd.f32 %v697, %v864
        %v866 = vpop.f32.mrb[0].mxu0
        %v867 = vpop.f32.mrb[0].mxu0
        %v868 = vadd.f32 %v700, %v867
        %v869 = vpop.f32.mrb[0].mxu0
        %870 = vmatprep.mubr.bf16.mxu0 0
        %871 = vmatmul.mubr.bf16.gmra.mrb[0].mxu0 %v775
        %v872 = vpop.f32.mrb[0].mxu0
        %v873 = vadd.f32 %v705, %v872
        %v874 = vpop.f32.mrb[0].mxu0
        %v875 = vpop.f32.mrb[0].mxu0
        %v876 = vadd.f32 %v708, %v875
        %v877 = vpop.f32.mrb[0].mxu0
        %878 = vmatprep.mubr.bf16.mxu0 0
        %879 = vmatmul.mubr.bf16.gmra.mrb[0].mxu0 %v778
        %v880 = vpop.f32.mrb[0].mxu0
        %v881 = vadd.f32 %v713, %v880
        %v882 = vpop.f32.mrb[0].mxu0
        %v883 = vpop.f32.mrb[0].mxu0
        %v884 = vadd.f32 %v716, %v883
        %v885 = vpop.f32.mrb[0].mxu0
        %886 = vmatprep.mubr.bf16.mxu0 0
        %887 = vmatmul.mubr.bf16.gmra.mrb[0].mxu0 %v781
        %v888 = vpop.f32.mrb[0].mxu0
        %v889 = vadd.f32 %v721, %v888
        %v890 = vpop.f32.mrb[0].mxu0
        %v891 = vpop.f32.mrb[0].mxu0
        %v892 = vadd.f32 %v724, %v891
        %v893 = vpop.f32.mrb[0].mxu0
        %894 = vmatprep.mubr.bf16.mxu0 0
        %895 = vmatmul.mubr.bf16.gmra.mrb[0].mxu0 %v784
        %v896 = vpop.f32.mrb[0].mxu0
        %v897 = vadd.f32 %v729, %v896
        %v898 = vpop.f32.mrb[0].mxu0
        %v899 = vpop.f32.mrb[0].mxu0
        %v900 = vadd.f32 %v732, %v899
        %v901 = vpop.f32.mrb[0].mxu0
        %902 = vmatprep.mubr.bf16.mxu0 0
        %903 = vmatmul.mubr.bf16.gmra.mrb[0].mxu0 %v787
        %v904 = vpop.f32.mrb[0].mxu0
        %v905 = vadd.f32 %v737, %v904
        %v906 = vpop.f32.mrb[0].mxu0
        %v907 = vpop.f32.mrb[0].mxu0
        %v908 = vadd.f32 %v740, %v907
        %v909 = vpop.f32.mrb[0].mxu0
        %910 = vmatprep.mubr.bf16.mxu0 0
        %911 = vmatmul.mubr.bf16.gmra.mrb[0].mxu0 %v790
        %v912 = vpop.f32.mrb[0].mxu0
        %v913 = vadd.f32 %v745, %v912
        %v914 = vpop.f32.mrb[0].mxu0
        %v915 = vpop.f32.mrb[0].mxu0
        %v916 = vadd.f32 %v748, %v915
        %v917 = vpop.f32.mrb[0].mxu0
        %918 = vmatprep.mubr.bf16.mxu0 0
        %919 = vmatmul.mubr.bf16.gmra.mrb[0].mxu0 %v793
        %v920 = vpop.f32.mrb[0].mxu0
        %v921 = vadd.f32 %v753, %v920
        %v922 = vpop.f32.mrb[0].mxu0
        %v923 = vpop.f32.mrb[0].mxu0
        %v924 = vadd.f32 %v756, %v923
        %v925 = vpop.f32.mrb[0].mxu0
        %926 = vdwg.mxu0
        %vm927 = vcmask 1045504
        %v928 = vrot.slane %v389, 2
        %v929 = vrot.slane %v390, 2
        %v930 = vsel %vm927, %v928, %v929
        %v931 = vrot.slane %v391, 2
        %v932 = vsel %vm927, %v929, %v931
        %v933 = vrot.slane %v392, 2
        %v934 = vrot.slane %v393, 2
        %v935 = vsel %vm927, %v933, %v934
        %v936 = vrot.slane %v394, 2
        %v937 = vsel %vm927, %v934, %v936
        %v938 = vrot.slane %v395, 2
        %v939 = vrot.slane %v396, 2
        %v940 = vsel %vm927, %v938, %v939
        %v941 = vrot.slane %v397, 2
        %v942 = vsel %vm927, %v939, %v941
        %v943 = vrot.slane %v398, 2
        %v944 = vrot.slane %v399, 2
        %v945 = vsel %vm927, %v943, %v944
        %v946 = vrot.slane %v400, 2
        %v947 = vsel %vm927, %v944, %v946
        %v948 = vrot.slane %v401, 2
        %v949 = vrot.slane %v402, 2
        %v950 = vsel %vm927, %v948, %v949
        %v951 = vrot.slane %v403, 2
        %v952 = vsel %vm927, %v949, %v951
        %v953 = vrot.slane %v404, 2
        %v954 = vrot.slane %v405, 2
        %v955 = vsel %vm927, %v953, %v954
        %v956 = vrot.slane %v406, 2
        %v957 = vsel %vm927, %v954, %v956
        %v958 = vrot.slane %v407, 2
        %v959 = vrot.slane %v408, 2
        %v960 = vsel %vm927, %v958, %v959
        %v961 = vrot.slane %v409, 2
        %v962 = vsel %vm927, %v959, %v961
        %v963 = vrot.slane %v410, 2
        %v964 = vrot.slane %v411, 2
        %v965 = vsel %vm927, %v963, %v964
        %v966 = vrot.slane %v412, 2
        %v967 = vsel %vm927, %v964, %v966
        %v968 = vrot.slane %v413, 2
        %v969 = vrot.slane %v414, 2
        %v970 = vsel %vm927, %v968, %v969
        %v971 = vrot.slane %v415, 2
        %v972 = vsel %vm927, %v969, %v971
        %v973 = vrot.slane %v416, 2
        %v974 = vrot.slane %v417, 2
        %v975 = vsel %vm927, %v973, %v974
        %v976 = vrot.slane %v418, 2
        %v977 = vsel %vm927, %v974, %v976
        %v978 = vrot.slane %v419, 2
        %v979 = vrot.slane %v420, 2
        %v980 = vsel %vm927, %v978, %v979
        %v981 = vrot.slane %v421, 2
        %v982 = vsel %vm927, %v979, %v981
        %v983 = vrot.slane %v422, 2
        %v984 = vrot.slane %v423, 2
        %v985 = vsel %vm927, %v983, %v984
        %v986 = vrot.slane %v424, 2
        %v987 = vsel %vm927, %v984, %v986
        %v1012 = vpack.c.bf16 %v932, %v930
        %v1013 = vpack.c.bf16 %v937, %v935
        %v1014 = vpack.c.bf16 %v942, %v940
        %v1015 = vpack.c.bf16 %v947, %v945
        %v1016 = vpack.c.bf16 %v952, %v950
        %v1017 = vpack.c.bf16 %v957, %v955
        %v1018 = vpack.c.bf16 %v962, %v960
        %v1019 = vpack.c.bf16 %v967, %v965
        %v1020 = vpack.c.bf16 %v972, %v970
        %v1021 = vpack.c.bf16 %v977, %v975
        %v1022 = vpack.c.bf16 %v982, %v980
        %v1023 = vpack.c.bf16 %v987, %v985
        %v1025 = vsel %vm586, %v1012, 0
        %v1028 = vsel %vm586, %v1013, 0
        %v1031 = vsel %vm586, %v1014, 0
        %v1034 = vsel %vm586, %v1015, 0
        %v1037 = vsel %vm586, %v1016, 0
        %v1040 = vsel %vm586, %v1017, 0
        %v1043 = vsel %vm586, %v1018, 0
        %v1046 = vsel %vm586, %v1019, 0
        %v1049 = vsel %vm586, %v1020, 0
        %v1052 = vsel %vm586, %v1021, 0
        %v1055 = vsel %vm586, %v1022, 0
        %v1058 = vsel %vm586, %v1023, 0
        %v1061 = vand.u32 %v433, %v626
        %1063 = vmatprep.subr.bf16.mxu0 0
        %1064 = vmatpush1.bf16.msra.mxu0 %v1061
        %1065 = vmatprep.subr.bf16.mxu0 0
        %1066 = vmatpush1.bf16.msra.mxu0 0
        %1067 = vmatprep.subr.bf16.mxu0 0
        %1068 = vmatpush1.bf16.msra.mxu0 0
        %1069 = vmatprep.subr.bf16.mxu0 0
        %1070 = vmatpush1.bf16.msra.mxu0 0
        %1071 = vmatprep.subr.bf16.mxu0 0
        %1072 = vmatpush1.bf16.msra.mxu0 0
        %1073 = vmatprep.subr.bf16.mxu0 0
        %1074 = vmatpush1.bf16.msra.mxu0 0
        %1075 = vmatprep.subr.bf16.mxu0 0
        %1076 = vmatpush1.bf16.msra.mxu0 0
        %1077 = vmatprep.subr.bf16.mxu0 0
        %1078 = vmatpush1.bf16.msra.mxu0 0
        %1079 = vmatprep.subr.bf16.mxu0 0
        %1080 = vmatpush1.bf16.msra.mxu0 0
        %1081 = vmatprep.subr.bf16.mxu0 0
        %1082 = vmatpush1.bf16.msra.mxu0 0
        %1083 = vmatprep.subr.bf16.mxu0 0
        %1084 = vmatpush1.bf16.msra.mxu0 0
        %1085 = vmatprep.subr.bf16.mxu0 0
        %1086 = vmatpush1.bf16.msra.mxu0 0
        %1087 = vmatprep.subr.bf16.mxu0 0
        %1088 = vmatpush1.bf16.msra.mxu0 0
        %1089 = vmatprep.subr.bf16.mxu0 0
        %1090 = vmatpush1.bf16.msra.mxu0 0
        %1091 = vmatprep.subr.bf16.mxu0 0
        %1092 = vmatpush1.bf16.msra.mxu0 0
        %1093 = vmatprep.subr.bf16.mxu0 0
        %1094 = vmatpush1.bf16.msra.mxu0 0
        %1095 = vmatprep.mubr.bf16.mxu0 0
        %1096 = vmatmul.mubr.bf16.gmra.mrb[0].mxu0 %v1025
        %v1097 = vpop.f32.mrb[0].mxu0
        %v1098 = vadd.f32 0.0, %v1097
        %v1099 = vpop.f32.mrb[0].mxu0
        %v1100 = vpop.f32.mrb[0].mxu0
        %v1101 = vadd.f32 0.0, %v1100
        %v1102 = vpop.f32.mrb[0].mxu0
        %1103 = vmatprep.mubr.bf16.mxu0 0
        %1104 = vmatmul.mubr.bf16.gmra.mrb[0].mxu0 %v1028
        %v1105 = vpop.f32.mrb[0].mxu0
        %v1106 = vadd.f32 0.0, %v1105
        %v1107 = vpop.f32.mrb[0].mxu0
        %v1108 = vpop.f32.mrb[0].mxu0
        %v1109 = vadd.f32 0.0, %v1108
        %v1110 = vpop.f32.mrb[0].mxu0
        %1111 = vmatprep.mubr.bf16.mxu0 0
        %1112 = vmatmul.mubr.bf16.gmra.mrb[0].mxu0 %v1031
        %v1113 = vpop.f32.mrb[0].mxu0
        %v1114 = vadd.f32 0.0, %v1113
        %v1115 = vpop.f32.mrb[0].mxu0
        %v1116 = vpop.f32.mrb[0].mxu0
        %v1117 = vadd.f32 0.0, %v1116
        %v1118 = vpop.f32.mrb[0].mxu0
        %1119 = vmatprep.mubr.bf16.mxu0 0
        %1120 = vmatmul.mubr.bf16.gmra.mrb[0].mxu0 %v1034
        %v1121 = vpop.f32.mrb[0].mxu0
        %v1122 = vadd.f32 0.0, %v1121
        %v1123 = vpop.f32.mrb[0].mxu0
        %v1124 = vpop.f32.mrb[0].mxu0
        %v1125 = vadd.f32 0.0, %v1124
        %v1126 = vpop.f32.mrb[0].mxu0
        %1127 = vmatprep.mubr.bf16.mxu0 0
        %1128 = vmatmul.mubr.bf16.gmra.mrb[0].mxu0 %v1037
        %v1129 = vpop.f32.mrb[0].mxu0
        %v1130 = vadd.f32 0.0, %v1129
        %v1131 = vpop.f32.mrb[0].mxu0
        %v1132 = vpop.f32.mrb[0].mxu0
        %v1133 = vadd.f32 0.0, %v1132
        %v1134 = vpop.f32.mrb[0].mxu0
        %1135 = vmatprep.mubr.bf16.mxu0 0
        %1136 = vmatmul.mubr.bf16.gmra.mrb[0].mxu0 %v1040
        %v1137 = vpop.f32.mrb[0].mxu0
        %v1138 = vadd.f32 0.0, %v1137
        %v1139 = vpop.f32.mrb[0].mxu0
        %v1140 = vpop.f32.mrb[0].mxu0
        %v1141 = vadd.f32 0.0, %v1140
        %v1142 = vpop.f32.mrb[0].mxu0
        %1143 = vmatprep.mubr.bf16.mxu0 0
        %1144 = vmatmul.mubr.bf16.gmra.mrb[0].mxu0 %v1043
        %v1145 = vpop.f32.mrb[0].mxu0
        %v1146 = vadd.f32 0.0, %v1145
        %v1147 = vpop.f32.mrb[0].mxu0
        %v1148 = vpop.f32.mrb[0].mxu0
        %v1149 = vadd.f32 0.0, %v1148
        %v1150 = vpop.f32.mrb[0].mxu0
        %1151 = vmatprep.mubr.bf16.mxu0 0
        %1152 = vmatmul.mubr.bf16.gmra.mrb[0].mxu0 %v1046
        %v1153 = vpop.f32.mrb[0].mxu0
        %v1154 = vadd.f32 0.0, %v1153
        %v1155 = vpop.f32.mrb[0].mxu0
        %v1156 = vpop.f32.mrb[0].mxu0
        %v1157 = vadd.f32 0.0, %v1156
        %v1158 = vpop.f32.mrb[0].mxu0
        %1159 = vmatprep.mubr.bf16.mxu0 0
        %1160 = vmatmul.mubr.bf16.gmra.mrb[0].mxu0 %v1049
        %v1161 = vpop.f32.mrb[0].mxu0
        %v1162 = vadd.f32 0.0, %v1161
        %v1163 = vpop.f32.mrb[0].mxu0
        %v1164 = vpop.f32.mrb[0].mxu0
        %v1165 = vadd.f32 0.0, %v1164
        %v1166 = vpop.f32.mrb[0].mxu0
        %1167 = vmatprep.mubr.bf16.mxu0 0
        %1168 = vmatmul.mubr.bf16.gmra.mrb[0].mxu0 %v1052
        %v1169 = vpop.f32.mrb[0].mxu0
        %v1170 = vadd.f32 0.0, %v1169
        %v1171 = vpop.f32.mrb[0].mxu0
        %v1172 = vpop.f32.mrb[0].mxu0
        %v1173 = vadd.f32 0.0, %v1172
        %v1174 = vpop.f32.mrb[0].mxu0
        %1175 = vmatprep.mubr.bf16.mxu0 0
        %1176 = vmatmul.mubr.bf16.gmra.mrb[0].mxu0 %v1055
        %v1177 = vpop.f32.mrb[0].mxu0
        %v1178 = vadd.f32 0.0, %v1177
        %v1179 = vpop.f32.mrb[0].mxu0
        %v1180 = vpop.f32.mrb[0].mxu0
        %v1181 = vadd.f32 0.0, %v1180
        %v1182 = vpop.f32.mrb[0].mxu0
        %1183 = vmatprep.mubr.bf16.mxu0 0
        %1184 = vmatmul.mubr.bf16.gmra.mrb[0].mxu0 %v1058
        %v1185 = vpop.f32.mrb[0].mxu0
        %v1186 = vadd.f32 0.0, %v1185
        %v1187 = vpop.f32.mrb[0].mxu0
        %v1188 = vpop.f32.mrb[0].mxu0
        %v1189 = vadd.f32 0.0, %v1188
        %v1190 = vpop.f32.mrb[0].mxu0
        %1191 = vdwg.mxu0
        %v1192 = vadd.f32 %v833, %v1098
        %v1193 = vadd.f32 %v836, %v1101
        %v1194 = vadd.f32 %v841, %v1106
        %v1195 = vadd.f32 %v844, %v1109
        %v1196 = vadd.f32 %v849, %v1114
        %v1197 = vadd.f32 %v852, %v1117
        %v1198 = vadd.f32 %v857, %v1122
        %v1199 = vadd.f32 %v860, %v1125
        %v1200 = vadd.f32 %v865, %v1130
        %v1201 = vadd.f32 %v868, %v1133
        %v1202 = vadd.f32 %v873, %v1138
        %v1203 = vadd.f32 %v876, %v1141
        %v1204 = vadd.f32 %v881, %v1146
        %v1205 = vadd.f32 %v884, %v1149
        %v1206 = vadd.f32 %v889, %v1154
        %v1207 = vadd.f32 %v892, %v1157
        %v1208 = vadd.f32 %v897, %v1162
        %v1209 = vadd.f32 %v900, %v1165
        %v1210 = vadd.f32 %v905, %v1170
        %v1211 = vadd.f32 %v908, %v1173
        %v1212 = vadd.f32 %v913, %v1178
        %v1213 = vadd.f32 %v916, %v1181
        %v1214 = vadd.f32 %v921, %v1186
        %v1215 = vadd.f32 %v924, %v1189
        %v1216 = vpack.c.bf16 %v426, %v425
        %v1218 = vsel %vm586, %v1216, 0
        %v1221 = vand.u32 %v434, %v626
        %1223 = vmatprep.subr.bf16.mxu0 0
        %1224 = vmatpush1.bf16.msra.mxu0 %v1221
        %1225 = vmatprep.subr.bf16.mxu0 0
        %1226 = vmatpush1.bf16.msra.mxu0 0
        %1227 = vmatprep.subr.bf16.mxu0 0
        %1228 = vmatpush1.bf16.msra.mxu0 0
        %1229 = vmatprep.subr.bf16.mxu0 0
        %1230 = vmatpush1.bf16.msra.mxu0 0
        %1231 = vmatprep.subr.bf16.mxu0 0
        %1232 = vmatpush1.bf16.msra.mxu0 0
        %1233 = vmatprep.subr.bf16.mxu0 0
        %1234 = vmatpush1.bf16.msra.mxu0 0
        %1235 = vmatprep.subr.bf16.mxu0 0
        %1236 = vmatpush1.bf16.msra.mxu0 0
        %1237 = vmatprep.subr.bf16.mxu0 0
        %1238 = vmatpush1.bf16.msra.mxu0 0
        %1239 = vmatprep.subr.bf16.mxu0 0
        %1240 = vmatpush1.bf16.msra.mxu0 0
        %1241 = vmatprep.subr.bf16.mxu0 0
        %1242 = vmatpush1.bf16.msra.mxu0 0
        %1243 = vmatprep.subr.bf16.mxu0 0
        %1244 = vmatpush1.bf16.msra.mxu0 0
        %1245 = vmatprep.subr.bf16.mxu0 0
        %1246 = vmatpush1.bf16.msra.mxu0 0
        %1247 = vmatprep.subr.bf16.mxu0 0
        %1248 = vmatpush1.bf16.msra.mxu0 0
        %1249 = vmatprep.subr.bf16.mxu0 0
        %1250 = vmatpush1.bf16.msra.mxu0 0
        %1251 = vmatprep.subr.bf16.mxu0 0
        %1252 = vmatpush1.bf16.msra.mxu0 0
        %1253 = vmatprep.subr.bf16.mxu0 0
        %1254 = vmatpush1.bf16.msra.mxu0 0
        %1255 = vmatprep.mubr.bf16.mxu0 0
        %1256 = vmatmul.mubr.bf16.gmra.mrb[0].mxu0 %v763
        %v1257 = vpop.f32.mrb[0].mxu0
        %v1258 = vadd.f32 0.0, %v1257
        %v1259 = vpop.f32.mrb[0].mxu0
        %v1260 = vpop.f32.mrb[0].mxu0
        %v1261 = vadd.f32 0.0, %v1260
        %v1262 = vpop.f32.mrb[0].mxu0
        %1263 = vmatprep.mubr.bf16.mxu0 0
        %1264 = vmatmul.mubr.bf16.gmra.mrb[0].mxu0 %v766
        %v1265 = vpop.f32.mrb[0].mxu0
        %v1266 = vadd.f32 0.0, %v1265
        %v1267 = vpop.f32.mrb[0].mxu0
        %v1268 = vpop.f32.mrb[0].mxu0
        %v1269 = vadd.f32 0.0, %v1268
        %v1270 = vpop.f32.mrb[0].mxu0
        %1271 = vmatprep.mubr.bf16.mxu0 0
        %1272 = vmatmul.mubr.bf16.gmra.mrb[0].mxu0 %v769
        %v1273 = vpop.f32.mrb[0].mxu0
        %v1274 = vadd.f32 0.0, %v1273
        %v1275 = vpop.f32.mrb[0].mxu0
        %v1276 = vpop.f32.mrb[0].mxu0
        %v1277 = vadd.f32 0.0, %v1276
        %v1278 = vpop.f32.mrb[0].mxu0
        %1279 = vmatprep.mubr.bf16.mxu0 0
        %1280 = vmatmul.mubr.bf16.gmra.mrb[0].mxu0 %v772
        %v1281 = vpop.f32.mrb[0].mxu0
        %v1282 = vadd.f32 0.0, %v1281
        %v1283 = vpop.f32.mrb[0].mxu0
        %v1284 = vpop.f32.mrb[0].mxu0
        %v1285 = vadd.f32 0.0, %v1284
        %v1286 = vpop.f32.mrb[0].mxu0
        %1287 = vmatprep.mubr.bf16.mxu0 0
        %1288 = vmatmul.mubr.bf16.gmra.mrb[0].mxu0 %v775
        %v1289 = vpop.f32.mrb[0].mxu0
        %v1290 = vadd.f32 0.0, %v1289
        %v1291 = vpop.f32.mrb[0].mxu0
        %v1292 = vpop.f32.mrb[0].mxu0
        %v1293 = vadd.f32 0.0, %v1292
        %v1294 = vpop.f32.mrb[0].mxu0
        %1295 = vmatprep.mubr.bf16.mxu0 0
        %1296 = vmatmul.mubr.bf16.gmra.mrb[0].mxu0 %v778
        %v1297 = vpop.f32.mrb[0].mxu0
        %v1298 = vadd.f32 0.0, %v1297
        %v1299 = vpop.f32.mrb[0].mxu0
        %v1300 = vpop.f32.mrb[0].mxu0
        %v1301 = vadd.f32 0.0, %v1300
        %v1302 = vpop.f32.mrb[0].mxu0
        %1303 = vmatprep.mubr.bf16.mxu0 0
        %1304 = vmatmul.mubr.bf16.gmra.mrb[0].mxu0 %v781
        %v1305 = vpop.f32.mrb[0].mxu0
        %v1306 = vadd.f32 0.0, %v1305
        %v1307 = vpop.f32.mrb[0].mxu0
        %v1308 = vpop.f32.mrb[0].mxu0
        %v1309 = vadd.f32 0.0, %v1308
        %v1310 = vpop.f32.mrb[0].mxu0
        %1311 = vmatprep.mubr.bf16.mxu0 0
        %1312 = vmatmul.mubr.bf16.gmra.mrb[0].mxu0 %v784
        %v1313 = vpop.f32.mrb[0].mxu0
        %v1314 = vadd.f32 0.0, %v1313
        %v1315 = vpop.f32.mrb[0].mxu0
        %v1316 = vpop.f32.mrb[0].mxu0
        %v1317 = vadd.f32 0.0, %v1316
        %v1318 = vpop.f32.mrb[0].mxu0
        %1319 = vmatprep.mubr.bf16.mxu0 0
        %1320 = vmatmul.mubr.bf16.gmra.mrb[0].mxu0 %v787
        %v1321 = vpop.f32.mrb[0].mxu0
        %v1322 = vadd.f32 0.0, %v1321
        %v1323 = vpop.f32.mrb[0].mxu0
        %v1324 = vpop.f32.mrb[0].mxu0
        %v1325 = vadd.f32 0.0, %v1324
        %v1326 = vpop.f32.mrb[0].mxu0
        %1327 = vmatprep.mubr.bf16.mxu0 0
        %1328 = vmatmul.mubr.bf16.gmra.mrb[0].mxu0 %v790
        %v1329 = vpop.f32.mrb[0].mxu0
        %v1330 = vadd.f32 0.0, %v1329
        %v1331 = vpop.f32.mrb[0].mxu0
        %v1332 = vpop.f32.mrb[0].mxu0
        %v1333 = vadd.f32 0.0, %v1332
        %v1334 = vpop.f32.mrb[0].mxu0
        %1335 = vmatprep.mubr.bf16.mxu0 0
        %1336 = vmatmul.mubr.bf16.gmra.mrb[0].mxu0 %v793
        %v1337 = vpop.f32.mrb[0].mxu0
        %v1338 = vadd.f32 0.0, %v1337
        %v1339 = vpop.f32.mrb[0].mxu0
        %v1340 = vpop.f32.mrb[0].mxu0
        %v1341 = vadd.f32 0.0, %v1340
        %v1342 = vpop.f32.mrb[0].mxu0
        %1343 = vmatprep.mubr.bf16.mxu0 0
        %1344 = vmatmul.mubr.bf16.gmra.mrb[0].mxu0 %v1218
        %v1345 = vpop.f32.mrb[0].mxu0
        %v1346 = vadd.f32 0.0, %v1345
        %v1347 = vpop.f32.mrb[0].mxu0
        %v1348 = vpop.f32.mrb[0].mxu0
        %v1349 = vadd.f32 0.0, %v1348
        %v1350 = vpop.f32.mrb[0].mxu0
        %1351 = vdwg.mxu0
        %v1352 = vadd.f32 %v1192, %v1258
        %v1353 = vadd.f32 %v1193, %v1261
        %v1354 = vadd.f32 %v1194, %v1266
        %v1355 = vadd.f32 %v1195, %v1269
        %v1356 = vadd.f32 %v1196, %v1274
        %v1357 = vadd.f32 %v1197, %v1277
        %v1358 = vadd.f32 %v1198, %v1282
        %v1359 = vadd.f32 %v1199, %v1285
        %v1360 = vadd.f32 %v1200, %v1290
        %v1361 = vadd.f32 %v1201, %v1293
        %v1362 = vadd.f32 %v1202, %v1298
        %v1363 = vadd.f32 %v1203, %v1301
        %v1364 = vadd.f32 %v1204, %v1306
        %v1365 = vadd.f32 %v1205, %v1309
        %v1366 = vadd.f32 %v1206, %v1314
        %v1367 = vadd.f32 %v1207, %v1317
        %v1368 = vadd.f32 %v1208, %v1322
        %v1369 = vadd.f32 %v1209, %v1325
        %v1370 = vadd.f32 %v1210, %v1330
        %v1371 = vadd.f32 %v1211, %v1333
        %v1372 = vadd.f32 %v1212, %v1338
        %v1373 = vadd.f32 %v1213, %v1341
        %v1374 = vadd.f32 %v1214, %v1346
        %v1375 = vadd.f32 %v1215, %v1349
        %v1379 = vrot.slane %v425, 1
        %v1380 = vrot.slane %v426, 1
        %v1381 = vsel %vm489, %v1379, %v1380
        %v1382 = vrot.slane %v427, 1
        %v1383 = vsel %vm489, %v1380, %v1382
        %v1386 = vpack.c.bf16 %v1383, %v1381
        %v1388 = vsel %vm586, %v1386, 0
        %v1391 = vand.u32 %v435, %v626
        %1393 = vmatprep.subr.bf16.mxu0 0
        %1394 = vmatpush1.bf16.msra.mxu0 %v1391
        %1395 = vmatprep.subr.bf16.mxu0 0
        %1396 = vmatpush1.bf16.msra.mxu0 0
        %1397 = vmatprep.subr.bf16.mxu0 0
        %1398 = vmatpush1.bf16.msra.mxu0 0
        %1399 = vmatprep.subr.bf16.mxu0 0
        %1400 = vmatpush1.bf16.msra.mxu0 0
        %1401 = vmatprep.subr.bf16.mxu0 0
        %1402 = vmatpush1.bf16.msra.mxu0 0
        %1403 = vmatprep.subr.bf16.mxu0 0
        %1404 = vmatpush1.bf16.msra.mxu0 0
        %1405 = vmatprep.subr.bf16.mxu0 0
        %1406 = vmatpush1.bf16.msra.mxu0 0
        %1407 = vmatprep.subr.bf16.mxu0 0
        %1408 = vmatpush1.bf16.msra.mxu0 0
        %1409 = vmatprep.subr.bf16.mxu0 0
        %1410 = vmatpush1.bf16.msra.mxu0 0
        %1411 = vmatprep.subr.bf16.mxu0 0
        %1412 = vmatpush1.bf16.msra.mxu0 0
        %1413 = vmatprep.subr.bf16.mxu0 0
        %1414 = vmatpush1.bf16.msra.mxu0 0
        %1415 = vmatprep.subr.bf16.mxu0 0
        %1416 = vmatpush1.bf16.msra.mxu0 0
        %1417 = vmatprep.subr.bf16.mxu0 0
        %1418 = vmatpush1.bf16.msra.mxu0 0
        %1419 = vmatprep.subr.bf16.mxu0 0
        %1420 = vmatpush1.bf16.msra.mxu0 0
        %1421 = vmatprep.subr.bf16.mxu0 0
        %1422 = vmatpush1.bf16.msra.mxu0 0
        %1423 = vmatprep.subr.bf16.mxu0 0
        %1424 = vmatpush1.bf16.msra.mxu0 0
        %1425 = vmatprep.mubr.bf16.mxu0 0
        %1426 = vmatmul.mubr.bf16.gmra.mrb[0].mxu0 %v591
        %v1427 = vpop.f32.mrb[0].mxu0
        %v1428 = vadd.f32 0.0, %v1427
        %v1429 = vpop.f32.mrb[0].mxu0
        %v1430 = vpop.f32.mrb[0].mxu0
        %v1431 = vadd.f32 0.0, %v1430
        %v1432 = vpop.f32.mrb[0].mxu0
        %1433 = vmatprep.mubr.bf16.mxu0 0
        %1434 = vmatmul.mubr.bf16.gmra.mrb[0].mxu0 %v594
        %v1435 = vpop.f32.mrb[0].mxu0
        %v1436 = vadd.f32 0.0, %v1435
        %v1437 = vpop.f32.mrb[0].mxu0
        %v1438 = vpop.f32.mrb[0].mxu0
        %v1439 = vadd.f32 0.0, %v1438
        %v1440 = vpop.f32.mrb[0].mxu0
        %1441 = vmatprep.mubr.bf16.mxu0 0
        %1442 = vmatmul.mubr.bf16.gmra.mrb[0].mxu0 %v597
        %v1443 = vpop.f32.mrb[0].mxu0
        %v1444 = vadd.f32 0.0, %v1443
        %v1445 = vpop.f32.mrb[0].mxu0
        %v1446 = vpop.f32.mrb[0].mxu0
        %v1447 = vadd.f32 0.0, %v1446
        %v1448 = vpop.f32.mrb[0].mxu0
        %1449 = vmatprep.mubr.bf16.mxu0 0
        %1450 = vmatmul.mubr.bf16.gmra.mrb[0].mxu0 %v600
        %v1451 = vpop.f32.mrb[0].mxu0
        %v1452 = vadd.f32 0.0, %v1451
        %v1453 = vpop.f32.mrb[0].mxu0
        %v1454 = vpop.f32.mrb[0].mxu0
        %v1455 = vadd.f32 0.0, %v1454
        %v1456 = vpop.f32.mrb[0].mxu0
        %1457 = vmatprep.mubr.bf16.mxu0 0
        %1458 = vmatmul.mubr.bf16.gmra.mrb[0].mxu0 %v603
        %v1459 = vpop.f32.mrb[0].mxu0
        %v1460 = vadd.f32 0.0, %v1459
        %v1461 = vpop.f32.mrb[0].mxu0
        %v1462 = vpop.f32.mrb[0].mxu0
        %v1463 = vadd.f32 0.0, %v1462
        %v1464 = vpop.f32.mrb[0].mxu0
        %1465 = vmatprep.mubr.bf16.mxu0 0
        %1466 = vmatmul.mubr.bf16.gmra.mrb[0].mxu0 %v606
        %v1467 = vpop.f32.mrb[0].mxu0
        %v1468 = vadd.f32 0.0, %v1467
        %v1469 = vpop.f32.mrb[0].mxu0
        %v1470 = vpop.f32.mrb[0].mxu0
        %v1471 = vadd.f32 0.0, %v1470
        %v1472 = vpop.f32.mrb[0].mxu0
        %1473 = vmatprep.mubr.bf16.mxu0 0
        %1474 = vmatmul.mubr.bf16.gmra.mrb[0].mxu0 %v609
        %v1475 = vpop.f32.mrb[0].mxu0
        %v1476 = vadd.f32 0.0, %v1475
        %v1477 = vpop.f32.mrb[0].mxu0
        %v1478 = vpop.f32.mrb[0].mxu0
        %v1479 = vadd.f32 0.0, %v1478
        %v1480 = vpop.f32.mrb[0].mxu0
        %1481 = vmatprep.mubr.bf16.mxu0 0
        %1482 = vmatmul.mubr.bf16.gmra.mrb[0].mxu0 %v612
        %v1483 = vpop.f32.mrb[0].mxu0
        %v1484 = vadd.f32 0.0, %v1483
        %v1485 = vpop.f32.mrb[0].mxu0
        %v1486 = vpop.f32.mrb[0].mxu0
        %v1487 = vadd.f32 0.0, %v1486
        %v1488 = vpop.f32.mrb[0].mxu0
        %1489 = vmatprep.mubr.bf16.mxu0 0
        %1490 = vmatmul.mubr.bf16.gmra.mrb[0].mxu0 %v615
        %v1491 = vpop.f32.mrb[0].mxu0
        %v1492 = vadd.f32 0.0, %v1491
        %v1493 = vpop.f32.mrb[0].mxu0
        %v1494 = vpop.f32.mrb[0].mxu0
        %v1495 = vadd.f32 0.0, %v1494
        %v1496 = vpop.f32.mrb[0].mxu0
        %1497 = vmatprep.mubr.bf16.mxu0 0
        %1498 = vmatmul.mubr.bf16.gmra.mrb[0].mxu0 %v618
        %v1499 = vpop.f32.mrb[0].mxu0
        %v1500 = vadd.f32 0.0, %v1499
        %v1501 = vpop.f32.mrb[0].mxu0
        %v1502 = vpop.f32.mrb[0].mxu0
        %v1503 = vadd.f32 0.0, %v1502
        %v1504 = vpop.f32.mrb[0].mxu0
        %1505 = vmatprep.mubr.bf16.mxu0 0
        %1506 = vmatmul.mubr.bf16.gmra.mrb[0].mxu0 %v621
        %v1507 = vpop.f32.mrb[0].mxu0
        %v1508 = vadd.f32 0.0, %v1507
        %v1509 = vpop.f32.mrb[0].mxu0
        %v1510 = vpop.f32.mrb[0].mxu0
        %v1511 = vadd.f32 0.0, %v1510
        %v1512 = vpop.f32.mrb[0].mxu0
        %1513 = vmatprep.mubr.bf16.mxu0 0
        %1514 = vmatmul.mubr.bf16.gmra.mrb[0].mxu0 %v1388
        %v1515 = vpop.f32.mrb[0].mxu0
        %v1516 = vadd.f32 0.0, %v1515
        %v1517 = vpop.f32.mrb[0].mxu0
        %v1518 = vpop.f32.mrb[0].mxu0
        %v1519 = vadd.f32 0.0, %v1518
        %v1520 = vpop.f32.mrb[0].mxu0
        %1521 = vdwg.mxu0
        %v1522 = vadd.f32 %v1352, %v1428
        %v1523 = vadd.f32 %v1353, %v1431
        %v1524 = vadd.f32 %v1354, %v1436
        %v1525 = vadd.f32 %v1355, %v1439
        %v1526 = vadd.f32 %v1356, %v1444
        %v1527 = vadd.f32 %v1357, %v1447
        %v1528 = vadd.f32 %v1358, %v1452
        %v1529 = vadd.f32 %v1359, %v1455
        %v1530 = vadd.f32 %v1360, %v1460
        %v1531 = vadd.f32 %v1361, %v1463
        %v1532 = vadd.f32 %v1362, %v1468
        %v1533 = vadd.f32 %v1363, %v1471
        %v1534 = vadd.f32 %v1364, %v1476
        %v1535 = vadd.f32 %v1365, %v1479
        %v1536 = vadd.f32 %v1366, %v1484
        %v1537 = vadd.f32 %v1367, %v1487
        %v1538 = vadd.f32 %v1368, %v1492
        %v1539 = vadd.f32 %v1369, %v1495
        %v1540 = vadd.f32 %v1370, %v1500
        %v1541 = vadd.f32 %v1371, %v1503
        %v1542 = vadd.f32 %v1372, %v1508
        %v1543 = vadd.f32 %v1373, %v1511
        %v1544 = vadd.f32 %v1374, %v1516
        %v1545 = vadd.f32 %v1375, %v1519
        %v1546 = vrot.slane %v425, 2
        %v1547 = vrot.slane %v426, 2
        %v1548 = vsel %vm927, %v1546, %v1547
        %v1549 = vrot.slane %v427, 2
        %v1550 = vsel %vm927, %v1547, %v1549
        %v1553 = vpack.c.bf16 %v1550, %v1548
        %v1555 = vsel %vm586, %v1553, 0
        %v1558 = vand.u32 %v436, %v626
        %1560 = vmatprep.subr.bf16.mxu0 0
        %1561 = vmatpush1.bf16.msra.mxu0 %v1558
        %1562 = vmatprep.subr.bf16.mxu0 0
        %1563 = vmatpush1.bf16.msra.mxu0 0
        %1564 = vmatprep.subr.bf16.mxu0 0
        %1565 = vmatpush1.bf16.msra.mxu0 0
        %1566 = vmatprep.subr.bf16.mxu0 0
        %1567 = vmatpush1.bf16.msra.mxu0 0
        %1568 = vmatprep.subr.bf16.mxu0 0
        %1569 = vmatpush1.bf16.msra.mxu0 0
        %1570 = vmatprep.subr.bf16.mxu0 0
        %1571 = vmatpush1.bf16.msra.mxu0 0
        %1572 = vmatprep.subr.bf16.mxu0 0
        %1573 = vmatpush1.bf16.msra.mxu0 0
        %1574 = vmatprep.subr.bf16.mxu0 0
        %1575 = vmatpush1.bf16.msra.mxu0 0
        %1576 = vmatprep.subr.bf16.mxu0 0
        %1577 = vmatpush1.bf16.msra.mxu0 0
        %1578 = vmatprep.subr.bf16.mxu0 0
        %1579 = vmatpush1.bf16.msra.mxu0 0
        %1580 = vmatprep.subr.bf16.mxu0 0
        %1581 = vmatpush1.bf16.msra.mxu0 0
        %1582 = vmatprep.subr.bf16.mxu0 0
        %1583 = vmatpush1.bf16.msra.mxu0 0
        %1584 = vmatprep.subr.bf16.mxu0 0
        %1585 = vmatpush1.bf16.msra.mxu0 0
        %1586 = vmatprep.subr.bf16.mxu0 0
        %1587 = vmatpush1.bf16.msra.mxu0 0
        %1588 = vmatprep.subr.bf16.mxu0 0
        %1589 = vmatpush1.bf16.msra.mxu0 0
        %1590 = vmatprep.subr.bf16.mxu0 0
        %1591 = vmatpush1.bf16.msra.mxu0 0
        %1592 = vmatprep.mubr.bf16.mxu0 0
        %1593 = vmatmul.mubr.bf16.gmra.mrb[0].mxu0 %v1028
        %v1594 = vpop.f32.mrb[0].mxu0
        %v1595 = vadd.f32 0.0, %v1594
        %v1596 = vpop.f32.mrb[0].mxu0
        %v1597 = vpop.f32.mrb[0].mxu0
        %v1598 = vadd.f32 0.0, %v1597
        %v1599 = vpop.f32.mrb[0].mxu0
        %1600 = vmatprep.mubr.bf16.mxu0 0
        %1601 = vmatmul.mubr.bf16.gmra.mrb[0].mxu0 %v1031
        %v1602 = vpop.f32.mrb[0].mxu0
        %v1603 = vadd.f32 0.0, %v1602
        %v1604 = vpop.f32.mrb[0].mxu0
        %v1605 = vpop.f32.mrb[0].mxu0
        %v1606 = vadd.f32 0.0, %v1605
        %v1607 = vpop.f32.mrb[0].mxu0
        %1608 = vmatprep.mubr.bf16.mxu0 0
        %1609 = vmatmul.mubr.bf16.gmra.mrb[0].mxu0 %v1034
        %v1610 = vpop.f32.mrb[0].mxu0
        %v1611 = vadd.f32 0.0, %v1610
        %v1612 = vpop.f32.mrb[0].mxu0
        %v1613 = vpop.f32.mrb[0].mxu0
        %v1614 = vadd.f32 0.0, %v1613
        %v1615 = vpop.f32.mrb[0].mxu0
        %1616 = vmatprep.mubr.bf16.mxu0 0
        %1617 = vmatmul.mubr.bf16.gmra.mrb[0].mxu0 %v1037
        %v1618 = vpop.f32.mrb[0].mxu0
        %v1619 = vadd.f32 0.0, %v1618
        %v1620 = vpop.f32.mrb[0].mxu0
        %v1621 = vpop.f32.mrb[0].mxu0
        %v1622 = vadd.f32 0.0, %v1621
        %v1623 = vpop.f32.mrb[0].mxu0
        %1624 = vmatprep.mubr.bf16.mxu0 0
        %1625 = vmatmul.mubr.bf16.gmra.mrb[0].mxu0 %v1040
        %v1626 = vpop.f32.mrb[0].mxu0
        %v1627 = vadd.f32 0.0, %v1626
        %v1628 = vpop.f32.mrb[0].mxu0
        %v1629 = vpop.f32.mrb[0].mxu0
        %v1630 = vadd.f32 0.0, %v1629
        %v1631 = vpop.f32.mrb[0].mxu0
        %1632 = vmatprep.mubr.bf16.mxu0 0
        %1633 = vmatmul.mubr.bf16.gmra.mrb[0].mxu0 %v1043
        %v1634 = vpop.f32.mrb[0].mxu0
        %v1635 = vadd.f32 0.0, %v1634
        %v1636 = vpop.f32.mrb[0].mxu0
        %v1637 = vpop.f32.mrb[0].mxu0
        %v1638 = vadd.f32 0.0, %v1637
        %v1639 = vpop.f32.mrb[0].mxu0
        %1640 = vmatprep.mubr.bf16.mxu0 0
        %1641 = vmatmul.mubr.bf16.gmra.mrb[0].mxu0 %v1046
        %v1642 = vpop.f32.mrb[0].mxu0
        %v1643 = vadd.f32 0.0, %v1642
        %v1644 = vpop.f32.mrb[0].mxu0
        %v1645 = vpop.f32.mrb[0].mxu0
        %v1646 = vadd.f32 0.0, %v1645
        %v1647 = vpop.f32.mrb[0].mxu0
        %1648 = vmatprep.mubr.bf16.mxu0 0
        %1649 = vmatmul.mubr.bf16.gmra.mrb[0].mxu0 %v1049
        %v1650 = vpop.f32.mrb[0].mxu0
        %v1651 = vadd.f32 0.0, %v1650
        %v1652 = vpop.f32.mrb[0].mxu0
        %v1653 = vpop.f32.mrb[0].mxu0
        %v1654 = vadd.f32 0.0, %v1653
        %v1655 = vpop.f32.mrb[0].mxu0
        %1656 = vmatprep.mubr.bf16.mxu0 0
        %1657 = vmatmul.mubr.bf16.gmra.mrb[0].mxu0 %v1052
        %v1658 = vpop.f32.mrb[0].mxu0
        %v1659 = vadd.f32 0.0, %v1658
        %v1660 = vpop.f32.mrb[0].mxu0
        %v1661 = vpop.f32.mrb[0].mxu0
        %v1662 = vadd.f32 0.0, %v1661
        %v1663 = vpop.f32.mrb[0].mxu0
        %1664 = vmatprep.mubr.bf16.mxu0 0
        %1665 = vmatmul.mubr.bf16.gmra.mrb[0].mxu0 %v1055
        %v1666 = vpop.f32.mrb[0].mxu0
        %v1667 = vadd.f32 0.0, %v1666
        %v1668 = vpop.f32.mrb[0].mxu0
        %v1669 = vpop.f32.mrb[0].mxu0
        %v1670 = vadd.f32 0.0, %v1669
        %v1671 = vpop.f32.mrb[0].mxu0
        %1672 = vmatprep.mubr.bf16.mxu0 0
        %1673 = vmatmul.mubr.bf16.gmra.mrb[0].mxu0 %v1058
        %v1674 = vpop.f32.mrb[0].mxu0
        %v1675 = vadd.f32 0.0, %v1674
        %v1676 = vpop.f32.mrb[0].mxu0
        %v1677 = vpop.f32.mrb[0].mxu0
        %v1678 = vadd.f32 0.0, %v1677
        %v1679 = vpop.f32.mrb[0].mxu0
        %1680 = vmatprep.mubr.bf16.mxu0 0
        %1681 = vmatmul.mubr.bf16.gmra.mrb[0].mxu0 %v1555
        %v1682 = vpop.f32.mrb[0].mxu0
        %v1683 = vadd.f32 0.0, %v1682
        %v1684 = vpop.f32.mrb[0].mxu0
        %v1685 = vpop.f32.mrb[0].mxu0
        %v1686 = vadd.f32 0.0, %v1685
        %v1687 = vpop.f32.mrb[0].mxu0
        %1688 = vdwg.mxu0
        %v1689 = vadd.f32 %v1522, %v1595
        %v1690 = vadd.f32 %v1523, %v1598
        %v1691 = vadd.f32 %v1524, %v1603
        %v1692 = vadd.f32 %v1525, %v1606
        %v1693 = vadd.f32 %v1526, %v1611
        %v1694 = vadd.f32 %v1527, %v1614
        %v1695 = vadd.f32 %v1528, %v1619
        %v1696 = vadd.f32 %v1529, %v1622
        %v1697 = vadd.f32 %v1530, %v1627
        %v1698 = vadd.f32 %v1531, %v1630
        %v1699 = vadd.f32 %v1532, %v1635
        %v1700 = vadd.f32 %v1533, %v1638
        %v1701 = vadd.f32 %v1534, %v1643
        %v1702 = vadd.f32 %v1535, %v1646
        %v1703 = vadd.f32 %v1536, %v1651
        %v1704 = vadd.f32 %v1537, %v1654
        %v1705 = vadd.f32 %v1538, %v1659
        %v1706 = vadd.f32 %v1539, %v1662
        %v1707 = vadd.f32 %v1540, %v1667
        %v1708 = vadd.f32 %v1541, %v1670
        %v1709 = vadd.f32 %v1542, %v1675
        %v1710 = vadd.f32 %v1543, %v1678
        %v1711 = vadd.f32 %v1544, %v1683
        %v1712 = vadd.f32 %v1545, %v1686
        %v1713 = vpack.c.bf16 %v429, %v428
        %v1715 = vsel %vm586, %v1713, 0
        %v1718 = vand.u32 %v437, %v626
        %1720 = vmatprep.subr.bf16.mxu0 0
        %1721 = vmatpush1.bf16.msra.mxu0 %v1718
        %1722 = vmatprep.subr.bf16.mxu0 0
        %1723 = vmatpush1.bf16.msra.mxu0 0
        %1724 = vmatprep.subr.bf16.mxu0 0
        %1725 = vmatpush1.bf16.msra.mxu0 0
        %1726 = vmatprep.subr.bf16.mxu0 0
        %1727 = vmatpush1.bf16.msra.mxu0 0
        %1728 = vmatprep.subr.bf16.mxu0 0
        %1729 = vmatpush1.bf16.msra.mxu0 0
        %1730 = vmatprep.subr.bf16.mxu0 0
        %1731 = vmatpush1.bf16.msra.mxu0 0
        %1732 = vmatprep.subr.bf16.mxu0 0
        %1733 = vmatpush1.bf16.msra.mxu0 0
        %1734 = vmatprep.subr.bf16.mxu0 0
        %1735 = vmatpush1.bf16.msra.mxu0 0
        %1736 = vmatprep.subr.bf16.mxu0 0
        %1737 = vmatpush1.bf16.msra.mxu0 0
        %1738 = vmatprep.subr.bf16.mxu0 0
        %1739 = vmatpush1.bf16.msra.mxu0 0
        %1740 = vmatprep.subr.bf16.mxu0 0
        %1741 = vmatpush1.bf16.msra.mxu0 0
        %1742 = vmatprep.subr.bf16.mxu0 0
        %1743 = vmatpush1.bf16.msra.mxu0 0
        %1744 = vmatprep.subr.bf16.mxu0 0
        %1745 = vmatpush1.bf16.msra.mxu0 0
        %1746 = vmatprep.subr.bf16.mxu0 0
        %1747 = vmatpush1.bf16.msra.mxu0 0
        %1748 = vmatprep.subr.bf16.mxu0 0
        %1749 = vmatpush1.bf16.msra.mxu0 0
        %1750 = vmatprep.subr.bf16.mxu0 0
        %1751 = vmatpush1.bf16.msra.mxu0 0
        %1752 = vmatprep.mubr.bf16.mxu0 0
        %1753 = vmatmul.mubr.bf16.gmra.mrb[0].mxu0 %v766
        %v1754 = vpop.f32.mrb[0].mxu0
        %v1755 = vadd.f32 0.0, %v1754
        %v1756 = vpop.f32.mrb[0].mxu0
        %v1757 = vpop.f32.mrb[0].mxu0
        %v1758 = vadd.f32 0.0, %v1757
        %v1759 = vpop.f32.mrb[0].mxu0
        %1760 = vmatprep.mubr.bf16.mxu0 0
        %1761 = vmatmul.mubr.bf16.gmra.mrb[0].mxu0 %v769
        %v1762 = vpop.f32.mrb[0].mxu0
        %v1763 = vadd.f32 0.0, %v1762
        %v1764 = vpop.f32.mrb[0].mxu0
        %v1765 = vpop.f32.mrb[0].mxu0
        %v1766 = vadd.f32 0.0, %v1765
        %v1767 = vpop.f32.mrb[0].mxu0
        %1768 = vmatprep.mubr.bf16.mxu0 0
        %1769 = vmatmul.mubr.bf16.gmra.mrb[0].mxu0 %v772
        %v1770 = vpop.f32.mrb[0].mxu0
        %v1771 = vadd.f32 0.0, %v1770
        %v1772 = vpop.f32.mrb[0].mxu0
        %v1773 = vpop.f32.mrb[0].mxu0
        %v1774 = vadd.f32 0.0, %v1773
        %v1775 = vpop.f32.mrb[0].mxu0
        %1776 = vmatprep.mubr.bf16.mxu0 0
        %1777 = vmatmul.mubr.bf16.gmra.mrb[0].mxu0 %v775
        %v1778 = vpop.f32.mrb[0].mxu0
        %v1779 = vadd.f32 0.0, %v1778
        %v1780 = vpop.f32.mrb[0].mxu0
        %v1781 = vpop.f32.mrb[0].mxu0
        %v1782 = vadd.f32 0.0, %v1781
        %v1783 = vpop.f32.mrb[0].mxu0
        %1784 = vmatprep.mubr.bf16.mxu0 0
        %1785 = vmatmul.mubr.bf16.gmra.mrb[0].mxu0 %v778
        %v1786 = vpop.f32.mrb[0].mxu0
        %v1787 = vadd.f32 0.0, %v1786
        %v1788 = vpop.f32.mrb[0].mxu0
        %v1789 = vpop.f32.mrb[0].mxu0
        %v1790 = vadd.f32 0.0, %v1789
        %v1791 = vpop.f32.mrb[0].mxu0
        %1792 = vmatprep.mubr.bf16.mxu0 0
        %1793 = vmatmul.mubr.bf16.gmra.mrb[0].mxu0 %v781
        %v1794 = vpop.f32.mrb[0].mxu0
        %v1795 = vadd.f32 0.0, %v1794
        %v1796 = vpop.f32.mrb[0].mxu0
        %v1797 = vpop.f32.mrb[0].mxu0
        %v1798 = vadd.f32 0.0, %v1797
        %v1799 = vpop.f32.mrb[0].mxu0
        %1800 = vmatprep.mubr.bf16.mxu0 0
        %1801 = vmatmul.mubr.bf16.gmra.mrb[0].mxu0 %v784
        %v1802 = vpop.f32.mrb[0].mxu0
        %v1803 = vadd.f32 0.0, %v1802
        %v1804 = vpop.f32.mrb[0].mxu0
        %v1805 = vpop.f32.mrb[0].mxu0
        %v1806 = vadd.f32 0.0, %v1805
        %v1807 = vpop.f32.mrb[0].mxu0
        %1808 = vmatprep.mubr.bf16.mxu0 0
        %1809 = vmatmul.mubr.bf16.gmra.mrb[0].mxu0 %v787
        %v1810 = vpop.f32.mrb[0].mxu0
        %v1811 = vadd.f32 0.0, %v1810
        %v1812 = vpop.f32.mrb[0].mxu0
        %v1813 = vpop.f32.mrb[0].mxu0
        %v1814 = vadd.f32 0.0, %v1813
        %v1815 = vpop.f32.mrb[0].mxu0
        %1816 = vmatprep.mubr.bf16.mxu0 0
        %1817 = vmatmul.mubr.bf16.gmra.mrb[0].mxu0 %v790
        %v1818 = vpop.f32.mrb[0].mxu0
        %v1819 = vadd.f32 0.0, %v1818
        %v1820 = vpop.f32.mrb[0].mxu0
        %v1821 = vpop.f32.mrb[0].mxu0
        %v1822 = vadd.f32 0.0, %v1821
        %v1823 = vpop.f32.mrb[0].mxu0
        %1824 = vmatprep.mubr.bf16.mxu0 0
        %1825 = vmatmul.mubr.bf16.gmra.mrb[0].mxu0 %v793
        %v1826 = vpop.f32.mrb[0].mxu0
        %v1827 = vadd.f32 0.0, %v1826
        %v1828 = vpop.f32.mrb[0].mxu0
        %v1829 = vpop.f32.mrb[0].mxu0
        %v1830 = vadd.f32 0.0, %v1829
        %v1831 = vpop.f32.mrb[0].mxu0
        %1832 = vmatprep.mubr.bf16.mxu0 0
        %1833 = vmatmul.mubr.bf16.gmra.mrb[0].mxu0 %v1218
        %v1834 = vpop.f32.mrb[0].mxu0
        %v1835 = vadd.f32 0.0, %v1834
        %v1836 = vpop.f32.mrb[0].mxu0
        %v1837 = vpop.f32.mrb[0].mxu0
        %v1838 = vadd.f32 0.0, %v1837
        %v1839 = vpop.f32.mrb[0].mxu0
        %1840 = vmatprep.mubr.bf16.mxu0 0
        %1841 = vmatmul.mubr.bf16.gmra.mrb[0].mxu0 %v1715
        %v1842 = vpop.f32.mrb[0].mxu0
        %v1843 = vadd.f32 0.0, %v1842
        %v1844 = vpop.f32.mrb[0].mxu0
        %v1845 = vpop.f32.mrb[0].mxu0
        %v1846 = vadd.f32 0.0, %v1845
        %v1847 = vpop.f32.mrb[0].mxu0
        %1848 = vdwg.mxu0
        %v1849 = vadd.f32 %v1689, %v1755
        %v1850 = vadd.f32 %v1690, %v1758
        %v1851 = vadd.f32 %v1691, %v1763
        %v1852 = vadd.f32 %v1692, %v1766
        %v1853 = vadd.f32 %v1693, %v1771
        %v1854 = vadd.f32 %v1694, %v1774
        %v1855 = vadd.f32 %v1695, %v1779
        %v1856 = vadd.f32 %v1696, %v1782
        %v1857 = vadd.f32 %v1697, %v1787
        %v1858 = vadd.f32 %v1698, %v1790
        %v1859 = vadd.f32 %v1699, %v1795
        %v1860 = vadd.f32 %v1700, %v1798
        %v1861 = vadd.f32 %v1701, %v1803
        %v1862 = vadd.f32 %v1702, %v1806
        %v1863 = vadd.f32 %v1703, %v1811
        %v1864 = vadd.f32 %v1704, %v1814
        %v1865 = vadd.f32 %v1705, %v1819
        %v1866 = vadd.f32 %v1706, %v1822
        %v1867 = vadd.f32 %v1707, %v1827
        %v1868 = vadd.f32 %v1708, %v1830
        %v1869 = vadd.f32 %v1709, %v1835
        %v1870 = vadd.f32 %v1710, %v1838
        %v1871 = vadd.f32 %v1711, %v1843
        %v1872 = vadd.f32 %v1712, %v1846
        %v1876 = vrot.slane %v428, 1
        %v1877 = vrot.slane %v429, 1
        %v1878 = vsel %vm489, %v1876, %v1877
        %v1879 = vrot.slane %v430, 1
        %v1880 = vsel %vm489, %v1877, %v1879
        %v1883 = vpack.c.bf16 %v1880, %v1878
        %v1885 = vsel %vm586, %v1883, 0
        %v1888 = vand.u32 %v438, %v626
        %1890 = vmatprep.subr.bf16.mxu0 0
        %1891 = vmatpush1.bf16.msra.mxu0 %v1888
        %1892 = vmatprep.subr.bf16.mxu0 0
        %1893 = vmatpush1.bf16.msra.mxu0 0
        %1894 = vmatprep.subr.bf16.mxu0 0
        %1895 = vmatpush1.bf16.msra.mxu0 0
        %1896 = vmatprep.subr.bf16.mxu0 0
        %1897 = vmatpush1.bf16.msra.mxu0 0
        %1898 = vmatprep.subr.bf16.mxu0 0
        %1899 = vmatpush1.bf16.msra.mxu0 0
        %1900 = vmatprep.subr.bf16.mxu0 0
        %1901 = vmatpush1.bf16.msra.mxu0 0
        %1902 = vmatprep.subr.bf16.mxu0 0
        %1903 = vmatpush1.bf16.msra.mxu0 0
        %1904 = vmatprep.subr.bf16.mxu0 0
        %1905 = vmatpush1.bf16.msra.mxu0 0
        %1906 = vmatprep.subr.bf16.mxu0 0
        %1907 = vmatpush1.bf16.msra.mxu0 0
        %1908 = vmatprep.subr.bf16.mxu0 0
        %1909 = vmatpush1.bf16.msra.mxu0 0
        %1910 = vmatprep.subr.bf16.mxu0 0
        %1911 = vmatpush1.bf16.msra.mxu0 0
        %1912 = vmatprep.subr.bf16.mxu0 0
        %1913 = vmatpush1.bf16.msra.mxu0 0
        %1914 = vmatprep.subr.bf16.mxu0 0
        %1915 = vmatpush1.bf16.msra.mxu0 0
        %1916 = vmatprep.subr.bf16.mxu0 0
        %1917 = vmatpush1.bf16.msra.mxu0 0
        %1918 = vmatprep.subr.bf16.mxu0 0
        %1919 = vmatpush1.bf16.msra.mxu0 0
        %1920 = vmatprep.subr.bf16.mxu0 0
        %1921 = vmatpush1.bf16.msra.mxu0 0
        %1922 = vmatprep.mubr.bf16.mxu0 0
        %1923 = vmatmul.mubr.bf16.gmra.mrb[0].mxu0 %v594
        %v1924 = vpop.f32.mrb[0].mxu0
        %v1925 = vadd.f32 0.0, %v1924
        %v1926 = vpop.f32.mrb[0].mxu0
        %v1927 = vpop.f32.mrb[0].mxu0
        %v1928 = vadd.f32 0.0, %v1927
        %v1929 = vpop.f32.mrb[0].mxu0
        %1930 = vmatprep.mubr.bf16.mxu0 0
        %1931 = vmatmul.mubr.bf16.gmra.mrb[0].mxu0 %v597
        %v1932 = vpop.f32.mrb[0].mxu0
        %v1933 = vadd.f32 0.0, %v1932
        %v1934 = vpop.f32.mrb[0].mxu0
        %v1935 = vpop.f32.mrb[0].mxu0
        %v1936 = vadd.f32 0.0, %v1935
        %v1937 = vpop.f32.mrb[0].mxu0
        %1938 = vmatprep.mubr.bf16.mxu0 0
        %1939 = vmatmul.mubr.bf16.gmra.mrb[0].mxu0 %v600
        %v1940 = vpop.f32.mrb[0].mxu0
        %v1941 = vadd.f32 0.0, %v1940
        %v1942 = vpop.f32.mrb[0].mxu0
        %v1943 = vpop.f32.mrb[0].mxu0
        %v1944 = vadd.f32 0.0, %v1943
        %v1945 = vpop.f32.mrb[0].mxu0
        %1946 = vmatprep.mubr.bf16.mxu0 0
        %1947 = vmatmul.mubr.bf16.gmra.mrb[0].mxu0 %v603
        %v1948 = vpop.f32.mrb[0].mxu0
        %v1949 = vadd.f32 0.0, %v1948
        %v1950 = vpop.f32.mrb[0].mxu0
        %v1951 = vpop.f32.mrb[0].mxu0
        %v1952 = vadd.f32 0.0, %v1951
        %v1953 = vpop.f32.mrb[0].mxu0
        %1954 = vmatprep.mubr.bf16.mxu0 0
        %1955 = vmatmul.mubr.bf16.gmra.mrb[0].mxu0 %v606
        %v1956 = vpop.f32.mrb[0].mxu0
        %v1957 = vadd.f32 0.0, %v1956
        %v1958 = vpop.f32.mrb[0].mxu0
        %v1959 = vpop.f32.mrb[0].mxu0
        %v1960 = vadd.f32 0.0, %v1959
        %v1961 = vpop.f32.mrb[0].mxu0
        %1962 = vmatprep.mubr.bf16.mxu0 0
        %1963 = vmatmul.mubr.bf16.gmra.mrb[0].mxu0 %v609
        %v1964 = vpop.f32.mrb[0].mxu0
        %v1965 = vadd.f32 0.0, %v1964
        %v1966 = vpop.f32.mrb[0].mxu0
        %v1967 = vpop.f32.mrb[0].mxu0
        %v1968 = vadd.f32 0.0, %v1967
        %v1969 = vpop.f32.mrb[0].mxu0
        %1970 = vmatprep.mubr.bf16.mxu0 0
        %1971 = vmatmul.mubr.bf16.gmra.mrb[0].mxu0 %v612
        %v1972 = vpop.f32.mrb[0].mxu0
        %v1973 = vadd.f32 0.0, %v1972
        %v1974 = vpop.f32.mrb[0].mxu0
        %v1975 = vpop.f32.mrb[0].mxu0
        %v1976 = vadd.f32 0.0, %v1975
        %v1977 = vpop.f32.mrb[0].mxu0
        %1978 = vmatprep.mubr.bf16.mxu0 0
        %1979 = vmatmul.mubr.bf16.gmra.mrb[0].mxu0 %v615
        %v1980 = vpop.f32.mrb[0].mxu0
        %v1981 = vadd.f32 0.0, %v1980
        %v1982 = vpop.f32.mrb[0].mxu0
        %v1983 = vpop.f32.mrb[0].mxu0
        %v1984 = vadd.f32 0.0, %v1983
        %v1985 = vpop.f32.mrb[0].mxu0
        %1986 = vmatprep.mubr.bf16.mxu0 0
        %1987 = vmatmul.mubr.bf16.gmra.mrb[0].mxu0 %v618
        %v1988 = vpop.f32.mrb[0].mxu0
        %v1989 = vadd.f32 0.0, %v1988
        %v1990 = vpop.f32.mrb[0].mxu0
        %v1991 = vpop.f32.mrb[0].mxu0
        %v1992 = vadd.f32 0.0, %v1991
        %v1993 = vpop.f32.mrb[0].mxu0
        %1994 = vmatprep.mubr.bf16.mxu0 0
        %1995 = vmatmul.mubr.bf16.gmra.mrb[0].mxu0 %v621
        %v1996 = vpop.f32.mrb[0].mxu0
        %v1997 = vadd.f32 0.0, %v1996
        %v1998 = vpop.f32.mrb[0].mxu0
        %v1999 = vpop.f32.mrb[0].mxu0
        %v2000 = vadd.f32 0.0, %v1999
        %v2001 = vpop.f32.mrb[0].mxu0
        %2002 = vmatprep.mubr.bf16.mxu0 0
        %2003 = vmatmul.mubr.bf16.gmra.mrb[0].mxu0 %v1388
        %v2004 = vpop.f32.mrb[0].mxu0
        %v2005 = vadd.f32 0.0, %v2004
        %v2006 = vpop.f32.mrb[0].mxu0
        %v2007 = vpop.f32.mrb[0].mxu0
        %v2008 = vadd.f32 0.0, %v2007
        %v2009 = vpop.f32.mrb[0].mxu0
        %2010 = vmatprep.mubr.bf16.mxu0 0
        %2011 = vmatmul.mubr.bf16.gmra.mrb[0].mxu0 %v1885
        %v2012 = vpop.f32.mrb[0].mxu0
        %v2013 = vadd.f32 0.0, %v2012
        %v2014 = vpop.f32.mrb[0].mxu0
        %v2015 = vpop.f32.mrb[0].mxu0
        %v2016 = vadd.f32 0.0, %v2015
        %v2017 = vpop.f32.mrb[0].mxu0
        %2018 = vdwg.mxu0
        %v2019 = vadd.f32 %v1849, %v1925
        %v2020 = vadd.f32 %v1850, %v1928
        %v2021 = vadd.f32 %v1851, %v1933
        %v2022 = vadd.f32 %v1852, %v1936
        %v2023 = vadd.f32 %v1853, %v1941
        %v2024 = vadd.f32 %v1854, %v1944
        %v2025 = vadd.f32 %v1855, %v1949
        %v2026 = vadd.f32 %v1856, %v1952
        %v2027 = vadd.f32 %v1857, %v1957
        %v2028 = vadd.f32 %v1858, %v1960
        %v2029 = vadd.f32 %v1859, %v1965
        %v2030 = vadd.f32 %v1860, %v1968
        %v2031 = vadd.f32 %v1861, %v1973
        %v2032 = vadd.f32 %v1862, %v1976
        %v2033 = vadd.f32 %v1863, %v1981
        %v2034 = vadd.f32 %v1864, %v1984
        %v2035 = vadd.f32 %v1865, %v1989
        %v2036 = vadd.f32 %v1866, %v1992
        %v2037 = vadd.f32 %v1867, %v1997
        %v2038 = vadd.f32 %v1868, %v2000
        %v2039 = vadd.f32 %v1869, %v2005
        %v2040 = vadd.f32 %v1870, %v2008
        %v2041 = vadd.f32 %v1871, %v2013
        %v2042 = vadd.f32 %v1872, %v2016
        %v2043 = vrot.slane %v428, 2
        %v2044 = vrot.slane %v429, 2
        %v2045 = vsel %vm927, %v2043, %v2044
        %v2046 = vrot.slane %v430, 2
        %v2047 = vsel %vm927, %v2044, %v2046
        %v2050 = vpack.c.bf16 %v2047, %v2045
        %v2052 = vsel %vm586, %v2050, 0
        %v2055 = vand.u32 %v439, %v626
        %2057 = vmatprep.subr.bf16.mxu0 0
        %2058 = vmatpush1.bf16.msra.mxu0 %v2055
        %2059 = vmatprep.subr.bf16.mxu0 0
        %2060 = vmatpush1.bf16.msra.mxu0 0
        %2061 = vmatprep.subr.bf16.mxu0 0
        %2062 = vmatpush1.bf16.msra.mxu0 0
        %2063 = vmatprep.subr.bf16.mxu0 0
        %2064 = vmatpush1.bf16.msra.mxu0 0
        %2065 = vmatprep.subr.bf16.mxu0 0
        %2066 = vmatpush1.bf16.msra.mxu0 0
        %2067 = vmatprep.subr.bf16.mxu0 0
        %2068 = vmatpush1.bf16.msra.mxu0 0
        %2069 = vmatprep.subr.bf16.mxu0 0
        %2070 = vmatpush1.bf16.msra.mxu0 0
        %2071 = vmatprep.subr.bf16.mxu0 0
        %2072 = vmatpush1.bf16.msra.mxu0 0
        %2073 = vmatprep.subr.bf16.mxu0 0
        %2074 = vmatpush1.bf16.msra.mxu0 0
        %2075 = vmatprep.subr.bf16.mxu0 0
        %2076 = vmatpush1.bf16.msra.mxu0 0
        %2077 = vmatprep.subr.bf16.mxu0 0
        %2078 = vmatpush1.bf16.msra.mxu0 0
        %2079 = vmatprep.subr.bf16.mxu0 0
        %2080 = vmatpush1.bf16.msra.mxu0 0
        %2081 = vmatprep.subr.bf16.mxu0 0
        %2082 = vmatpush1.bf16.msra.mxu0 0
        %2083 = vmatprep.subr.bf16.mxu0 0
        %2084 = vmatpush1.bf16.msra.mxu0 0
        %2085 = vmatprep.subr.bf16.mxu0 0
        %2086 = vmatpush1.bf16.msra.mxu0 0
        %2087 = vmatprep.subr.bf16.mxu0 0
        %2088 = vmatpush1.bf16.msra.mxu0 0
        %2089 = vmatprep.mubr.bf16.mxu0 0
        %2090 = vmatmul.mubr.bf16.gmra.mrb[0].mxu0 %v1031
        %v2091 = vpop.f32.mrb[0].mxu0
        %v2092 = vadd.f32 0.0, %v2091
        %v2093 = vpop.f32.mrb[0].mxu0
        %v2094 = vpop.f32.mrb[0].mxu0
        %v2095 = vadd.f32 0.0, %v2094
        %v2096 = vpop.f32.mrb[0].mxu0
        %2097 = vmatprep.mubr.bf16.mxu0 0
        %2098 = vmatmul.mubr.bf16.gmra.mrb[0].mxu0 %v1034
        %v2099 = vpop.f32.mrb[0].mxu0
        %v2100 = vadd.f32 0.0, %v2099
        %v2101 = vpop.f32.mrb[0].mxu0
        %v2102 = vpop.f32.mrb[0].mxu0
        %v2103 = vadd.f32 0.0, %v2102
        %v2104 = vpop.f32.mrb[0].mxu0
        %2105 = vmatprep.mubr.bf16.mxu0 0
        %2106 = vmatmul.mubr.bf16.gmra.mrb[0].mxu0 %v1037
        %v2107 = vpop.f32.mrb[0].mxu0
        %v2108 = vadd.f32 0.0, %v2107
        %v2109 = vpop.f32.mrb[0].mxu0
        %v2110 = vpop.f32.mrb[0].mxu0
        %v2111 = vadd.f32 0.0, %v2110
        %v2112 = vpop.f32.mrb[0].mxu0
        %2113 = vmatprep.mubr.bf16.mxu0 0
        %2114 = vmatmul.mubr.bf16.gmra.mrb[0].mxu0 %v1040
        %v2115 = vpop.f32.mrb[0].mxu0
        %v2116 = vadd.f32 0.0, %v2115
        %v2117 = vpop.f32.mrb[0].mxu0
        %v2118 = vpop.f32.mrb[0].mxu0
        %v2119 = vadd.f32 0.0, %v2118
        %v2120 = vpop.f32.mrb[0].mxu0
        %2121 = vmatprep.mubr.bf16.mxu0 0
        %2122 = vmatmul.mubr.bf16.gmra.mrb[0].mxu0 %v1043
        %v2123 = vpop.f32.mrb[0].mxu0
        %v2124 = vadd.f32 0.0, %v2123
        %v2125 = vpop.f32.mrb[0].mxu0
        %v2126 = vpop.f32.mrb[0].mxu0
        %v2127 = vadd.f32 0.0, %v2126
        %v2128 = vpop.f32.mrb[0].mxu0
        %2129 = vmatprep.mubr.bf16.mxu0 0
        %2130 = vmatmul.mubr.bf16.gmra.mrb[0].mxu0 %v1046
        %v2131 = vpop.f32.mrb[0].mxu0
        %v2132 = vadd.f32 0.0, %v2131
        %v2133 = vpop.f32.mrb[0].mxu0
        %v2134 = vpop.f32.mrb[0].mxu0
        %v2135 = vadd.f32 0.0, %v2134
        %v2136 = vpop.f32.mrb[0].mxu0
        %2137 = vmatprep.mubr.bf16.mxu0 0
        %2138 = vmatmul.mubr.bf16.gmra.mrb[0].mxu0 %v1049
        %v2139 = vpop.f32.mrb[0].mxu0
        %v2140 = vadd.f32 0.0, %v2139
        %v2141 = vpop.f32.mrb[0].mxu0
        %v2142 = vpop.f32.mrb[0].mxu0
        %v2143 = vadd.f32 0.0, %v2142
        %v2144 = vpop.f32.mrb[0].mxu0
        %2145 = vmatprep.mubr.bf16.mxu0 0
        %2146 = vmatmul.mubr.bf16.gmra.mrb[0].mxu0 %v1052
        %v2147 = vpop.f32.mrb[0].mxu0
        %v2148 = vadd.f32 0.0, %v2147
        %v2149 = vpop.f32.mrb[0].mxu0
        %v2150 = vpop.f32.mrb[0].mxu0
        %v2151 = vadd.f32 0.0, %v2150
        %v2152 = vpop.f32.mrb[0].mxu0
        %2153 = vmatprep.mubr.bf16.mxu0 0
        %2154 = vmatmul.mubr.bf16.gmra.mrb[0].mxu0 %v1055
        %v2155 = vpop.f32.mrb[0].mxu0
        %v2156 = vadd.f32 0.0, %v2155
        %v2157 = vpop.f32.mrb[0].mxu0
        %v2158 = vpop.f32.mrb[0].mxu0
        %v2159 = vadd.f32 0.0, %v2158
        %v2160 = vpop.f32.mrb[0].mxu0
        %2161 = vmatprep.mubr.bf16.mxu0 0
        %2162 = vmatmul.mubr.bf16.gmra.mrb[0].mxu0 %v1058
        %v2163 = vpop.f32.mrb[0].mxu0
        %v2164 = vadd.f32 0.0, %v2163
        %v2165 = vpop.f32.mrb[0].mxu0
        %v2166 = vpop.f32.mrb[0].mxu0
        %v2167 = vadd.f32 0.0, %v2166
        %v2168 = vpop.f32.mrb[0].mxu0
        %2169 = vmatprep.mubr.bf16.mxu0 0
        %2170 = vmatmul.mubr.bf16.gmra.mrb[0].mxu0 %v1555
        %v2171 = vpop.f32.mrb[0].mxu0
        %v2172 = vadd.f32 0.0, %v2171
        %v2173 = vpop.f32.mrb[0].mxu0
        %v2174 = vpop.f32.mrb[0].mxu0
        %v2175 = vadd.f32 0.0, %v2174
        %v2176 = vpop.f32.mrb[0].mxu0
        %2177 = vmatprep.mubr.bf16.mxu0 0
        %2178 = vmatmul.mubr.bf16.gmra.mrb[0].mxu0 %v2052
        %v2179 = vpop.f32.mrb[0].mxu0
        %v2180 = vadd.f32 0.0, %v2179
        %v2181 = vpop.f32.mrb[0].mxu0
        %v2182 = vpop.f32.mrb[0].mxu0
        %v2183 = vadd.f32 0.0, %v2182
        %v2184 = vpop.f32.mrb[0].mxu0
        %2185 = vdwg.mxu0
        %v2186 = vadd.f32 %v2019, %v2092
        %v2187 = vadd.f32 %v2020, %v2095
        %v2188 = vadd.f32 %v2021, %v2100
        %v2189 = vadd.f32 %v2022, %v2103
        %v2190 = vadd.f32 %v2023, %v2108
        %v2191 = vadd.f32 %v2024, %v2111
        %v2192 = vadd.f32 %v2025, %v2116
        %v2193 = vadd.f32 %v2026, %v2119
        %v2194 = vadd.f32 %v2027, %v2124
        %v2195 = vadd.f32 %v2028, %v2127
        %v2196 = vadd.f32 %v2029, %v2132
        %v2197 = vadd.f32 %v2030, %v2135
        %v2198 = vadd.f32 %v2031, %v2140
        %v2199 = vadd.f32 %v2032, %v2143
        %v2200 = vadd.f32 %v2033, %v2148
        %v2201 = vadd.f32 %v2034, %v2151
        %v2202 = vadd.f32 %v2035, %v2156
        %v2203 = vadd.f32 %v2036, %v2159
        %v2204 = vadd.f32 %v2037, %v2164
        %v2205 = vadd.f32 %v2038, %v2167
        %v2206 = vadd.f32 %v2039, %v2172
        %v2207 = vadd.f32 %v2040, %v2175
        %v2208 = vadd.f32 %v2041, %v2180
        %v2209 = vadd.f32 %v2042, %v2183
        %v2211 = vlaneseq
        %v2212 = vshrl.u32 %v2211, 7
        %v2213 = vsub.s32 0, %v2212
        %v2214 = vrot.slane %v440, %v2213
        %v2216 = vadd.f32 %v2186, %v2214
        %v2217 = vadd.f32 %v2187, %v2214
        %v2218 = vadd.f32 %v2188, %v2214
        %v2219 = vadd.f32 %v2189, %v2214
        %v2220 = vadd.f32 %v2190, %v2214
        %v2221 = vadd.f32 %v2191, %v2214
        %v2222 = vadd.f32 %v2192, %v2214
        %v2223 = vadd.f32 %v2193, %v2214
        %v2224 = vadd.f32 %v2194, %v2214
        %v2225 = vadd.f32 %v2195, %v2214
        %v2226 = vadd.f32 %v2196, %v2214
        %v2227 = vadd.f32 %v2197, %v2214
        %v2228 = vadd.f32 %v2198, %v2214
        %v2229 = vadd.f32 %v2199, %v2214
        %v2230 = vadd.f32 %v2200, %v2214
        %v2231 = vadd.f32 %v2201, %v2214
        %v2232 = vadd.f32 %v2202, %v2214
        %v2233 = vadd.f32 %v2203, %v2214
        %v2234 = vadd.f32 %v2204, %v2214
        %v2235 = vadd.f32 %v2205, %v2214
        %v2236 = vadd.f32 %v2206, %v2214
        %v2237 = vadd.f32 %v2207, %v2214
        %v2238 = vadd.f32 %v2208, %v2214
        %v2239 = vadd.f32 %v2209, %v2214
        %v2240 = vmax.f32 %v2216, 0.0
        %v2241 = vmax.f32 %v2217, 0.0
        %v2242 = vmax.f32 %v2218, 0.0
        %v2243 = vmax.f32 %v2219, 0.0
        %v2244 = vmax.f32 %v2220, 0.0
        %v2245 = vmax.f32 %v2221, 0.0
        %v2246 = vmax.f32 %v2222, 0.0
        %v2247 = vmax.f32 %v2223, 0.0
        %v2248 = vmax.f32 %v2224, 0.0
        %v2249 = vmax.f32 %v2225, 0.0
        %v2250 = vmax.f32 %v2226, 0.0
        %v2251 = vmax.f32 %v2227, 0.0
        %v2252 = vmax.f32 %v2228, 0.0
        %v2253 = vmax.f32 %v2229, 0.0
        %v2254 = vmax.f32 %v2230, 0.0
        %v2255 = vmax.f32 %v2231, 0.0
        %v2256 = vmax.f32 %v2232, 0.0
        %v2257 = vmax.f32 %v2233, 0.0
        %v2258 = vmax.f32 %v2234, 0.0
        %v2259 = vmax.f32 %v2235, 0.0
        %v2260 = vmax.f32 %v2236, 0.0
        %v2261 = vmax.f32 %v2237, 0.0
        %v2262 = vmax.f32 %v2238, 0.0
        %v2263 = vmax.f32 %v2239, 0.0
        %s2264 = ssub.s32 %s343, 2
        %v2265 = vlaneseq
        %v2266 = vshrl.u32 %v2265, 7
        %v2267 = vadd.s32 %v2266, 8
        %v2268 = vstv %s2264
        %v2269 = vadd.s32 %v2268, %v2266
        %v2270 = vadd.s32 %v2268, %v2267
        %vm2271 = vcmp.ge.s32.totalorder %v2269, 0
        %vm2272 = vcmp.ge.s32.totalorder %v2270, 0
        %vm2273 = vcmp.lt.s32.totalorder %v2269, 16
        %vm2274 = vcmp.lt.s32.totalorder %v2270, 16
        %vm2275 = vmand %vm2271, %vm2273
        %vm2276 = vmand %vm2272, %vm2274
        %v2277 = vsel %vm2275, 1, 0
        %v2278 = vsel %vm2276, 1, 0
        %v2279 = vcvt.s32.f32 %v2277
        %v2280 = vcvt.s32.f32 %v2278
        %v2281 = vlaneseq
        %v2282 = vshrl.u32 %v2281, 7
        %v2283 = vsub.s32 0, %v2282
        %v2284 = vrot.slane %v2279, %v2283
        %v2285 = vlaneseq
        %v2286 = vshrl.u32 %v2285, 7
        %v2287 = vsub.s32 1, %v2286
        %v2288 = vrot.slane %v2279, %v2287
        %v2289 = vlaneseq
        %v2290 = vshrl.u32 %v2289, 7
        %v2291 = vsub.s32 2, %v2290
        %v2292 = vrot.slane %v2279, %v2291
        %v2293 = vlaneseq
        %v2294 = vshrl.u32 %v2293, 7
        %v2295 = vsub.s32 3, %v2294
        %v2296 = vrot.slane %v2279, %v2295
        %v2297 = vlaneseq
        %v2298 = vshrl.u32 %v2297, 7
        %v2299 = vsub.s32 4, %v2298
        %v2300 = vrot.slane %v2279, %v2299
        %v2301 = vlaneseq
        %v2302 = vshrl.u32 %v2301, 7
        %v2303 = vsub.s32 5, %v2302
        %v2304 = vrot.slane %v2279, %v2303
        %v2305 = vlaneseq
        %v2306 = vshrl.u32 %v2305, 7
        %v2307 = vsub.s32 6, %v2306
        %v2308 = vrot.slane %v2279, %v2307
        %v2309 = vlaneseq
        %v2310 = vshrl.u32 %v2309, 7
        %v2311 = vsub.s32 7, %v2310
        %v2312 = vrot.slane %v2279, %v2311
        %v2313 = vlaneseq
        %v2314 = vshrl.u32 %v2313, 7
        %v2315 = vsub.s32 0, %v2314
        %v2316 = vrot.slane %v2280, %v2315
        %v2317 = vlaneseq
        %v2318 = vshrl.u32 %v2317, 7
        %v2319 = vsub.s32 1, %v2318
        %v2320 = vrot.slane %v2280, %v2319
        %v2321 = vlaneseq
        %v2322 = vshrl.u32 %v2321, 7
        %v2323 = vsub.s32 2, %v2322
        %v2324 = vrot.slane %v2280, %v2323
        %v2325 = vlaneseq
        %v2326 = vshrl.u32 %v2325, 7
        %v2327 = vsub.s32 3, %v2326
        %v2328 = vrot.slane %v2280, %v2327
        %v2329 = vmul.f32 %v2240, %v2284
        %v2330 = vmul.f32 %v2241, %v2284
        %v2331 = vmul.f32 %v2242, %v2288
        %v2332 = vmul.f32 %v2243, %v2288
        %v2333 = vmul.f32 %v2244, %v2292
        %v2334 = vmul.f32 %v2245, %v2292
        %v2335 = vmul.f32 %v2246, %v2296
        %v2336 = vmul.f32 %v2247, %v2296
        %v2337 = vmul.f32 %v2248, %v2300
        %v2338 = vmul.f32 %v2249, %v2300
        %v2339 = vmul.f32 %v2250, %v2304
        %v2340 = vmul.f32 %v2251, %v2304
        %v2341 = vmul.f32 %v2252, %v2308
        %v2342 = vmul.f32 %v2253, %v2308
        %v2343 = vmul.f32 %v2254, %v2312
        %v2344 = vmul.f32 %v2255, %v2312
        %v2345 = vmul.f32 %v2256, %v2316
        %v2346 = vmul.f32 %v2257, %v2316
        %v2347 = vmul.f32 %v2258, %v2320
        %v2348 = vmul.f32 %v2259, %v2320
        %v2349 = vmul.f32 %v2260, %v2324
        %v2350 = vmul.f32 %v2261, %v2324
        %v2351 = vmul.f32 %v2262, %v2328
        %v2352 = vmul.f32 %v2263, %v2328
        %v2377 = vrot.slane %v2329, 7
        %v2378 = vrot.slane %v2330, 7
        %v2379 = vsel %vm623, %v2377, %v2378
        %v2380 = vrot.slane %v2331, 7
        %v2381 = vrot.slane %v2332, 7
        %v2382 = vsel %vm623, %v2380, %v2381
        %v2383 = vrot.slane %v2333, 7
        %v2384 = vrot.slane %v2334, 7
        %v2385 = vsel %vm623, %v2383, %v2384
        %v2386 = vrot.slane %v2335, 7
        %v2387 = vrot.slane %v2336, 7
        %v2388 = vsel %vm623, %v2386, %v2387
        %v2389 = vrot.slane %v2337, 7
        %v2390 = vrot.slane %v2338, 7
        %v2391 = vsel %vm623, %v2389, %v2390
        %v2392 = vrot.slane %v2339, 7
        %v2393 = vrot.slane %v2340, 7
        %v2394 = vsel %vm623, %v2392, %v2393
        %v2395 = vrot.slane %v2341, 7
        %v2396 = vrot.slane %v2342, 7
        %v2397 = vsel %vm623, %v2395, %v2396
        %v2398 = vrot.slane %v2343, 7
        %v2399 = vrot.slane %v2344, 7
        %v2400 = vsel %vm623, %v2398, %v2399
        %v2401 = vrot.slane %v2345, 7
        %v2402 = vrot.slane %v2346, 7
        %v2403 = vsel %vm623, %v2401, %v2402
        %v2404 = vrot.slane %v2347, 7
        %v2405 = vrot.slane %v2348, 7
        %v2406 = vsel %vm623, %v2404, %v2405
        %v2407 = vrot.slane %v2349, 7
        %v2408 = vrot.slane %v2350, 7
        %v2409 = vsel %vm623, %v2407, %v2408
        %v2410 = vrot.slane %v2351, 7
        %v2411 = vrot.slane %v2352, 7
        %v2412 = vsel %vm623, %v2410, %v2411
        %v2449 = vsel %vm623, 0.0, %v2377
        %v2450 = vsel %vm623, 0.0, %v2380
        %v2451 = vsel %vm623, 0.0, %v2383
        %v2452 = vsel %vm623, 0.0, %v2386
        %v2453 = vsel %vm623, 0.0, %v2389
        %v2454 = vsel %vm623, 0.0, %v2392
        %v2455 = vsel %vm623, 0.0, %v2395
        %v2456 = vsel %vm623, 0.0, %v2398
        %v2457 = vsel %vm623, 0.0, %v2401
        %v2458 = vsel %vm623, 0.0, %v2404
        %v2459 = vsel %vm623, 0.0, %v2407
        %v2460 = vsel %vm623, 0.0, %v2410
        %v2461 = vsel %vm623, %v2378, 0.0
        %v2462 = vsel %vm623, %v2381, 0.0
        %v2463 = vsel %vm623, %v2384, 0.0
        %v2464 = vsel %vm623, %v2387, 0.0
        %v2465 = vsel %vm623, %v2390, 0.0
        %v2466 = vsel %vm623, %v2393, 0.0
        %v2467 = vsel %vm623, %v2396, 0.0
        %v2468 = vsel %vm623, %v2399, 0.0
        %v2469 = vsel %vm623, %v2402, 0.0
        %v2470 = vsel %vm623, %v2405, 0.0
        %v2471 = vsel %vm623, %v2408, 0.0
        %v2472 = vsel %vm623, %v2411, 0.0
        %v2473 = vld [vmem:[%s3] sm:$0xf]
        %v2474 = vld [vmem:[%s3 + $0x4] sm:$0xf]
        %v2475 = vld [vmem:[%s3 + $0x8] sm:$0xf]
        %v2476 = vld [vmem:[%s3 + $0xc] sm:$0xf]
        %v2477 = vld [vmem:[%s3 + $0x10] sm:$0xf]
        %v2478 = vld [vmem:[%s3 + $0x14] sm:$0xf]
        %v2479 = vld [vmem:[%s3 + $0x18] sm:$0xf]
        %v2480 = vld [vmem:[%s3 + $0x1c] sm:$0xf]
        %v2481 = vld [vmem:[%s3 + $0x20] sm:$0xf]
        %v2482 = vld [vmem:[%s3 + $0x24] sm:$0xf]
        %v2483 = vld [vmem:[%s3 + $0x28] sm:$0xf]
        %v2484 = vld [vmem:[%s3 + $0x2c] sm:$0xf]
        %v2485 = vld [vmem:[%s3 + $0x30] sm:$0xf]
        %v2486 = vld [vmem:[%s3 + $0x34] sm:$0xf]
        %v2487 = vld [vmem:[%s3 + $0x38] sm:$0xf]
        %v2488 = vld [vmem:[%s3 + $0x3c] sm:$0xf]
        %v2489 = vld [vmem:[%s3 + $0x40] sm:$0xf]
        %v2490 = vld [vmem:[%s3 + $0x44] sm:$0xf]
        %v2491 = vld [vmem:[%s4] sm:$0x1]
        %v2492 = vpack.c.bf16 %v2379, %v2449
        %v2493 = vpack.c.bf16 %v2382, %v2450
        %v2494 = vpack.c.bf16 %v2385, %v2451
        %v2495 = vpack.c.bf16 %v2388, %v2452
        %v2496 = vpack.c.bf16 %v2391, %v2453
        %v2497 = vpack.c.bf16 %v2394, %v2454
        %v2498 = vpack.c.bf16 %v2397, %v2455
        %v2499 = vpack.c.bf16 %v2400, %v2456
        %v2500 = vpack.c.bf16 %v2403, %v2457
        %v2501 = vpack.c.bf16 %v2406, %v2458
        %v2522 = vrot.slane %v2449, 1
        %v2523 = vrot.slane %v2379, 1
        %v2524 = vsel %vm489, %v2522, %v2523
        %v2525 = vrot.slane %v2461, 1
        %v2526 = vsel %vm489, %v2523, %v2525
        %v2527 = vrot.slane %v2450, 1
        %v2528 = vrot.slane %v2382, 1
        %v2529 = vsel %vm489, %v2527, %v2528
        %v2530 = vrot.slane %v2462, 1
        %v2531 = vsel %vm489, %v2528, %v2530
        %v2532 = vrot.slane %v2451, 1
        %v2533 = vrot.slane %v2385, 1
        %v2534 = vsel %vm489, %v2532, %v2533
        %v2535 = vrot.slane %v2463, 1
        %v2536 = vsel %vm489, %v2533, %v2535
        %v2537 = vrot.slane %v2452, 1
        %v2538 = vrot.slane %v2388, 1
        %v2539 = vsel %vm489, %v2537, %v2538
        %v2540 = vrot.slane %v2464, 1
        %v2541 = vsel %vm489, %v2538, %v2540
        %v2542 = vrot.slane %v2453, 1
        %v2543 = vrot.slane %v2391, 1
        %v2544 = vsel %vm489, %v2542, %v2543
        %v2545 = vrot.slane %v2465, 1
        %v2546 = vsel %vm489, %v2543, %v2545
        %v2547 = vrot.slane %v2454, 1
        %v2548 = vrot.slane %v2394, 1
        %v2549 = vsel %vm489, %v2547, %v2548
        %v2550 = vrot.slane %v2466, 1
        %v2551 = vsel %vm489, %v2548, %v2550
        %v2552 = vrot.slane %v2455, 1
        %v2553 = vrot.slane %v2397, 1
        %v2554 = vsel %vm489, %v2552, %v2553
        %v2555 = vrot.slane %v2467, 1
        %v2556 = vsel %vm489, %v2553, %v2555
        %v2557 = vrot.slane %v2456, 1
        %v2558 = vrot.slane %v2400, 1
        %v2559 = vsel %vm489, %v2557, %v2558
        %v2560 = vrot.slane %v2468, 1
        %v2561 = vsel %vm489, %v2558, %v2560
        %v2562 = vrot.slane %v2457, 1
        %v2563 = vrot.slane %v2403, 1
        %v2564 = vsel %vm489, %v2562, %v2563
        %v2565 = vrot.slane %v2469, 1
        %v2566 = vsel %vm489, %v2563, %v2565
        %v2567 = vrot.slane %v2458, 1
        %v2568 = vrot.slane %v2406, 1
        %v2569 = vsel %vm489, %v2567, %v2568
        %v2570 = vrot.slane %v2470, 1
        %v2571 = vsel %vm489, %v2568, %v2570
        %v2592 = vpack.c.bf16 %v2526, %v2524
        %v2593 = vpack.c.bf16 %v2531, %v2529
        %v2594 = vpack.c.bf16 %v2536, %v2534
        %v2595 = vpack.c.bf16 %v2541, %v2539
        %v2596 = vpack.c.bf16 %v2546, %v2544
        %v2597 = vpack.c.bf16 %v2551, %v2549
        %v2598 = vpack.c.bf16 %v2556, %v2554
        %v2599 = vpack.c.bf16 %v2561, %v2559
        %v2600 = vpack.c.bf16 %v2566, %v2564
        %v2601 = vpack.c.bf16 %v2571, %v2569
        %v2604 = vunpack.c.l.b16 %v2475
        %v2605 = vunpack.c.l.b16 %v2476
        %v2606 = vpack.c.b16 %v2605, %v2604
        %vm2608 = vcmask 130048
        %v2610 = vsel %vm2608, %v2592, 0
        %v2613 = vsel %vm2608, %v2593, 0
        %v2616 = vsel %vm2608, %v2594, 0
        %v2619 = vsel %vm2608, %v2595, 0
        %v2622 = vsel %vm2608, %v2596, 0
        %v2625 = vsel %vm2608, %v2597, 0
        %v2628 = vsel %vm2608, %v2598, 0
        %v2631 = vsel %vm2608, %v2599, 0
        %v2634 = vsel %vm2608, %v2600, 0
        %v2637 = vsel %vm2608, %v2601, 0
        %2639 = vmatprep.subr.bf16.mxu0 0
        %2640 = vmatpush1.bf16.msra.mxu0 %v2606
        %2641 = vmatprep.subr.bf16.mxu0 0
        %2642 = vmatpush1.bf16.msra.mxu0 0
        %2643 = vmatprep.subr.bf16.mxu0 0
        %2644 = vmatpush1.bf16.msra.mxu0 0
        %2645 = vmatprep.subr.bf16.mxu0 0
        %2646 = vmatpush1.bf16.msra.mxu0 0
        %2647 = vmatprep.subr.bf16.mxu0 0
        %2648 = vmatpush1.bf16.msra.mxu0 0
        %2649 = vmatprep.subr.bf16.mxu0 0
        %2650 = vmatpush1.bf16.msra.mxu0 0
        %2651 = vmatprep.subr.bf16.mxu0 0
        %2652 = vmatpush1.bf16.msra.mxu0 0
        %2653 = vmatprep.subr.bf16.mxu0 0
        %2654 = vmatpush1.bf16.msra.mxu0 0
        %2655 = vmatprep.subr.bf16.mxu0 0
        %2656 = vmatpush1.bf16.msra.mxu0 0
        %2657 = vmatprep.subr.bf16.mxu0 0
        %2658 = vmatpush1.bf16.msra.mxu0 0
        %2659 = vmatprep.subr.bf16.mxu0 0
        %2660 = vmatpush1.bf16.msra.mxu0 0
        %2661 = vmatprep.subr.bf16.mxu0 0
        %2662 = vmatpush1.bf16.msra.mxu0 0
        %2663 = vmatprep.subr.bf16.mxu0 0
        %2664 = vmatpush1.bf16.msra.mxu0 0
        %2665 = vmatprep.subr.bf16.mxu0 0
        %2666 = vmatpush1.bf16.msra.mxu0 0
        %2667 = vmatprep.subr.bf16.mxu0 0
        %2668 = vmatpush1.bf16.msra.mxu0 0
        %2669 = vmatprep.subr.bf16.mxu0 0
        %2670 = vmatpush1.bf16.msra.mxu0 0
        %2671 = vmatprep.mubr.bf16.mxu0 0
        %2672 = vmatmul.mubr.bf16.gmra.mrb[0].mxu0 %v2610
        %v2673 = vpop.f32.mrb[0].mxu0
        %v2674 = vadd.f32 0.0, %v2673
        %v2675 = vpop.f32.mrb[0].mxu0
        %v2676 = vpop.f32.mrb[0].mxu0
        %v2677 = vadd.f32 0.0, %v2676
        %v2678 = vpop.f32.mrb[0].mxu0
        %2679 = vmatprep.mubr.bf16.mxu0 0
        %2680 = vmatmul.mubr.bf16.gmra.mrb[0].mxu0 %v2613
        %v2681 = vpop.f32.mrb[0].mxu0
        %v2682 = vadd.f32 0.0, %v2681
        %v2683 = vpop.f32.mrb[0].mxu0
        %v2684 = vpop.f32.mrb[0].mxu0
        %v2685 = vadd.f32 0.0, %v2684
        %v2686 = vpop.f32.mrb[0].mxu0
        %2687 = vmatprep.mubr.bf16.mxu0 0
        %2688 = vmatmul.mubr.bf16.gmra.mrb[0].mxu0 %v2616
        %v2689 = vpop.f32.mrb[0].mxu0
        %v2690 = vadd.f32 0.0, %v2689
        %v2691 = vpop.f32.mrb[0].mxu0
        %v2692 = vpop.f32.mrb[0].mxu0
        %v2693 = vadd.f32 0.0, %v2692
        %v2694 = vpop.f32.mrb[0].mxu0
        %2695 = vmatprep.mubr.bf16.mxu0 0
        %2696 = vmatmul.mubr.bf16.gmra.mrb[0].mxu0 %v2619
        %v2697 = vpop.f32.mrb[0].mxu0
        %v2698 = vadd.f32 0.0, %v2697
        %v2699 = vpop.f32.mrb[0].mxu0
        %v2700 = vpop.f32.mrb[0].mxu0
        %v2701 = vadd.f32 0.0, %v2700
        %v2702 = vpop.f32.mrb[0].mxu0
        %2703 = vmatprep.mubr.bf16.mxu0 0
        %2704 = vmatmul.mubr.bf16.gmra.mrb[0].mxu0 %v2622
        %v2705 = vpop.f32.mrb[0].mxu0
        %v2706 = vadd.f32 0.0, %v2705
        %v2707 = vpop.f32.mrb[0].mxu0
        %v2708 = vpop.f32.mrb[0].mxu0
        %v2709 = vadd.f32 0.0, %v2708
        %v2710 = vpop.f32.mrb[0].mxu0
        %2711 = vmatprep.mubr.bf16.mxu0 0
        %2712 = vmatmul.mubr.bf16.gmra.mrb[0].mxu0 %v2625
        %v2713 = vpop.f32.mrb[0].mxu0
        %v2714 = vadd.f32 0.0, %v2713
        %v2715 = vpop.f32.mrb[0].mxu0
        %v2716 = vpop.f32.mrb[0].mxu0
        %v2717 = vadd.f32 0.0, %v2716
        %v2718 = vpop.f32.mrb[0].mxu0
        %2719 = vmatprep.mubr.bf16.mxu0 0
        %2720 = vmatmul.mubr.bf16.gmra.mrb[0].mxu0 %v2628
        %v2721 = vpop.f32.mrb[0].mxu0
        %v2722 = vadd.f32 0.0, %v2721
        %v2723 = vpop.f32.mrb[0].mxu0
        %v2724 = vpop.f32.mrb[0].mxu0
        %v2725 = vadd.f32 0.0, %v2724
        %v2726 = vpop.f32.mrb[0].mxu0
        %2727 = vmatprep.mubr.bf16.mxu0 0
        %2728 = vmatmul.mubr.bf16.gmra.mrb[0].mxu0 %v2631
        %v2729 = vpop.f32.mrb[0].mxu0
        %v2730 = vadd.f32 0.0, %v2729
        %v2731 = vpop.f32.mrb[0].mxu0
        %v2732 = vpop.f32.mrb[0].mxu0
        %v2733 = vadd.f32 0.0, %v2732
        %v2734 = vpop.f32.mrb[0].mxu0
        %2735 = vmatprep.mubr.bf16.mxu0 0
        %2736 = vmatmul.mubr.bf16.gmra.mrb[0].mxu0 %v2634
        %v2737 = vpop.f32.mrb[0].mxu0
        %v2738 = vadd.f32 0.0, %v2737
        %v2739 = vpop.f32.mrb[0].mxu0
        %v2740 = vpop.f32.mrb[0].mxu0
        %v2741 = vadd.f32 0.0, %v2740
        %v2742 = vpop.f32.mrb[0].mxu0
        %2743 = vmatprep.mubr.bf16.mxu0 0
        %2744 = vmatmul.mubr.bf16.gmra.mrb[0].mxu0 %v2637
        %v2745 = vpop.f32.mrb[0].mxu0
        %v2746 = vadd.f32 0.0, %v2745
        %v2747 = vpop.f32.mrb[0].mxu0
        %v2748 = vpop.f32.mrb[0].mxu0
        %v2749 = vadd.f32 0.0, %v2748
        %v2750 = vpop.f32.mrb[0].mxu0
        %2751 = vdwg.mxu0
        %v2754 = vunpack.c.l.b16 %v2473
        %v2755 = vunpack.c.l.b16 %v2474
        %v2756 = vpack.c.b16 %v2755, %v2754
        %v2759 = vsel %vm2608, %v2492, 0
        %v2762 = vsel %vm2608, %v2493, 0
        %v2765 = vsel %vm2608, %v2494, 0
        %v2768 = vsel %vm2608, %v2495, 0
        %v2771 = vsel %vm2608, %v2496, 0
        %v2774 = vsel %vm2608, %v2497, 0
        %v2777 = vsel %vm2608, %v2498, 0
        %v2780 = vsel %vm2608, %v2499, 0
        %v2783 = vsel %vm2608, %v2500, 0
        %v2786 = vsel %vm2608, %v2501, 0
        %2788 = vmatprep.subr.bf16.mxu0 0
        %2789 = vmatpush1.bf16.msra.mxu0 %v2756
        %2790 = vmatprep.subr.bf16.mxu0 0
        %2791 = vmatpush1.bf16.msra.mxu0 0
        %2792 = vmatprep.subr.bf16.mxu0 0
        %2793 = vmatpush1.bf16.msra.mxu0 0
        %2794 = vmatprep.subr.bf16.mxu0 0
        %2795 = vmatpush1.bf16.msra.mxu0 0
        %2796 = vmatprep.subr.bf16.mxu0 0
        %2797 = vmatpush1.bf16.msra.mxu0 0
        %2798 = vmatprep.subr.bf16.mxu0 0
        %2799 = vmatpush1.bf16.msra.mxu0 0
        %2800 = vmatprep.subr.bf16.mxu0 0
        %2801 = vmatpush1.bf16.msra.mxu0 0
        %2802 = vmatprep.subr.bf16.mxu0 0
        %2803 = vmatpush1.bf16.msra.mxu0 0
        %2804 = vmatprep.subr.bf16.mxu0 0
        %2805 = vmatpush1.bf16.msra.mxu0 0
        %2806 = vmatprep.subr.bf16.mxu0 0
        %2807 = vmatpush1.bf16.msra.mxu0 0
        %2808 = vmatprep.subr.bf16.mxu0 0
        %2809 = vmatpush1.bf16.msra.mxu0 0
        %2810 = vmatprep.subr.bf16.mxu0 0
        %2811 = vmatpush1.bf16.msra.mxu0 0
        %2812 = vmatprep.subr.bf16.mxu0 0
        %2813 = vmatpush1.bf16.msra.mxu0 0
        %2814 = vmatprep.subr.bf16.mxu0 0
        %2815 = vmatpush1.bf16.msra.mxu0 0
        %2816 = vmatprep.subr.bf16.mxu0 0
        %2817 = vmatpush1.bf16.msra.mxu0 0
        %2818 = vmatprep.subr.bf16.mxu0 0
        %2819 = vmatpush1.bf16.msra.mxu0 0
        %2820 = vmatprep.mubr.bf16.mxu0 0
        %2821 = vmatmul.mubr.bf16.gmra.mrb[0].mxu0 %v2759
        %v2822 = vpop.f32.mrb[0].mxu0
        %v2823 = vadd.f32 %v2674, %v2822
        %v2824 = vpop.f32.mrb[0].mxu0
        %v2825 = vpop.f32.mrb[0].mxu0
        %v2826 = vadd.f32 %v2677, %v2825
        %v2827 = vpop.f32.mrb[0].mxu0
        %2828 = vmatprep.mubr.bf16.mxu0 0
        %2829 = vmatmul.mubr.bf16.gmra.mrb[0].mxu0 %v2762
        %v2830 = vpop.f32.mrb[0].mxu0
        %v2831 = vadd.f32 %v2682, %v2830
        %v2832 = vpop.f32.mrb[0].mxu0
        %v2833 = vpop.f32.mrb[0].mxu0
        %v2834 = vadd.f32 %v2685, %v2833
        %v2835 = vpop.f32.mrb[0].mxu0
        %2836 = vmatprep.mubr.bf16.mxu0 0
        %2837 = vmatmul.mubr.bf16.gmra.mrb[0].mxu0 %v2765
        %v2838 = vpop.f32.mrb[0].mxu0
        %v2839 = vadd.f32 %v2690, %v2838
        %v2840 = vpop.f32.mrb[0].mxu0
        %v2841 = vpop.f32.mrb[0].mxu0
        %v2842 = vadd.f32 %v2693, %v2841
        %v2843 = vpop.f32.mrb[0].mxu0
        %2844 = vmatprep.mubr.bf16.mxu0 0
        %2845 = vmatmul.mubr.bf16.gmra.mrb[0].mxu0 %v2768
        %v2846 = vpop.f32.mrb[0].mxu0
        %v2847 = vadd.f32 %v2698, %v2846
        %v2848 = vpop.f32.mrb[0].mxu0
        %v2849 = vpop.f32.mrb[0].mxu0
        %v2850 = vadd.f32 %v2701, %v2849
        %v2851 = vpop.f32.mrb[0].mxu0
        %2852 = vmatprep.mubr.bf16.mxu0 0
        %2853 = vmatmul.mubr.bf16.gmra.mrb[0].mxu0 %v2771
        %v2854 = vpop.f32.mrb[0].mxu0
        %v2855 = vadd.f32 %v2706, %v2854
        %v2856 = vpop.f32.mrb[0].mxu0
        %v2857 = vpop.f32.mrb[0].mxu0
        %v2858 = vadd.f32 %v2709, %v2857
        %v2859 = vpop.f32.mrb[0].mxu0
        %2860 = vmatprep.mubr.bf16.mxu0 0
        %2861 = vmatmul.mubr.bf16.gmra.mrb[0].mxu0 %v2774
        %v2862 = vpop.f32.mrb[0].mxu0
        %v2863 = vadd.f32 %v2714, %v2862
        %v2864 = vpop.f32.mrb[0].mxu0
        %v2865 = vpop.f32.mrb[0].mxu0
        %v2866 = vadd.f32 %v2717, %v2865
        %v2867 = vpop.f32.mrb[0].mxu0
        %2868 = vmatprep.mubr.bf16.mxu0 0
        %2869 = vmatmul.mubr.bf16.gmra.mrb[0].mxu0 %v2777
        %v2870 = vpop.f32.mrb[0].mxu0
        %v2871 = vadd.f32 %v2722, %v2870
        %v2872 = vpop.f32.mrb[0].mxu0
        %v2873 = vpop.f32.mrb[0].mxu0
        %v2874 = vadd.f32 %v2725, %v2873
        %v2875 = vpop.f32.mrb[0].mxu0
        %2876 = vmatprep.mubr.bf16.mxu0 0
        %2877 = vmatmul.mubr.bf16.gmra.mrb[0].mxu0 %v2780
        %v2878 = vpop.f32.mrb[0].mxu0
        %v2879 = vadd.f32 %v2730, %v2878
        %v2880 = vpop.f32.mrb[0].mxu0
        %v2881 = vpop.f32.mrb[0].mxu0
        %v2882 = vadd.f32 %v2733, %v2881
        %v2883 = vpop.f32.mrb[0].mxu0
        %2884 = vmatprep.mubr.bf16.mxu0 0
        %2885 = vmatmul.mubr.bf16.gmra.mrb[0].mxu0 %v2783
        %v2886 = vpop.f32.mrb[0].mxu0
        %v2887 = vadd.f32 %v2738, %v2886
        %v2888 = vpop.f32.mrb[0].mxu0
        %v2889 = vpop.f32.mrb[0].mxu0
        %v2890 = vadd.f32 %v2741, %v2889
        %v2891 = vpop.f32.mrb[0].mxu0
        %2892 = vmatprep.mubr.bf16.mxu0 0
        %2893 = vmatmul.mubr.bf16.gmra.mrb[0].mxu0 %v2786
        %v2894 = vpop.f32.mrb[0].mxu0
        %v2895 = vadd.f32 %v2746, %v2894
        %v2896 = vpop.f32.mrb[0].mxu0
        %v2897 = vpop.f32.mrb[0].mxu0
        %v2898 = vadd.f32 %v2749, %v2897
        %v2899 = vpop.f32.mrb[0].mxu0
        %2900 = vdwg.mxu0
        %v2901 = vrot.slane %v2449, 2
        %v2902 = vrot.slane %v2379, 2
        %v2903 = vsel %vm927, %v2901, %v2902
        %v2904 = vrot.slane %v2461, 2
        %v2905 = vsel %vm927, %v2902, %v2904
        %v2906 = vrot.slane %v2450, 2
        %v2907 = vrot.slane %v2382, 2
        %v2908 = vsel %vm927, %v2906, %v2907
        %v2909 = vrot.slane %v2462, 2
        %v2910 = vsel %vm927, %v2907, %v2909
        %v2911 = vrot.slane %v2451, 2
        %v2912 = vrot.slane %v2385, 2
        %v2913 = vsel %vm927, %v2911, %v2912
        %v2914 = vrot.slane %v2463, 2
        %v2915 = vsel %vm927, %v2912, %v2914
        %v2916 = vrot.slane %v2452, 2
        %v2917 = vrot.slane %v2388, 2
        %v2918 = vsel %vm927, %v2916, %v2917
        %v2919 = vrot.slane %v2464, 2
        %v2920 = vsel %vm927, %v2917, %v2919
        %v2921 = vrot.slane %v2453, 2
        %v2922 = vrot.slane %v2391, 2
        %v2923 = vsel %vm927, %v2921, %v2922
        %v2924 = vrot.slane %v2465, 2
        %v2925 = vsel %vm927, %v2922, %v2924
        %v2926 = vrot.slane %v2454, 2
        %v2927 = vrot.slane %v2394, 2
        %v2928 = vsel %vm927, %v2926, %v2927
        %v2929 = vrot.slane %v2466, 2
        %v2930 = vsel %vm927, %v2927, %v2929
        %v2931 = vrot.slane %v2455, 2
        %v2932 = vrot.slane %v2397, 2
        %v2933 = vsel %vm927, %v2931, %v2932
        %v2934 = vrot.slane %v2467, 2
        %v2935 = vsel %vm927, %v2932, %v2934
        %v2936 = vrot.slane %v2456, 2
        %v2937 = vrot.slane %v2400, 2
        %v2938 = vsel %vm927, %v2936, %v2937
        %v2939 = vrot.slane %v2468, 2
        %v2940 = vsel %vm927, %v2937, %v2939
        %v2941 = vrot.slane %v2457, 2
        %v2942 = vrot.slane %v2403, 2
        %v2943 = vsel %vm927, %v2941, %v2942
        %v2944 = vrot.slane %v2469, 2
        %v2945 = vsel %vm927, %v2942, %v2944
        %v2946 = vrot.slane %v2458, 2
        %v2947 = vrot.slane %v2406, 2
        %v2948 = vsel %vm927, %v2946, %v2947
        %v2949 = vrot.slane %v2470, 2
        %v2950 = vsel %vm927, %v2947, %v2949
        %v2971 = vpack.c.bf16 %v2905, %v2903
        %v2972 = vpack.c.bf16 %v2910, %v2908
        %v2973 = vpack.c.bf16 %v2915, %v2913
        %v2974 = vpack.c.bf16 %v2920, %v2918
        %v2975 = vpack.c.bf16 %v2925, %v2923
        %v2976 = vpack.c.bf16 %v2930, %v2928
        %v2977 = vpack.c.bf16 %v2935, %v2933
        %v2978 = vpack.c.bf16 %v2940, %v2938
        %v2979 = vpack.c.bf16 %v2945, %v2943
        %v2980 = vpack.c.bf16 %v2950, %v2948
        %v2983 = vunpack.c.l.b16 %v2477
        %v2984 = vunpack.c.l.b16 %v2478
        %v2985 = vpack.c.b16 %v2984, %v2983
        %v2988 = vsel %vm2608, %v2971, 0
        %v2991 = vsel %vm2608, %v2972, 0
        %v2994 = vsel %vm2608, %v2973, 0
        %v2997 = vsel %vm2608, %v2974, 0
        %v3000 = vsel %vm2608, %v2975, 0
        %v3003 = vsel %vm2608, %v2976, 0
        %v3006 = vsel %vm2608, %v2977, 0
        %v3009 = vsel %vm2608, %v2978, 0
        %v3012 = vsel %vm2608, %v2979, 0
        %v3015 = vsel %vm2608, %v2980, 0
        %3017 = vmatprep.subr.bf16.mxu0 0
        %3018 = vmatpush1.bf16.msra.mxu0 %v2985
        %3019 = vmatprep.subr.bf16.mxu0 0
        %3020 = vmatpush1.bf16.msra.mxu0 0
        %3021 = vmatprep.subr.bf16.mxu0 0
        %3022 = vmatpush1.bf16.msra.mxu0 0
        %3023 = vmatprep.subr.bf16.mxu0 0
        %3024 = vmatpush1.bf16.msra.mxu0 0
        %3025 = vmatprep.subr.bf16.mxu0 0
        %3026 = vmatpush1.bf16.msra.mxu0 0
        %3027 = vmatprep.subr.bf16.mxu0 0
        %3028 = vmatpush1.bf16.msra.mxu0 0
        %3029 = vmatprep.subr.bf16.mxu0 0
        %3030 = vmatpush1.bf16.msra.mxu0 0
        %3031 = vmatprep.subr.bf16.mxu0 0
        %3032 = vmatpush1.bf16.msra.mxu0 0
        %3033 = vmatprep.subr.bf16.mxu0 0
        %3034 = vmatpush1.bf16.msra.mxu0 0
        %3035 = vmatprep.subr.bf16.mxu0 0
        %3036 = vmatpush1.bf16.msra.mxu0 0
        %3037 = vmatprep.subr.bf16.mxu0 0
        %3038 = vmatpush1.bf16.msra.mxu0 0
        %3039 = vmatprep.subr.bf16.mxu0 0
        %3040 = vmatpush1.bf16.msra.mxu0 0
        %3041 = vmatprep.subr.bf16.mxu0 0
        %3042 = vmatpush1.bf16.msra.mxu0 0
        %3043 = vmatprep.subr.bf16.mxu0 0
        %3044 = vmatpush1.bf16.msra.mxu0 0
        %3045 = vmatprep.subr.bf16.mxu0 0
        %3046 = vmatpush1.bf16.msra.mxu0 0
        %3047 = vmatprep.subr.bf16.mxu0 0
        %3048 = vmatpush1.bf16.msra.mxu0 0
        %3049 = vmatprep.mubr.bf16.mxu0 0
        %3050 = vmatmul.mubr.bf16.gmra.mrb[0].mxu0 %v2988
        %v3051 = vpop.f32.mrb[0].mxu0
        %v3052 = vadd.f32 0.0, %v3051
        %v3053 = vpop.f32.mrb[0].mxu0
        %v3054 = vpop.f32.mrb[0].mxu0
        %v3055 = vadd.f32 0.0, %v3054
        %v3056 = vpop.f32.mrb[0].mxu0
        %3057 = vmatprep.mubr.bf16.mxu0 0
        %3058 = vmatmul.mubr.bf16.gmra.mrb[0].mxu0 %v2991
        %v3059 = vpop.f32.mrb[0].mxu0
        %v3060 = vadd.f32 0.0, %v3059
        %v3061 = vpop.f32.mrb[0].mxu0
        %v3062 = vpop.f32.mrb[0].mxu0
        %v3063 = vadd.f32 0.0, %v3062
        %v3064 = vpop.f32.mrb[0].mxu0
        %3065 = vmatprep.mubr.bf16.mxu0 0
        %3066 = vmatmul.mubr.bf16.gmra.mrb[0].mxu0 %v2994
        %v3067 = vpop.f32.mrb[0].mxu0
        %v3068 = vadd.f32 0.0, %v3067
        %v3069 = vpop.f32.mrb[0].mxu0
        %v3070 = vpop.f32.mrb[0].mxu0
        %v3071 = vadd.f32 0.0, %v3070
        %v3072 = vpop.f32.mrb[0].mxu0
        %3073 = vmatprep.mubr.bf16.mxu0 0
        %3074 = vmatmul.mubr.bf16.gmra.mrb[0].mxu0 %v2997
        %v3075 = vpop.f32.mrb[0].mxu0
        %v3076 = vadd.f32 0.0, %v3075
        %v3077 = vpop.f32.mrb[0].mxu0
        %v3078 = vpop.f32.mrb[0].mxu0
        %v3079 = vadd.f32 0.0, %v3078
        %v3080 = vpop.f32.mrb[0].mxu0
        %3081 = vmatprep.mubr.bf16.mxu0 0
        %3082 = vmatmul.mubr.bf16.gmra.mrb[0].mxu0 %v3000
        %v3083 = vpop.f32.mrb[0].mxu0
        %v3084 = vadd.f32 0.0, %v3083
        %v3085 = vpop.f32.mrb[0].mxu0
        %v3086 = vpop.f32.mrb[0].mxu0
        %v3087 = vadd.f32 0.0, %v3086
        %v3088 = vpop.f32.mrb[0].mxu0
        %3089 = vmatprep.mubr.bf16.mxu0 0
        %3090 = vmatmul.mubr.bf16.gmra.mrb[0].mxu0 %v3003
        %v3091 = vpop.f32.mrb[0].mxu0
        %v3092 = vadd.f32 0.0, %v3091
        %v3093 = vpop.f32.mrb[0].mxu0
        %v3094 = vpop.f32.mrb[0].mxu0
        %v3095 = vadd.f32 0.0, %v3094
        %v3096 = vpop.f32.mrb[0].mxu0
        %3097 = vmatprep.mubr.bf16.mxu0 0
        %3098 = vmatmul.mubr.bf16.gmra.mrb[0].mxu0 %v3006
        %v3099 = vpop.f32.mrb[0].mxu0
        %v3100 = vadd.f32 0.0, %v3099
        %v3101 = vpop.f32.mrb[0].mxu0
        %v3102 = vpop.f32.mrb[0].mxu0
        %v3103 = vadd.f32 0.0, %v3102
        %v3104 = vpop.f32.mrb[0].mxu0
        %3105 = vmatprep.mubr.bf16.mxu0 0
        %3106 = vmatmul.mubr.bf16.gmra.mrb[0].mxu0 %v3009
        %v3107 = vpop.f32.mrb[0].mxu0
        %v3108 = vadd.f32 0.0, %v3107
        %v3109 = vpop.f32.mrb[0].mxu0
        %v3110 = vpop.f32.mrb[0].mxu0
        %v3111 = vadd.f32 0.0, %v3110
        %v3112 = vpop.f32.mrb[0].mxu0
        %3113 = vmatprep.mubr.bf16.mxu0 0
        %3114 = vmatmul.mubr.bf16.gmra.mrb[0].mxu0 %v3012
        %v3115 = vpop.f32.mrb[0].mxu0
        %v3116 = vadd.f32 0.0, %v3115
        %v3117 = vpop.f32.mrb[0].mxu0
        %v3118 = vpop.f32.mrb[0].mxu0
        %v3119 = vadd.f32 0.0, %v3118
        %v3120 = vpop.f32.mrb[0].mxu0
        %3121 = vmatprep.mubr.bf16.mxu0 0
        %3122 = vmatmul.mubr.bf16.gmra.mrb[0].mxu0 %v3015
        %v3123 = vpop.f32.mrb[0].mxu0
        %v3124 = vadd.f32 0.0, %v3123
        %v3125 = vpop.f32.mrb[0].mxu0
        %v3126 = vpop.f32.mrb[0].mxu0
        %v3127 = vadd.f32 0.0, %v3126
        %v3128 = vpop.f32.mrb[0].mxu0
        %3129 = vdwg.mxu0
        %v3130 = vadd.f32 %v2823, %v3052
        %v3131 = vadd.f32 %v2826, %v3055
        %v3132 = vadd.f32 %v2831, %v3060
        %v3133 = vadd.f32 %v2834, %v3063
        %v3134 = vadd.f32 %v2839, %v3068
        %v3135 = vadd.f32 %v2842, %v3071
        %v3136 = vadd.f32 %v2847, %v3076
        %v3137 = vadd.f32 %v2850, %v3079
        %v3138 = vadd.f32 %v2855, %v3084
        %v3139 = vadd.f32 %v2858, %v3087
        %v3140 = vadd.f32 %v2863, %v3092
        %v3141 = vadd.f32 %v2866, %v3095
        %v3142 = vadd.f32 %v2871, %v3100
        %v3143 = vadd.f32 %v2874, %v3103
        %v3144 = vadd.f32 %v2879, %v3108
        %v3145 = vadd.f32 %v2882, %v3111
        %v3146 = vadd.f32 %v2887, %v3116
        %v3147 = vadd.f32 %v2890, %v3119
        %v3148 = vadd.f32 %v2895, %v3124
        %v3149 = vadd.f32 %v2898, %v3127
        %v3150 = vpack.c.bf16 %v2409, %v2459
        %v3153 = vunpack.c.l.b16 %v2479
        %v3154 = vunpack.c.l.b16 %v2480
        %v3155 = vpack.c.b16 %v3154, %v3153
        %v3158 = vsel %vm2608, %v3150, 0
        %3160 = vmatprep.subr.bf16.mxu0 0
        %3161 = vmatpush1.bf16.msra.mxu0 %v3155
        %3162 = vmatprep.subr.bf16.mxu0 0
        %3163 = vmatpush1.bf16.msra.mxu0 0
        %3164 = vmatprep.subr.bf16.mxu0 0
        %3165 = vmatpush1.bf16.msra.mxu0 0
        %3166 = vmatprep.subr.bf16.mxu0 0
        %3167 = vmatpush1.bf16.msra.mxu0 0
        %3168 = vmatprep.subr.bf16.mxu0 0
        %3169 = vmatpush1.bf16.msra.mxu0 0
        %3170 = vmatprep.subr.bf16.mxu0 0
        %3171 = vmatpush1.bf16.msra.mxu0 0
        %3172 = vmatprep.subr.bf16.mxu0 0
        %3173 = vmatpush1.bf16.msra.mxu0 0
        %3174 = vmatprep.subr.bf16.mxu0 0
        %3175 = vmatpush1.bf16.msra.mxu0 0
        %3176 = vmatprep.subr.bf16.mxu0 0
        %3177 = vmatpush1.bf16.msra.mxu0 0
        %3178 = vmatprep.subr.bf16.mxu0 0
        %3179 = vmatpush1.bf16.msra.mxu0 0
        %3180 = vmatprep.subr.bf16.mxu0 0
        %3181 = vmatpush1.bf16.msra.mxu0 0
        %3182 = vmatprep.subr.bf16.mxu0 0
        %3183 = vmatpush1.bf16.msra.mxu0 0
        %3184 = vmatprep.subr.bf16.mxu0 0
        %3185 = vmatpush1.bf16.msra.mxu0 0
        %3186 = vmatprep.subr.bf16.mxu0 0
        %3187 = vmatpush1.bf16.msra.mxu0 0
        %3188 = vmatprep.subr.bf16.mxu0 0
        %3189 = vmatpush1.bf16.msra.mxu0 0
        %3190 = vmatprep.subr.bf16.mxu0 0
        %3191 = vmatpush1.bf16.msra.mxu0 0
        %3192 = vmatprep.mubr.bf16.mxu0 0
        %3193 = vmatmul.mubr.bf16.gmra.mrb[0].mxu0 %v2762
        %v3194 = vpop.f32.mrb[0].mxu0
        %v3195 = vadd.f32 0.0, %v3194
        %v3196 = vpop.f32.mrb[0].mxu0
        %v3197 = vpop.f32.mrb[0].mxu0
        %v3198 = vadd.f32 0.0, %v3197
        %v3199 = vpop.f32.mrb[0].mxu0
        %3200 = vmatprep.mubr.bf16.mxu0 0
        %3201 = vmatmul.mubr.bf16.gmra.mrb[0].mxu0 %v2765
        %v3202 = vpop.f32.mrb[0].mxu0
        %v3203 = vadd.f32 0.0, %v3202
        %v3204 = vpop.f32.mrb[0].mxu0
        %v3205 = vpop.f32.mrb[0].mxu0
        %v3206 = vadd.f32 0.0, %v3205
        %v3207 = vpop.f32.mrb[0].mxu0
        %3208 = vmatprep.mubr.bf16.mxu0 0
        %3209 = vmatmul.mubr.bf16.gmra.mrb[0].mxu0 %v2768
        %v3210 = vpop.f32.mrb[0].mxu0
        %v3211 = vadd.f32 0.0, %v3210
        %v3212 = vpop.f32.mrb[0].mxu0
        %v3213 = vpop.f32.mrb[0].mxu0
        %v3214 = vadd.f32 0.0, %v3213
        %v3215 = vpop.f32.mrb[0].mxu0
        %3216 = vmatprep.mubr.bf16.mxu0 0
        %3217 = vmatmul.mubr.bf16.gmra.mrb[0].mxu0 %v2771
        %v3218 = vpop.f32.mrb[0].mxu0
        %v3219 = vadd.f32 0.0, %v3218
        %v3220 = vpop.f32.mrb[0].mxu0
        %v3221 = vpop.f32.mrb[0].mxu0
        %v3222 = vadd.f32 0.0, %v3221
        %v3223 = vpop.f32.mrb[0].mxu0
        %3224 = vmatprep.mubr.bf16.mxu0 0
        %3225 = vmatmul.mubr.bf16.gmra.mrb[0].mxu0 %v2774
        %v3226 = vpop.f32.mrb[0].mxu0
        %v3227 = vadd.f32 0.0, %v3226
        %v3228 = vpop.f32.mrb[0].mxu0
        %v3229 = vpop.f32.mrb[0].mxu0
        %v3230 = vadd.f32 0.0, %v3229
        %v3231 = vpop.f32.mrb[0].mxu0
        %3232 = vmatprep.mubr.bf16.mxu0 0
        %3233 = vmatmul.mubr.bf16.gmra.mrb[0].mxu0 %v2777
        %v3234 = vpop.f32.mrb[0].mxu0
        %v3235 = vadd.f32 0.0, %v3234
        %v3236 = vpop.f32.mrb[0].mxu0
        %v3237 = vpop.f32.mrb[0].mxu0
        %v3238 = vadd.f32 0.0, %v3237
        %v3239 = vpop.f32.mrb[0].mxu0
        %3240 = vmatprep.mubr.bf16.mxu0 0
        %3241 = vmatmul.mubr.bf16.gmra.mrb[0].mxu0 %v2780
        %v3242 = vpop.f32.mrb[0].mxu0
        %v3243 = vadd.f32 0.0, %v3242
        %v3244 = vpop.f32.mrb[0].mxu0
        %v3245 = vpop.f32.mrb[0].mxu0
        %v3246 = vadd.f32 0.0, %v3245
        %v3247 = vpop.f32.mrb[0].mxu0
        %3248 = vmatprep.mubr.bf16.mxu0 0
        %3249 = vmatmul.mubr.bf16.gmra.mrb[0].mxu0 %v2783
        %v3250 = vpop.f32.mrb[0].mxu0
        %v3251 = vadd.f32 0.0, %v3250
        %v3252 = vpop.f32.mrb[0].mxu0
        %v3253 = vpop.f32.mrb[0].mxu0
        %v3254 = vadd.f32 0.0, %v3253
        %v3255 = vpop.f32.mrb[0].mxu0
        %3256 = vmatprep.mubr.bf16.mxu0 0
        %3257 = vmatmul.mubr.bf16.gmra.mrb[0].mxu0 %v2786
        %v3258 = vpop.f32.mrb[0].mxu0
        %v3259 = vadd.f32 0.0, %v3258
        %v3260 = vpop.f32.mrb[0].mxu0
        %v3261 = vpop.f32.mrb[0].mxu0
        %v3262 = vadd.f32 0.0, %v3261
        %v3263 = vpop.f32.mrb[0].mxu0
        %3264 = vmatprep.mubr.bf16.mxu0 0
        %3265 = vmatmul.mubr.bf16.gmra.mrb[0].mxu0 %v3158
        %v3266 = vpop.f32.mrb[0].mxu0
        %v3267 = vadd.f32 0.0, %v3266
        %v3268 = vpop.f32.mrb[0].mxu0
        %v3269 = vpop.f32.mrb[0].mxu0
        %v3270 = vadd.f32 0.0, %v3269
        %v3271 = vpop.f32.mrb[0].mxu0
        %3272 = vdwg.mxu0
        %v3273 = vadd.f32 %v3130, %v3195
        %v3274 = vadd.f32 %v3131, %v3198
        %v3275 = vadd.f32 %v3132, %v3203
        %v3276 = vadd.f32 %v3133, %v3206
        %v3277 = vadd.f32 %v3134, %v3211
        %v3278 = vadd.f32 %v3135, %v3214
        %v3279 = vadd.f32 %v3136, %v3219
        %v3280 = vadd.f32 %v3137, %v3222
        %v3281 = vadd.f32 %v3138, %v3227
        %v3282 = vadd.f32 %v3139, %v3230
        %v3283 = vadd.f32 %v3140, %v3235
        %v3284 = vadd.f32 %v3141, %v3238
        %v3285 = vadd.f32 %v3142, %v3243
        %v3286 = vadd.f32 %v3143, %v3246
        %v3287 = vadd.f32 %v3144, %v3251
        %v3288 = vadd.f32 %v3145, %v3254
        %v3289 = vadd.f32 %v3146, %v3259
        %v3290 = vadd.f32 %v3147, %v3262
        %v3291 = vadd.f32 %v3148, %v3267
        %v3292 = vadd.f32 %v3149, %v3270
        %v3295 = vrot.slane %v2459, 1
        %v3296 = vrot.slane %v2409, 1
        %v3297 = vsel %vm489, %v3295, %v3296
        %v3298 = vrot.slane %v2471, 1
        %v3299 = vsel %vm489, %v3296, %v3298
        %v3302 = vpack.c.bf16 %v3299, %v3297
        %v3305 = vunpack.c.l.b16 %v2481
        %v3306 = vunpack.c.l.b16 %v2482
        %v3307 = vpack.c.b16 %v3306, %v3305
        %v3310 = vsel %vm2608, %v3302, 0
        %3312 = vmatprep.subr.bf16.mxu0 0
        %3313 = vmatpush1.bf16.msra.mxu0 %v3307
        %3314 = vmatprep.subr.bf16.mxu0 0
        %3315 = vmatpush1.bf16.msra.mxu0 0
        %3316 = vmatprep.subr.bf16.mxu0 0
        %3317 = vmatpush1.bf16.msra.mxu0 0
        %3318 = vmatprep.subr.bf16.mxu0 0
        %3319 = vmatpush1.bf16.msra.mxu0 0
        %3320 = vmatprep.subr.bf16.mxu0 0
        %3321 = vmatpush1.bf16.msra.mxu0 0
        %3322 = vmatprep.subr.bf16.mxu0 0
        %3323 = vmatpush1.bf16.msra.mxu0 0
        %3324 = vmatprep.subr.bf16.mxu0 0
        %3325 = vmatpush1.bf16.msra.mxu0 0
        %3326 = vmatprep.subr.bf16.mxu0 0
        %3327 = vmatpush1.bf16.msra.mxu0 0
        %3328 = vmatprep.subr.bf16.mxu0 0
        %3329 = vmatpush1.bf16.msra.mxu0 0
        %3330 = vmatprep.subr.bf16.mxu0 0
        %3331 = vmatpush1.bf16.msra.mxu0 0
        %3332 = vmatprep.subr.bf16.mxu0 0
        %3333 = vmatpush1.bf16.msra.mxu0 0
        %3334 = vmatprep.subr.bf16.mxu0 0
        %3335 = vmatpush1.bf16.msra.mxu0 0
        %3336 = vmatprep.subr.bf16.mxu0 0
        %3337 = vmatpush1.bf16.msra.mxu0 0
        %3338 = vmatprep.subr.bf16.mxu0 0
        %3339 = vmatpush1.bf16.msra.mxu0 0
        %3340 = vmatprep.subr.bf16.mxu0 0
        %3341 = vmatpush1.bf16.msra.mxu0 0
        %3342 = vmatprep.subr.bf16.mxu0 0
        %3343 = vmatpush1.bf16.msra.mxu0 0
        %3344 = vmatprep.mubr.bf16.mxu0 0
        %3345 = vmatmul.mubr.bf16.gmra.mrb[0].mxu0 %v2613
        %v3346 = vpop.f32.mrb[0].mxu0
        %v3347 = vadd.f32 0.0, %v3346
        %v3348 = vpop.f32.mrb[0].mxu0
        %v3349 = vpop.f32.mrb[0].mxu0
        %v3350 = vadd.f32 0.0, %v3349
        %v3351 = vpop.f32.mrb[0].mxu0
        %3352 = vmatprep.mubr.bf16.mxu0 0
        %3353 = vmatmul.mubr.bf16.gmra.mrb[0].mxu0 %v2616
        %v3354 = vpop.f32.mrb[0].mxu0
        %v3355 = vadd.f32 0.0, %v3354
        %v3356 = vpop.f32.mrb[0].mxu0
        %v3357 = vpop.f32.mrb[0].mxu0
        %v3358 = vadd.f32 0.0, %v3357
        %v3359 = vpop.f32.mrb[0].mxu0
        %3360 = vmatprep.mubr.bf16.mxu0 0
        %3361 = vmatmul.mubr.bf16.gmra.mrb[0].mxu0 %v2619
        %v3362 = vpop.f32.mrb[0].mxu0
        %v3363 = vadd.f32 0.0, %v3362
        %v3364 = vpop.f32.mrb[0].mxu0
        %v3365 = vpop.f32.mrb[0].mxu0
        %v3366 = vadd.f32 0.0, %v3365
        %v3367 = vpop.f32.mrb[0].mxu0
        %3368 = vmatprep.mubr.bf16.mxu0 0
        %3369 = vmatmul.mubr.bf16.gmra.mrb[0].mxu0 %v2622
        %v3370 = vpop.f32.mrb[0].mxu0
        %v3371 = vadd.f32 0.0, %v3370
        %v3372 = vpop.f32.mrb[0].mxu0
        %v3373 = vpop.f32.mrb[0].mxu0
        %v3374 = vadd.f32 0.0, %v3373
        %v3375 = vpop.f32.mrb[0].mxu0
        %3376 = vmatprep.mubr.bf16.mxu0 0
        %3377 = vmatmul.mubr.bf16.gmra.mrb[0].mxu0 %v2625
        %v3378 = vpop.f32.mrb[0].mxu0
        %v3379 = vadd.f32 0.0, %v3378
        %v3380 = vpop.f32.mrb[0].mxu0
        %v3381 = vpop.f32.mrb[0].mxu0
        %v3382 = vadd.f32 0.0, %v3381
        %v3383 = vpop.f32.mrb[0].mxu0
        %3384 = vmatprep.mubr.bf16.mxu0 0
        %3385 = vmatmul.mubr.bf16.gmra.mrb[0].mxu0 %v2628
        %v3386 = vpop.f32.mrb[0].mxu0
        %v3387 = vadd.f32 0.0, %v3386
        %v3388 = vpop.f32.mrb[0].mxu0
        %v3389 = vpop.f32.mrb[0].mxu0
        %v3390 = vadd.f32 0.0, %v3389
        %v3391 = vpop.f32.mrb[0].mxu0
        %3392 = vmatprep.mubr.bf16.mxu0 0
        %3393 = vmatmul.mubr.bf16.gmra.mrb[0].mxu0 %v2631
        %v3394 = vpop.f32.mrb[0].mxu0
        %v3395 = vadd.f32 0.0, %v3394
        %v3396 = vpop.f32.mrb[0].mxu0
        %v3397 = vpop.f32.mrb[0].mxu0
        %v3398 = vadd.f32 0.0, %v3397
        %v3399 = vpop.f32.mrb[0].mxu0
        %3400 = vmatprep.mubr.bf16.mxu0 0
        %3401 = vmatmul.mubr.bf16.gmra.mrb[0].mxu0 %v2634
        %v3402 = vpop.f32.mrb[0].mxu0
        %v3403 = vadd.f32 0.0, %v3402
        %v3404 = vpop.f32.mrb[0].mxu0
        %v3405 = vpop.f32.mrb[0].mxu0
        %v3406 = vadd.f32 0.0, %v3405
        %v3407 = vpop.f32.mrb[0].mxu0
        %3408 = vmatprep.mubr.bf16.mxu0 0
        %3409 = vmatmul.mubr.bf16.gmra.mrb[0].mxu0 %v2637
        %v3410 = vpop.f32.mrb[0].mxu0
        %v3411 = vadd.f32 0.0, %v3410
        %v3412 = vpop.f32.mrb[0].mxu0
        %v3413 = vpop.f32.mrb[0].mxu0
        %v3414 = vadd.f32 0.0, %v3413
        %v3415 = vpop.f32.mrb[0].mxu0
        %3416 = vmatprep.mubr.bf16.mxu0 0
        %3417 = vmatmul.mubr.bf16.gmra.mrb[0].mxu0 %v3310
        %v3418 = vpop.f32.mrb[0].mxu0
        %v3419 = vadd.f32 0.0, %v3418
        %v3420 = vpop.f32.mrb[0].mxu0
        %v3421 = vpop.f32.mrb[0].mxu0
        %v3422 = vadd.f32 0.0, %v3421
        %v3423 = vpop.f32.mrb[0].mxu0
        %3424 = vdwg.mxu0
        %v3425 = vadd.f32 %v3273, %v3347
        %v3426 = vadd.f32 %v3274, %v3350
        %v3427 = vadd.f32 %v3275, %v3355
        %v3428 = vadd.f32 %v3276, %v3358
        %v3429 = vadd.f32 %v3277, %v3363
        %v3430 = vadd.f32 %v3278, %v3366
        %v3431 = vadd.f32 %v3279, %v3371
        %v3432 = vadd.f32 %v3280, %v3374
        %v3433 = vadd.f32 %v3281, %v3379
        %v3434 = vadd.f32 %v3282, %v3382
        %v3435 = vadd.f32 %v3283, %v3387
        %v3436 = vadd.f32 %v3284, %v3390
        %v3437 = vadd.f32 %v3285, %v3395
        %v3438 = vadd.f32 %v3286, %v3398
        %v3439 = vadd.f32 %v3287, %v3403
        %v3440 = vadd.f32 %v3288, %v3406
        %v3441 = vadd.f32 %v3289, %v3411
        %v3442 = vadd.f32 %v3290, %v3414
        %v3443 = vadd.f32 %v3291, %v3419
        %v3444 = vadd.f32 %v3292, %v3422
        %v3445 = vrot.slane %v2459, 2
        %v3446 = vrot.slane %v2409, 2
        %v3447 = vsel %vm927, %v3445, %v3446
        %v3448 = vrot.slane %v2471, 2
        %v3449 = vsel %vm927, %v3446, %v3448
        %v3452 = vpack.c.bf16 %v3449, %v3447
        %v3455 = vunpack.c.l.b16 %v2483
        %v3456 = vunpack.c.l.b16 %v2484
        %v3457 = vpack.c.b16 %v3456, %v3455
        %v3460 = vsel %vm2608, %v3452, 0
        %3462 = vmatprep.subr.bf16.mxu0 0
        %3463 = vmatpush1.bf16.msra.mxu0 %v3457
        %3464 = vmatprep.subr.bf16.mxu0 0
        %3465 = vmatpush1.bf16.msra.mxu0 0
        %3466 = vmatprep.subr.bf16.mxu0 0
        %3467 = vmatpush1.bf16.msra.mxu0 0
        %3468 = vmatprep.subr.bf16.mxu0 0
        %3469 = vmatpush1.bf16.msra.mxu0 0
        %3470 = vmatprep.subr.bf16.mxu0 0
        %3471 = vmatpush1.bf16.msra.mxu0 0
        %3472 = vmatprep.subr.bf16.mxu0 0
        %3473 = vmatpush1.bf16.msra.mxu0 0
        %3474 = vmatprep.subr.bf16.mxu0 0
        %3475 = vmatpush1.bf16.msra.mxu0 0
        %3476 = vmatprep.subr.bf16.mxu0 0
        %3477 = vmatpush1.bf16.msra.mxu0 0
        %3478 = vmatprep.subr.bf16.mxu0 0
        %3479 = vmatpush1.bf16.msra.mxu0 0
        %3480 = vmatprep.subr.bf16.mxu0 0
        %3481 = vmatpush1.bf16.msra.mxu0 0
        %3482 = vmatprep.subr.bf16.mxu0 0
        %3483 = vmatpush1.bf16.msra.mxu0 0
        %3484 = vmatprep.subr.bf16.mxu0 0
        %3485 = vmatpush1.bf16.msra.mxu0 0
        %3486 = vmatprep.subr.bf16.mxu0 0
        %3487 = vmatpush1.bf16.msra.mxu0 0
        %3488 = vmatprep.subr.bf16.mxu0 0
        %3489 = vmatpush1.bf16.msra.mxu0 0
        %3490 = vmatprep.subr.bf16.mxu0 0
        %3491 = vmatpush1.bf16.msra.mxu0 0
        %3492 = vmatprep.subr.bf16.mxu0 0
        %3493 = vmatpush1.bf16.msra.mxu0 0
        %3494 = vmatprep.mubr.bf16.mxu0 0
        %3495 = vmatmul.mubr.bf16.gmra.mrb[0].mxu0 %v2991
        %v3496 = vpop.f32.mrb[0].mxu0
        %v3497 = vadd.f32 0.0, %v3496
        %v3498 = vpop.f32.mrb[0].mxu0
        %v3499 = vpop.f32.mrb[0].mxu0
        %v3500 = vadd.f32 0.0, %v3499
        %v3501 = vpop.f32.mrb[0].mxu0
        %3502 = vmatprep.mubr.bf16.mxu0 0
        %3503 = vmatmul.mubr.bf16.gmra.mrb[0].mxu0 %v2994
        %v3504 = vpop.f32.mrb[0].mxu0
        %v3505 = vadd.f32 0.0, %v3504
        %v3506 = vpop.f32.mrb[0].mxu0
        %v3507 = vpop.f32.mrb[0].mxu0
        %v3508 = vadd.f32 0.0, %v3507
        %v3509 = vpop.f32.mrb[0].mxu0
        %3510 = vmatprep.mubr.bf16.mxu0 0
        %3511 = vmatmul.mubr.bf16.gmra.mrb[0].mxu0 %v2997
        %v3512 = vpop.f32.mrb[0].mxu0
        %v3513 = vadd.f32 0.0, %v3512
        %v3514 = vpop.f32.mrb[0].mxu0
        %v3515 = vpop.f32.mrb[0].mxu0
        %v3516 = vadd.f32 0.0, %v3515
        %v3517 = vpop.f32.mrb[0].mxu0
        %3518 = vmatprep.mubr.bf16.mxu0 0
        %3519 = vmatmul.mubr.bf16.gmra.mrb[0].mxu0 %v3000
        %v3520 = vpop.f32.mrb[0].mxu0
        %v3521 = vadd.f32 0.0, %v3520
        %v3522 = vpop.f32.mrb[0].mxu0
        %v3523 = vpop.f32.mrb[0].mxu0
        %v3524 = vadd.f32 0.0, %v3523
        %v3525 = vpop.f32.mrb[0].mxu0
        %3526 = vmatprep.mubr.bf16.mxu0 0
        %3527 = vmatmul.mubr.bf16.gmra.mrb[0].mxu0 %v3003
        %v3528 = vpop.f32.mrb[0].mxu0
        %v3529 = vadd.f32 0.0, %v3528
        %v3530 = vpop.f32.mrb[0].mxu0
        %v3531 = vpop.f32.mrb[0].mxu0
        %v3532 = vadd.f32 0.0, %v3531
        %v3533 = vpop.f32.mrb[0].mxu0
        %3534 = vmatprep.mubr.bf16.mxu0 0
        %3535 = vmatmul.mubr.bf16.gmra.mrb[0].mxu0 %v3006
        %v3536 = vpop.f32.mrb[0].mxu0
        %v3537 = vadd.f32 0.0, %v3536
        %v3538 = vpop.f32.mrb[0].mxu0
        %v3539 = vpop.f32.mrb[0].mxu0
        %v3540 = vadd.f32 0.0, %v3539
        %v3541 = vpop.f32.mrb[0].mxu0
        %3542 = vmatprep.mubr.bf16.mxu0 0
        %3543 = vmatmul.mubr.bf16.gmra.mrb[0].mxu0 %v3009
        %v3544 = vpop.f32.mrb[0].mxu0
        %v3545 = vadd.f32 0.0, %v3544
        %v3546 = vpop.f32.mrb[0].mxu0
        %v3547 = vpop.f32.mrb[0].mxu0
        %v3548 = vadd.f32 0.0, %v3547
        %v3549 = vpop.f32.mrb[0].mxu0
        %3550 = vmatprep.mubr.bf16.mxu0 0
        %3551 = vmatmul.mubr.bf16.gmra.mrb[0].mxu0 %v3012
        %v3552 = vpop.f32.mrb[0].mxu0
        %v3553 = vadd.f32 0.0, %v3552
        %v3554 = vpop.f32.mrb[0].mxu0
        %v3555 = vpop.f32.mrb[0].mxu0
        %v3556 = vadd.f32 0.0, %v3555
        %v3557 = vpop.f32.mrb[0].mxu0
        %3558 = vmatprep.mubr.bf16.mxu0 0
        %3559 = vmatmul.mubr.bf16.gmra.mrb[0].mxu0 %v3015
        %v3560 = vpop.f32.mrb[0].mxu0
        %v3561 = vadd.f32 0.0, %v3560
        %v3562 = vpop.f32.mrb[0].mxu0
        %v3563 = vpop.f32.mrb[0].mxu0
        %v3564 = vadd.f32 0.0, %v3563
        %v3565 = vpop.f32.mrb[0].mxu0
        %3566 = vmatprep.mubr.bf16.mxu0 0
        %3567 = vmatmul.mubr.bf16.gmra.mrb[0].mxu0 %v3460
        %v3568 = vpop.f32.mrb[0].mxu0
        %v3569 = vadd.f32 0.0, %v3568
        %v3570 = vpop.f32.mrb[0].mxu0
        %v3571 = vpop.f32.mrb[0].mxu0
        %v3572 = vadd.f32 0.0, %v3571
        %v3573 = vpop.f32.mrb[0].mxu0
        %3574 = vdwg.mxu0
        %v3575 = vadd.f32 %v3425, %v3497
        %v3576 = vadd.f32 %v3426, %v3500
        %v3577 = vadd.f32 %v3427, %v3505
        %v3578 = vadd.f32 %v3428, %v3508
        %v3579 = vadd.f32 %v3429, %v3513
        %v3580 = vadd.f32 %v3430, %v3516
        %v3581 = vadd.f32 %v3431, %v3521
        %v3582 = vadd.f32 %v3432, %v3524
        %v3583 = vadd.f32 %v3433, %v3529
        %v3584 = vadd.f32 %v3434, %v3532
        %v3585 = vadd.f32 %v3435, %v3537
        %v3586 = vadd.f32 %v3436, %v3540
        %v3587 = vadd.f32 %v3437, %v3545
        %v3588 = vadd.f32 %v3438, %v3548
        %v3589 = vadd.f32 %v3439, %v3553
        %v3590 = vadd.f32 %v3440, %v3556
        %v3591 = vadd.f32 %v3441, %v3561
        %v3592 = vadd.f32 %v3442, %v3564
        %v3593 = vadd.f32 %v3443, %v3569
        %v3594 = vadd.f32 %v3444, %v3572
        %v3595 = vpack.c.bf16 %v2412, %v2460
        %v3598 = vunpack.c.l.b16 %v2485
        %v3599 = vunpack.c.l.b16 %v2486
        %v3600 = vpack.c.b16 %v3599, %v3598
        %v3603 = vsel %vm2608, %v3595, 0
        %3605 = vmatprep.subr.bf16.mxu0 0
        %3606 = vmatpush1.bf16.msra.mxu0 %v3600
        %3607 = vmatprep.subr.bf16.mxu0 0
        %3608 = vmatpush1.bf16.msra.mxu0 0
        %3609 = vmatprep.subr.bf16.mxu0 0
        %3610 = vmatpush1.bf16.msra.mxu0 0
        %3611 = vmatprep.subr.bf16.mxu0 0
        %3612 = vmatpush1.bf16.msra.mxu0 0
        %3613 = vmatprep.subr.bf16.mxu0 0
        %3614 = vmatpush1.bf16.msra.mxu0 0
        %3615 = vmatprep.subr.bf16.mxu0 0
        %3616 = vmatpush1.bf16.msra.mxu0 0
        %3617 = vmatprep.subr.bf16.mxu0 0
        %3618 = vmatpush1.bf16.msra.mxu0 0
        %3619 = vmatprep.subr.bf16.mxu0 0
        %3620 = vmatpush1.bf16.msra.mxu0 0
        %3621 = vmatprep.subr.bf16.mxu0 0
        %3622 = vmatpush1.bf16.msra.mxu0 0
        %3623 = vmatprep.subr.bf16.mxu0 0
        %3624 = vmatpush1.bf16.msra.mxu0 0
        %3625 = vmatprep.subr.bf16.mxu0 0
        %3626 = vmatpush1.bf16.msra.mxu0 0
        %3627 = vmatprep.subr.bf16.mxu0 0
        %3628 = vmatpush1.bf16.msra.mxu0 0
        %3629 = vmatprep.subr.bf16.mxu0 0
        %3630 = vmatpush1.bf16.msra.mxu0 0
        %3631 = vmatprep.subr.bf16.mxu0 0
        %3632 = vmatpush1.bf16.msra.mxu0 0
        %3633 = vmatprep.subr.bf16.mxu0 0
        %3634 = vmatpush1.bf16.msra.mxu0 0
        %3635 = vmatprep.subr.bf16.mxu0 0
        %3636 = vmatpush1.bf16.msra.mxu0 0
        %3637 = vmatprep.mubr.bf16.mxu0 0
        %3638 = vmatmul.mubr.bf16.gmra.mrb[0].mxu0 %v2765
        %v3639 = vpop.f32.mrb[0].mxu0
        %v3640 = vadd.f32 0.0, %v3639
        %v3641 = vpop.f32.mrb[0].mxu0
        %v3642 = vpop.f32.mrb[0].mxu0
        %v3643 = vadd.f32 0.0, %v3642
        %v3644 = vpop.f32.mrb[0].mxu0
        %3645 = vmatprep.mubr.bf16.mxu0 0
        %3646 = vmatmul.mubr.bf16.gmra.mrb[0].mxu0 %v2768
        %v3647 = vpop.f32.mrb[0].mxu0
        %v3648 = vadd.f32 0.0, %v3647
        %v3649 = vpop.f32.mrb[0].mxu0
        %v3650 = vpop.f32.mrb[0].mxu0
        %v3651 = vadd.f32 0.0, %v3650
        %v3652 = vpop.f32.mrb[0].mxu0
        %3653 = vmatprep.mubr.bf16.mxu0 0
        %3654 = vmatmul.mubr.bf16.gmra.mrb[0].mxu0 %v2771
        %v3655 = vpop.f32.mrb[0].mxu0
        %v3656 = vadd.f32 0.0, %v3655
        %v3657 = vpop.f32.mrb[0].mxu0
        %v3658 = vpop.f32.mrb[0].mxu0
        %v3659 = vadd.f32 0.0, %v3658
        %v3660 = vpop.f32.mrb[0].mxu0
        %3661 = vmatprep.mubr.bf16.mxu0 0
        %3662 = vmatmul.mubr.bf16.gmra.mrb[0].mxu0 %v2774
        %v3663 = vpop.f32.mrb[0].mxu0
        %v3664 = vadd.f32 0.0, %v3663
        %v3665 = vpop.f32.mrb[0].mxu0
        %v3666 = vpop.f32.mrb[0].mxu0
        %v3667 = vadd.f32 0.0, %v3666
        %v3668 = vpop.f32.mrb[0].mxu0
        %3669 = vmatprep.mubr.bf16.mxu0 0
        %3670 = vmatmul.mubr.bf16.gmra.mrb[0].mxu0 %v2777
        %v3671 = vpop.f32.mrb[0].mxu0
        %v3672 = vadd.f32 0.0, %v3671
        %v3673 = vpop.f32.mrb[0].mxu0
        %v3674 = vpop.f32.mrb[0].mxu0
        %v3675 = vadd.f32 0.0, %v3674
        %v3676 = vpop.f32.mrb[0].mxu0
        %3677 = vmatprep.mubr.bf16.mxu0 0
        %3678 = vmatmul.mubr.bf16.gmra.mrb[0].mxu0 %v2780
        %v3679 = vpop.f32.mrb[0].mxu0
        %v3680 = vadd.f32 0.0, %v3679
        %v3681 = vpop.f32.mrb[0].mxu0
        %v3682 = vpop.f32.mrb[0].mxu0
        %v3683 = vadd.f32 0.0, %v3682
        %v3684 = vpop.f32.mrb[0].mxu0
        %3685 = vmatprep.mubr.bf16.mxu0 0
        %3686 = vmatmul.mubr.bf16.gmra.mrb[0].mxu0 %v2783
        %v3687 = vpop.f32.mrb[0].mxu0
        %v3688 = vadd.f32 0.0, %v3687
        %v3689 = vpop.f32.mrb[0].mxu0
        %v3690 = vpop.f32.mrb[0].mxu0
        %v3691 = vadd.f32 0.0, %v3690
        %v3692 = vpop.f32.mrb[0].mxu0
        %3693 = vmatprep.mubr.bf16.mxu0 0
        %3694 = vmatmul.mubr.bf16.gmra.mrb[0].mxu0 %v2786
        %v3695 = vpop.f32.mrb[0].mxu0
        %v3696 = vadd.f32 0.0, %v3695
        %v3697 = vpop.f32.mrb[0].mxu0
        %v3698 = vpop.f32.mrb[0].mxu0
        %v3699 = vadd.f32 0.0, %v3698
        %v3700 = vpop.f32.mrb[0].mxu0
        %3701 = vmatprep.mubr.bf16.mxu0 0
        %3702 = vmatmul.mubr.bf16.gmra.mrb[0].mxu0 %v3158
        %v3703 = vpop.f32.mrb[0].mxu0
        %v3704 = vadd.f32 0.0, %v3703
        %v3705 = vpop.f32.mrb[0].mxu0
        %v3706 = vpop.f32.mrb[0].mxu0
        %v3707 = vadd.f32 0.0, %v3706
        %v3708 = vpop.f32.mrb[0].mxu0
        %3709 = vmatprep.mubr.bf16.mxu0 0
        %3710 = vmatmul.mubr.bf16.gmra.mrb[0].mxu0 %v3603
        %v3711 = vpop.f32.mrb[0].mxu0
        %v3712 = vadd.f32 0.0, %v3711
        %v3713 = vpop.f32.mrb[0].mxu0
        %v3714 = vpop.f32.mrb[0].mxu0
        %v3715 = vadd.f32 0.0, %v3714
        %v3716 = vpop.f32.mrb[0].mxu0
        %3717 = vdwg.mxu0
        %v3718 = vadd.f32 %v3575, %v3640
        %v3719 = vadd.f32 %v3576, %v3643
        %v3720 = vadd.f32 %v3577, %v3648
        %v3721 = vadd.f32 %v3578, %v3651
        %v3722 = vadd.f32 %v3579, %v3656
        %v3723 = vadd.f32 %v3580, %v3659
        %v3724 = vadd.f32 %v3581, %v3664
        %v3725 = vadd.f32 %v3582, %v3667
        %v3726 = vadd.f32 %v3583, %v3672
        %v3727 = vadd.f32 %v3584, %v3675
        %v3728 = vadd.f32 %v3585, %v3680
        %v3729 = vadd.f32 %v3586, %v3683
        %v3730 = vadd.f32 %v3587, %v3688
        %v3731 = vadd.f32 %v3588, %v3691
        %v3732 = vadd.f32 %v3589, %v3696
        %v3733 = vadd.f32 %v3590, %v3699
        %v3734 = vadd.f32 %v3591, %v3704
        %v3735 = vadd.f32 %v3592, %v3707
        %v3736 = vadd.f32 %v3593, %v3712
        %v3737 = vadd.f32 %v3594, %v3715
        %v3740 = vrot.slane %v2460, 1
        %v3741 = vrot.slane %v2412, 1
        %v3742 = vsel %vm489, %v3740, %v3741
        %v3743 = vrot.slane %v2472, 1
        %v3744 = vsel %vm489, %v3741, %v3743
        %v3747 = vpack.c.bf16 %v3744, %v3742
        %v3750 = vunpack.c.l.b16 %v2487
        %v3751 = vunpack.c.l.b16 %v2488
        %v3752 = vpack.c.b16 %v3751, %v3750
        %v3755 = vsel %vm2608, %v3747, 0
        %3757 = vmatprep.subr.bf16.mxu0 0
        %3758 = vmatpush1.bf16.msra.mxu0 %v3752
        %3759 = vmatprep.subr.bf16.mxu0 0
        %3760 = vmatpush1.bf16.msra.mxu0 0
        %3761 = vmatprep.subr.bf16.mxu0 0
        %3762 = vmatpush1.bf16.msra.mxu0 0
        %3763 = vmatprep.subr.bf16.mxu0 0
        %3764 = vmatpush1.bf16.msra.mxu0 0
        %3765 = vmatprep.subr.bf16.mxu0 0
        %3766 = vmatpush1.bf16.msra.mxu0 0
        %3767 = vmatprep.subr.bf16.mxu0 0
        %3768 = vmatpush1.bf16.msra.mxu0 0
        %3769 = vmatprep.subr.bf16.mxu0 0
        %3770 = vmatpush1.bf16.msra.mxu0 0
        %3771 = vmatprep.subr.bf16.mxu0 0
        %3772 = vmatpush1.bf16.msra.mxu0 0
        %3773 = vmatprep.subr.bf16.mxu0 0
        %3774 = vmatpush1.bf16.msra.mxu0 0
        %3775 = vmatprep.subr.bf16.mxu0 0
        %3776 = vmatpush1.bf16.msra.mxu0 0
        %3777 = vmatprep.subr.bf16.mxu0 0
        %3778 = vmatpush1.bf16.msra.mxu0 0
        %3779 = vmatprep.subr.bf16.mxu0 0
        %3780 = vmatpush1.bf16.msra.mxu0 0
        %3781 = vmatprep.subr.bf16.mxu0 0
        %3782 = vmatpush1.bf16.msra.mxu0 0
        %3783 = vmatprep.subr.bf16.mxu0 0
        %3784 = vmatpush1.bf16.msra.mxu0 0
        %3785 = vmatprep.subr.bf16.mxu0 0
        %3786 = vmatpush1.bf16.msra.mxu0 0
        %3787 = vmatprep.subr.bf16.mxu0 0
        %3788 = vmatpush1.bf16.msra.mxu0 0
        %3789 = vmatprep.mubr.bf16.mxu0 0
        %3790 = vmatmul.mubr.bf16.gmra.mrb[0].mxu0 %v2616
        %v3791 = vpop.f32.mrb[0].mxu0
        %v3792 = vadd.f32 0.0, %v3791
        %v3793 = vpop.f32.mrb[0].mxu0
        %v3794 = vpop.f32.mrb[0].mxu0
        %v3795 = vadd.f32 0.0, %v3794
        %v3796 = vpop.f32.mrb[0].mxu0
        %3797 = vmatprep.mubr.bf16.mxu0 0
        %3798 = vmatmul.mubr.bf16.gmra.mrb[0].mxu0 %v2619
        %v3799 = vpop.f32.mrb[0].mxu0
        %v3800 = vadd.f32 0.0, %v3799
        %v3801 = vpop.f32.mrb[0].mxu0
        %v3802 = vpop.f32.mrb[0].mxu0
        %v3803 = vadd.f32 0.0, %v3802
        %v3804 = vpop.f32.mrb[0].mxu0
        %3805 = vmatprep.mubr.bf16.mxu0 0
        %3806 = vmatmul.mubr.bf16.gmra.mrb[0].mxu0 %v2622
        %v3807 = vpop.f32.mrb[0].mxu0
        %v3808 = vadd.f32 0.0, %v3807
        %v3809 = vpop.f32.mrb[0].mxu0
        %v3810 = vpop.f32.mrb[0].mxu0
        %v3811 = vadd.f32 0.0, %v3810
        %v3812 = vpop.f32.mrb[0].mxu0
        %3813 = vmatprep.mubr.bf16.mxu0 0
        %3814 = vmatmul.mubr.bf16.gmra.mrb[0].mxu0 %v2625
        %v3815 = vpop.f32.mrb[0].mxu0
        %v3816 = vadd.f32 0.0, %v3815
        %v3817 = vpop.f32.mrb[0].mxu0
        %v3818 = vpop.f32.mrb[0].mxu0
        %v3819 = vadd.f32 0.0, %v3818
        %v3820 = vpop.f32.mrb[0].mxu0
        %3821 = vmatprep.mubr.bf16.mxu0 0
        %3822 = vmatmul.mubr.bf16.gmra.mrb[0].mxu0 %v2628
        %v3823 = vpop.f32.mrb[0].mxu0
        %v3824 = vadd.f32 0.0, %v3823
        %v3825 = vpop.f32.mrb[0].mxu0
        %v3826 = vpop.f32.mrb[0].mxu0
        %v3827 = vadd.f32 0.0, %v3826
        %v3828 = vpop.f32.mrb[0].mxu0
        %3829 = vmatprep.mubr.bf16.mxu0 0
        %3830 = vmatmul.mubr.bf16.gmra.mrb[0].mxu0 %v2631
        %v3831 = vpop.f32.mrb[0].mxu0
        %v3832 = vadd.f32 0.0, %v3831
        %v3833 = vpop.f32.mrb[0].mxu0
        %v3834 = vpop.f32.mrb[0].mxu0
        %v3835 = vadd.f32 0.0, %v3834
        %v3836 = vpop.f32.mrb[0].mxu0
        %3837 = vmatprep.mubr.bf16.mxu0 0
        %3838 = vmatmul.mubr.bf16.gmra.mrb[0].mxu0 %v2634
        %v3839 = vpop.f32.mrb[0].mxu0
        %v3840 = vadd.f32 0.0, %v3839
        %v3841 = vpop.f32.mrb[0].mxu0
        %v3842 = vpop.f32.mrb[0].mxu0
        %v3843 = vadd.f32 0.0, %v3842
        %v3844 = vpop.f32.mrb[0].mxu0
        %3845 = vmatprep.mubr.bf16.mxu0 0
        %3846 = vmatmul.mubr.bf16.gmra.mrb[0].mxu0 %v2637
        %v3847 = vpop.f32.mrb[0].mxu0
        %v3848 = vadd.f32 0.0, %v3847
        %v3849 = vpop.f32.mrb[0].mxu0
        %v3850 = vpop.f32.mrb[0].mxu0
        %v3851 = vadd.f32 0.0, %v3850
        %v3852 = vpop.f32.mrb[0].mxu0
        %3853 = vmatprep.mubr.bf16.mxu0 0
        %3854 = vmatmul.mubr.bf16.gmra.mrb[0].mxu0 %v3310
        %v3855 = vpop.f32.mrb[0].mxu0
        %v3856 = vadd.f32 0.0, %v3855
        %v3857 = vpop.f32.mrb[0].mxu0
        %v3858 = vpop.f32.mrb[0].mxu0
        %v3859 = vadd.f32 0.0, %v3858
        %v3860 = vpop.f32.mrb[0].mxu0
        %3861 = vmatprep.mubr.bf16.mxu0 0
        %3862 = vmatmul.mubr.bf16.gmra.mrb[0].mxu0 %v3755
        %v3863 = vpop.f32.mrb[0].mxu0
        %v3864 = vadd.f32 0.0, %v3863
        %v3865 = vpop.f32.mrb[0].mxu0
        %v3866 = vpop.f32.mrb[0].mxu0
        %v3867 = vadd.f32 0.0, %v3866
        %v3868 = vpop.f32.mrb[0].mxu0
        %3869 = vdwg.mxu0
        %v3870 = vadd.f32 %v3718, %v3792
        %v3871 = vadd.f32 %v3719, %v3795
        %v3872 = vadd.f32 %v3720, %v3800
        %v3873 = vadd.f32 %v3721, %v3803
        %v3874 = vadd.f32 %v3722, %v3808
        %v3875 = vadd.f32 %v3723, %v3811
        %v3876 = vadd.f32 %v3724, %v3816
        %v3877 = vadd.f32 %v3725, %v3819
        %v3878 = vadd.f32 %v3726, %v3824
        %v3879 = vadd.f32 %v3727, %v3827
        %v3880 = vadd.f32 %v3728, %v3832
        %v3881 = vadd.f32 %v3729, %v3835
        %v3882 = vadd.f32 %v3730, %v3840
        %v3883 = vadd.f32 %v3731, %v3843
        %v3884 = vadd.f32 %v3732, %v3848
        %v3885 = vadd.f32 %v3733, %v3851
        %v3886 = vadd.f32 %v3734, %v3856
        %v3887 = vadd.f32 %v3735, %v3859
        %v3888 = vadd.f32 %v3736, %v3864
        %v3889 = vadd.f32 %v3737, %v3867
        %v3890 = vrot.slane %v2460, 2
        %v3891 = vrot.slane %v2412, 2
        %v3892 = vsel %vm927, %v3890, %v3891
        %v3893 = vrot.slane %v2472, 2
        %v3894 = vsel %vm927, %v3891, %v3893
        %v3897 = vpack.c.bf16 %v3894, %v3892
        %v3900 = vunpack.c.l.b16 %v2489
        %v3901 = vunpack.c.l.b16 %v2490
        %v3902 = vpack.c.b16 %v3901, %v3900
        %v3905 = vsel %vm2608, %v3897, 0
        %3907 = vmatprep.subr.bf16.mxu0 0
        %3908 = vmatpush1.bf16.msra.mxu0 %v3902
        %3909 = vmatprep.subr.bf16.mxu0 0
        %3910 = vmatpush1.bf16.msra.mxu0 0
        %3911 = vmatprep.subr.bf16.mxu0 0
        %3912 = vmatpush1.bf16.msra.mxu0 0
        %3913 = vmatprep.subr.bf16.mxu0 0
        %3914 = vmatpush1.bf16.msra.mxu0 0
        %3915 = vmatprep.subr.bf16.mxu0 0
        %3916 = vmatpush1.bf16.msra.mxu0 0
        %3917 = vmatprep.subr.bf16.mxu0 0
        %3918 = vmatpush1.bf16.msra.mxu0 0
        %3919 = vmatprep.subr.bf16.mxu0 0
        %3920 = vmatpush1.bf16.msra.mxu0 0
        %3921 = vmatprep.subr.bf16.mxu0 0
        %3922 = vmatpush1.bf16.msra.mxu0 0
        %3923 = vmatprep.subr.bf16.mxu0 0
        %3924 = vmatpush1.bf16.msra.mxu0 0
        %3925 = vmatprep.subr.bf16.mxu0 0
        %3926 = vmatpush1.bf16.msra.mxu0 0
        %3927 = vmatprep.subr.bf16.mxu0 0
        %3928 = vmatpush1.bf16.msra.mxu0 0
        %3929 = vmatprep.subr.bf16.mxu0 0
        %3930 = vmatpush1.bf16.msra.mxu0 0
        %3931 = vmatprep.subr.bf16.mxu0 0
        %3932 = vmatpush1.bf16.msra.mxu0 0
        %3933 = vmatprep.subr.bf16.mxu0 0
        %3934 = vmatpush1.bf16.msra.mxu0 0
        %3935 = vmatprep.subr.bf16.mxu0 0
        %3936 = vmatpush1.bf16.msra.mxu0 0
        %3937 = vmatprep.subr.bf16.mxu0 0
        %3938 = vmatpush1.bf16.msra.mxu0 0
        %3939 = vmatprep.mubr.bf16.mxu0 0
        %3940 = vmatmul.mubr.bf16.gmra.mrb[0].mxu0 %v2994
        %v3941 = vpop.f32.mrb[0].mxu0
        %v3942 = vadd.f32 0.0, %v3941
        %v3943 = vpop.f32.mrb[0].mxu0
        %v3944 = vpop.f32.mrb[0].mxu0
        %v3945 = vadd.f32 0.0, %v3944
        %v3946 = vpop.f32.mrb[0].mxu0
        %3947 = vmatprep.mubr.bf16.mxu0 0
        %3948 = vmatmul.mubr.bf16.gmra.mrb[0].mxu0 %v2997
        %v3949 = vpop.f32.mrb[0].mxu0
        %v3950 = vadd.f32 0.0, %v3949
        %v3951 = vpop.f32.mrb[0].mxu0
        %v3952 = vpop.f32.mrb[0].mxu0
        %v3953 = vadd.f32 0.0, %v3952
        %v3954 = vpop.f32.mrb[0].mxu0
        %3955 = vmatprep.mubr.bf16.mxu0 0
        %3956 = vmatmul.mubr.bf16.gmra.mrb[0].mxu0 %v3000
        %v3957 = vpop.f32.mrb[0].mxu0
        %v3958 = vadd.f32 0.0, %v3957
        %v3959 = vpop.f32.mrb[0].mxu0
        %v3960 = vpop.f32.mrb[0].mxu0
        %v3961 = vadd.f32 0.0, %v3960
        %v3962 = vpop.f32.mrb[0].mxu0
        %3963 = vmatprep.mubr.bf16.mxu0 0
        %3964 = vmatmul.mubr.bf16.gmra.mrb[0].mxu0 %v3003
        %v3965 = vpop.f32.mrb[0].mxu0
        %v3966 = vadd.f32 0.0, %v3965
        %v3967 = vpop.f32.mrb[0].mxu0
        %v3968 = vpop.f32.mrb[0].mxu0
        %v3969 = vadd.f32 0.0, %v3968
        %v3970 = vpop.f32.mrb[0].mxu0
        %3971 = vmatprep.mubr.bf16.mxu0 0
        %3972 = vmatmul.mubr.bf16.gmra.mrb[0].mxu0 %v3006
        %v3973 = vpop.f32.mrb[0].mxu0
        %v3974 = vadd.f32 0.0, %v3973
        %v3975 = vpop.f32.mrb[0].mxu0
        %v3976 = vpop.f32.mrb[0].mxu0
        %v3977 = vadd.f32 0.0, %v3976
        %v3978 = vpop.f32.mrb[0].mxu0
        %3979 = vmatprep.mubr.bf16.mxu0 0
        %3980 = vmatmul.mubr.bf16.gmra.mrb[0].mxu0 %v3009
        %v3981 = vpop.f32.mrb[0].mxu0
        %v3982 = vadd.f32 0.0, %v3981
        %v3983 = vpop.f32.mrb[0].mxu0
        %v3984 = vpop.f32.mrb[0].mxu0
        %v3985 = vadd.f32 0.0, %v3984
        %v3986 = vpop.f32.mrb[0].mxu0
        %3987 = vmatprep.mubr.bf16.mxu0 0
        %3988 = vmatmul.mubr.bf16.gmra.mrb[0].mxu0 %v3012
        %v3989 = vpop.f32.mrb[0].mxu0
        %v3990 = vadd.f32 0.0, %v3989
        %v3991 = vpop.f32.mrb[0].mxu0
        %v3992 = vpop.f32.mrb[0].mxu0
        %v3993 = vadd.f32 0.0, %v3992
        %v3994 = vpop.f32.mrb[0].mxu0
        %3995 = vmatprep.mubr.bf16.mxu0 0
        %3996 = vmatmul.mubr.bf16.gmra.mrb[0].mxu0 %v3015
        %v3997 = vpop.f32.mrb[0].mxu0
        %v3998 = vadd.f32 0.0, %v3997
        %v3999 = vpop.f32.mrb[0].mxu0
        %v4000 = vpop.f32.mrb[0].mxu0
        %v4001 = vadd.f32 0.0, %v4000
        %v4002 = vpop.f32.mrb[0].mxu0
        %4003 = vmatprep.mubr.bf16.mxu0 0
        %4004 = vmatmul.mubr.bf16.gmra.mrb[0].mxu0 %v3460
        %v4005 = vpop.f32.mrb[0].mxu0
        %v4006 = vadd.f32 0.0, %v4005
        %v4007 = vpop.f32.mrb[0].mxu0
        %v4008 = vpop.f32.mrb[0].mxu0
        %v4009 = vadd.f32 0.0, %v4008
        %v4010 = vpop.f32.mrb[0].mxu0
        %4011 = vmatprep.mubr.bf16.mxu0 0
        %4012 = vmatmul.mubr.bf16.gmra.mrb[0].mxu0 %v3905
        %v4013 = vpop.f32.mrb[0].mxu0
        %v4014 = vadd.f32 0.0, %v4013
        %v4015 = vpop.f32.mrb[0].mxu0
        %v4016 = vpop.f32.mrb[0].mxu0
        %v4017 = vadd.f32 0.0, %v4016
        %v4018 = vpop.f32.mrb[0].mxu0
        %4019 = vdwg.mxu0
        %v4020 = vadd.f32 %v3870, %v3942
        %v4021 = vadd.f32 %v3871, %v3945
        %v4022 = vadd.f32 %v3872, %v3950
        %v4023 = vadd.f32 %v3873, %v3953
        %v4024 = vadd.f32 %v3874, %v3958
        %v4025 = vadd.f32 %v3875, %v3961
        %v4026 = vadd.f32 %v3876, %v3966
        %v4027 = vadd.f32 %v3877, %v3969
        %v4028 = vadd.f32 %v3878, %v3974
        %v4029 = vadd.f32 %v3879, %v3977
        %v4030 = vadd.f32 %v3880, %v3982
        %v4031 = vadd.f32 %v3881, %v3985
        %v4032 = vadd.f32 %v3882, %v3990
        %v4033 = vadd.f32 %v3883, %v3993
        %v4034 = vadd.f32 %v3884, %v3998
        %v4035 = vadd.f32 %v3885, %v4001
        %v4036 = vadd.f32 %v3886, %v4006
        %v4037 = vadd.f32 %v3887, %v4009
        %v4038 = vadd.f32 %v3888, %v4014
        %v4039 = vadd.f32 %v3889, %v4017
        %v4041 = vlaneseq
        %v4042 = vshrl.u32 %v4041, 7
        %v4043 = vsub.s32 0, %v4042
        %v4044 = vrot.slane %v2491, %v4043
        %v4046 = vadd.f32 %v4020, %v4044
        %v4047 = vadd.f32 %v4021, %v4044
        %v4048 = vadd.f32 %v4022, %v4044
        %v4049 = vadd.f32 %v4023, %v4044
        %v4050 = vadd.f32 %v4024, %v4044
        %v4051 = vadd.f32 %v4025, %v4044
        %v4052 = vadd.f32 %v4026, %v4044
        %v4053 = vadd.f32 %v4027, %v4044
        %v4054 = vadd.f32 %v4028, %v4044
        %v4055 = vadd.f32 %v4029, %v4044
        %v4056 = vadd.f32 %v4030, %v4044
        %v4057 = vadd.f32 %v4031, %v4044
        %v4058 = vadd.f32 %v4032, %v4044
        %v4059 = vadd.f32 %v4033, %v4044
        %v4060 = vadd.f32 %v4034, %v4044
        %v4061 = vadd.f32 %v4035, %v4044
        %v4062 = vadd.f32 %v4036, %v4044
        %v4063 = vadd.f32 %v4037, %v4044
        %v4064 = vadd.f32 %v4038, %v4044
        %v4065 = vadd.f32 %v4039, %v4044
        %s4066 = ssub.s32 %s343, 1
        %v4067 = vstv %s4066
        %v4068 = vadd.s32 %v4067, %v2266
        %v4069 = vadd.s32 %v4067, %v2267
        %vm4070 = vcmp.ge.s32.totalorder %v4068, 0
        %vm4071 = vcmp.ge.s32.totalorder %v4069, 0
        %vm4072 = vcmp.lt.s32.totalorder %v4068, 16
        %vm4073 = vcmp.lt.s32.totalorder %v4069, 16
        %vm4074 = vmand %vm4070, %vm4072
        %vm4075 = vmand %vm4071, %vm4073
        %v4076 = vsel %vm4074, 1, 0
        %v4077 = vsel %vm4075, 1, 0
        %v4078 = vcvt.s32.f32 %v4076
        %v4079 = vcvt.s32.f32 %v4077
        %v4080 = vlaneseq
        %v4081 = vshrl.u32 %v4080, 7
        %v4082 = vsub.s32 0, %v4081
        %v4083 = vrot.slane %v4078, %v4082
        %v4084 = vlaneseq
        %v4085 = vshrl.u32 %v4084, 7
        %v4086 = vsub.s32 1, %v4085
        %v4087 = vrot.slane %v4078, %v4086
        %v4088 = vlaneseq
        %v4089 = vshrl.u32 %v4088, 7
        %v4090 = vsub.s32 2, %v4089
        %v4091 = vrot.slane %v4078, %v4090
        %v4092 = vlaneseq
        %v4093 = vshrl.u32 %v4092, 7
        %v4094 = vsub.s32 3, %v4093
        %v4095 = vrot.slane %v4078, %v4094
        %v4096 = vlaneseq
        %v4097 = vshrl.u32 %v4096, 7
        %v4098 = vsub.s32 4, %v4097
        %v4099 = vrot.slane %v4078, %v4098
        %v4100 = vlaneseq
        %v4101 = vshrl.u32 %v4100, 7
        %v4102 = vsub.s32 5, %v4101
        %v4103 = vrot.slane %v4078, %v4102
        %v4104 = vlaneseq
        %v4105 = vshrl.u32 %v4104, 7
        %v4106 = vsub.s32 6, %v4105
        %v4107 = vrot.slane %v4078, %v4106
        %v4108 = vlaneseq
        %v4109 = vshrl.u32 %v4108, 7
        %v4110 = vsub.s32 7, %v4109
        %v4111 = vrot.slane %v4078, %v4110
        %v4112 = vlaneseq
        %v4113 = vshrl.u32 %v4112, 7
        %v4114 = vsub.s32 0, %v4113
        %v4115 = vrot.slane %v4079, %v4114
        %v4116 = vlaneseq
        %v4117 = vshrl.u32 %v4116, 7
        %v4118 = vsub.s32 1, %v4117
        %v4119 = vrot.slane %v4079, %v4118
        %v4120 = vmul.f32 %v4046, %v4083
        %v4121 = vmul.f32 %v4047, %v4083
        %v4122 = vmul.f32 %v4048, %v4087
        %v4123 = vmul.f32 %v4049, %v4087
        %v4124 = vmul.f32 %v4050, %v4091
        %v4125 = vmul.f32 %v4051, %v4091
        %v4126 = vmul.f32 %v4052, %v4095
        %v4127 = vmul.f32 %v4053, %v4095
        %v4128 = vmul.f32 %v4054, %v4099
        %v4129 = vmul.f32 %v4055, %v4099
        %v4130 = vmul.f32 %v4056, %v4103
        %v4131 = vmul.f32 %v4057, %v4103
        %v4132 = vmul.f32 %v4058, %v4107
        %v4133 = vmul.f32 %v4059, %v4107
        %v4134 = vmul.f32 %v4060, %v4111
        %v4135 = vmul.f32 %v4061, %v4111
        %v4136 = vmul.f32 %v4062, %v4115
        %v4137 = vmul.f32 %v4063, %v4115
        %v4138 = vmul.f32 %v4064, %v4119
        %v4139 = vmul.f32 %v4065, %v4119
        %v4160 = vrot.slane %v4120, 7
        %v4161 = vrot.slane %v4121, 7
        %v4162 = vsel %vm623, %v4160, %v4161
        %v4163 = vrot.slane %v4122, 7
        %v4164 = vrot.slane %v4123, 7
        %v4165 = vsel %vm623, %v4163, %v4164
        %v4166 = vrot.slane %v4124, 7
        %v4167 = vrot.slane %v4125, 7
        %v4168 = vsel %vm623, %v4166, %v4167
        %v4169 = vrot.slane %v4126, 7
        %v4170 = vrot.slane %v4127, 7
        %v4171 = vsel %vm623, %v4169, %v4170
        %v4172 = vrot.slane %v4128, 7
        %v4173 = vrot.slane %v4129, 7
        %v4174 = vsel %vm623, %v4172, %v4173
        %v4175 = vrot.slane %v4130, 7
        %v4176 = vrot.slane %v4131, 7
        %v4177 = vsel %vm623, %v4175, %v4176
        %v4178 = vrot.slane %v4132, 7
        %v4179 = vrot.slane %v4133, 7
        %v4180 = vsel %vm623, %v4178, %v4179
        %v4181 = vrot.slane %v4134, 7
        %v4182 = vrot.slane %v4135, 7
        %v4183 = vsel %vm623, %v4181, %v4182
        %v4184 = vrot.slane %v4136, 7
        %v4185 = vrot.slane %v4137, 7
        %v4186 = vsel %vm623, %v4184, %v4185
        %v4187 = vrot.slane %v4138, 7
        %v4188 = vrot.slane %v4139, 7
        %v4189 = vsel %vm623, %v4187, %v4188
        %v4220 = vsel %vm623, 0.0, %v4160
        %v4221 = vsel %vm623, 0.0, %v4163
        %v4222 = vsel %vm623, 0.0, %v4166
        %v4223 = vsel %vm623, 0.0, %v4169
        %v4224 = vsel %vm623, 0.0, %v4172
        %v4225 = vsel %vm623, 0.0, %v4175
        %v4226 = vsel %vm623, 0.0, %v4178
        %v4227 = vsel %vm623, 0.0, %v4181
        %v4228 = vsel %vm623, 0.0, %v4184
        %v4229 = vsel %vm623, 0.0, %v4187
        %v4230 = vsel %vm623, %v4161, 0.0
        %v4231 = vsel %vm623, %v4164, 0.0
        %v4232 = vsel %vm623, %v4167, 0.0
        %v4233 = vsel %vm623, %v4170, 0.0
        %v4234 = vsel %vm623, %v4173, 0.0
        %v4235 = vsel %vm623, %v4176, 0.0
        %v4236 = vsel %vm623, %v4179, 0.0
        %v4237 = vsel %vm623, %v4182, 0.0
        %v4238 = vsel %vm623, %v4185, 0.0
        %v4239 = vsel %vm623, %v4188, 0.0
        %v4240 = vld [vmem:[%s5] sm:$0x7]
        %v4241 = vld [vmem:[%s5 + $0x4] sm:$0x7]
        %v4242 = vld [vmem:[%s5 + $0x8] sm:$0x7]
        %v4243 = vld [vmem:[%s5 + $0xc] sm:$0x7]
        %v4244 = vld [vmem:[%s5 + $0x10] sm:$0x7]
        %v4245 = vld [vmem:[%s5 + $0x14] sm:$0x7]
        %v4246 = vld [vmem:[%s5 + $0x18] sm:$0x7]
        %v4247 = vld [vmem:[%s5 + $0x1c] sm:$0x7]
        %v4248 = vld [vmem:[%s5 + $0x20] sm:$0x7]
        %v4249 = vld [vmem:[%s6] sm:$0x1]
        %v4250 = vpack.c.bf16 %v4162, %v4220
        %v4251 = vpack.c.bf16 %v4165, %v4221
        %v4252 = vpack.c.bf16 %v4168, %v4222
        %v4253 = vpack.c.bf16 %v4171, %v4223
        %v4254 = vpack.c.bf16 %v4174, %v4224
        %v4255 = vpack.c.bf16 %v4177, %v4225
        %v4256 = vpack.c.bf16 %v4180, %v4226
        %v4257 = vpack.c.bf16 %v4183, %v4227
        %v4274 = vrot.slane %v4220, 1
        %v4275 = vrot.slane %v4162, 1
        %v4276 = vsel %vm489, %v4274, %v4275
        %v4277 = vrot.slane %v4230, 1
        %v4278 = vsel %vm489, %v4275, %v4277
        %v4279 = vrot.slane %v4221, 1
        %v4280 = vrot.slane %v4165, 1
        %v4281 = vsel %vm489, %v4279, %v4280
        %v4282 = vrot.slane %v4231, 1
        %v4283 = vsel %vm489, %v4280, %v4282
        %v4284 = vrot.slane %v4222, 1
        %v4285 = vrot.slane %v4168, 1
        %v4286 = vsel %vm489, %v4284, %v4285
        %v4287 = vrot.slane %v4232, 1
        %v4288 = vsel %vm489, %v4285, %v4287
        %v4289 = vrot.slane %v4223, 1
        %v4290 = vrot.slane %v4171, 1
        %v4291 = vsel %vm489, %v4289, %v4290
        %v4292 = vrot.slane %v4233, 1
        %v4293 = vsel %vm489, %v4290, %v4292
        %v4294 = vrot.slane %v4224, 1
        %v4295 = vrot.slane %v4174, 1
        %v4296 = vsel %vm489, %v4294, %v4295
        %v4297 = vrot.slane %v4234, 1
        %v4298 = vsel %vm489, %v4295, %v4297
        %v4299 = vrot.slane %v4225, 1
        %v4300 = vrot.slane %v4177, 1
        %v4301 = vsel %vm489, %v4299, %v4300
        %v4302 = vrot.slane %v4235, 1
        %v4303 = vsel %vm489, %v4300, %v4302
        %v4304 = vrot.slane %v4226, 1
        %v4305 = vrot.slane %v4180, 1
        %v4306 = vsel %vm489, %v4304, %v4305
        %v4307 = vrot.slane %v4236, 1
        %v4308 = vsel %vm489, %v4305, %v4307
        %v4309 = vrot.slane %v4227, 1
        %v4310 = vrot.slane %v4183, 1
        %v4311 = vsel %vm489, %v4309, %v4310
        %v4312 = vrot.slane %v4237, 1
        %v4313 = vsel %vm489, %v4310, %v4312
        %v4330 = vpack.c.bf16 %v4278, %v4276
        %v4331 = vpack.c.bf16 %v4283, %v4281
        %v4332 = vpack.c.bf16 %v4288, %v4286
        %v4333 = vpack.c.bf16 %v4293, %v4291
        %v4334 = vpack.c.bf16 %v4298, %v4296
        %v4335 = vpack.c.bf16 %v4303, %v4301
        %v4336 = vpack.c.bf16 %v4308, %v4306
        %v4337 = vpack.c.bf16 %v4313, %v4311
        %vm4338 = vcmask 39936
        %v4340 = vsel %vm4338, %v4330, 0
        %v4343 = vsel %vm4338, %v4331, 0
        %v4346 = vsel %vm4338, %v4332, 0
        %v4349 = vsel %vm4338, %v4333, 0
        %v4352 = vsel %vm4338, %v4334, 0
        %v4355 = vsel %vm4338, %v4335, 0
        %v4358 = vsel %vm4338, %v4336, 0
        %v4361 = vsel %vm4338, %v4337, 0
        %vm4363 = vcmask 1042432
        %v4364 = vsel %vm624, 4294967295, 65535
        %v4365 = vsel %vm4363, %v4364, 0
        %v4367 = vand.u32 %v4241, %v4365
        %4369 = vmatprep.subr.bf16.mxu0 0
        %4370 = vmatpush1.bf16.msra.mxu0 %v4367
        %4371 = vmatprep.subr.bf16.mxu0 0
        %4372 = vmatpush1.bf16.msra.mxu0 0
        %4373 = vmatprep.subr.bf16.mxu0 0
        %4374 = vmatpush1.bf16.msra.mxu0 0
        %4375 = vmatprep.subr.bf16.mxu0 0
        %4376 = vmatpush1.bf16.msra.mxu0 0
        %4377 = vmatprep.subr.bf16.mxu0 0
        %4378 = vmatpush1.bf16.msra.mxu0 0
        %4379 = vmatprep.subr.bf16.mxu0 0
        %4380 = vmatpush1.bf16.msra.mxu0 0
        %4381 = vmatprep.subr.bf16.mxu0 0
        %4382 = vmatpush1.bf16.msra.mxu0 0
        %4383 = vmatprep.subr.bf16.mxu0 0
        %4384 = vmatpush1.bf16.msra.mxu0 0
        %4385 = vmatprep.subr.bf16.mxu0 0
        %4386 = vmatpush1.bf16.msra.mxu0 0
        %4387 = vmatprep.subr.bf16.mxu0 0
        %4388 = vmatpush1.bf16.msra.mxu0 0
        %4389 = vmatprep.subr.bf16.mxu0 0
        %4390 = vmatpush1.bf16.msra.mxu0 0
        %4391 = vmatprep.subr.bf16.mxu0 0
        %4392 = vmatpush1.bf16.msra.mxu0 0
        %4393 = vmatprep.subr.bf16.mxu0 0
        %4394 = vmatpush1.bf16.msra.mxu0 0
        %4395 = vmatprep.subr.bf16.mxu0 0
        %4396 = vmatpush1.bf16.msra.mxu0 0
        %4397 = vmatprep.subr.bf16.mxu0 0
        %4398 = vmatpush1.bf16.msra.mxu0 0
        %4399 = vmatprep.subr.bf16.mxu0 0
        %4400 = vmatpush1.bf16.msra.mxu0 0
        %4401 = vmatprep.mubr.bf16.mxu0 0
        %4402 = vmatmul.mubr.bf16.gmra.mrb[0].mxu0 %v4340
        %v4403 = vpop.f32.mrb[0].mxu0
        %v4404 = vadd.f32 0.0, %v4403
        %v4405 = vpop.f32.mrb[0].mxu0
        %v4406 = vpop.f32.mrb[0].mxu0
        %v4407 = vadd.f32 0.0, %v4406
        %v4408 = vpop.f32.mrb[0].mxu0
        %4409 = vmatprep.mubr.bf16.mxu0 0
        %4410 = vmatmul.mubr.bf16.gmra.mrb[0].mxu0 %v4343
        %v4411 = vpop.f32.mrb[0].mxu0
        %v4412 = vadd.f32 0.0, %v4411
        %v4413 = vpop.f32.mrb[0].mxu0
        %v4414 = vpop.f32.mrb[0].mxu0
        %v4415 = vadd.f32 0.0, %v4414
        %v4416 = vpop.f32.mrb[0].mxu0
        %4417 = vmatprep.mubr.bf16.mxu0 0
        %4418 = vmatmul.mubr.bf16.gmra.mrb[0].mxu0 %v4346
        %v4419 = vpop.f32.mrb[0].mxu0
        %v4420 = vadd.f32 0.0, %v4419
        %v4421 = vpop.f32.mrb[0].mxu0
        %v4422 = vpop.f32.mrb[0].mxu0
        %v4423 = vadd.f32 0.0, %v4422
        %v4424 = vpop.f32.mrb[0].mxu0
        %4425 = vmatprep.mubr.bf16.mxu0 0
        %4426 = vmatmul.mubr.bf16.gmra.mrb[0].mxu0 %v4349
        %v4427 = vpop.f32.mrb[0].mxu0
        %v4428 = vadd.f32 0.0, %v4427
        %v4429 = vpop.f32.mrb[0].mxu0
        %v4430 = vpop.f32.mrb[0].mxu0
        %v4431 = vadd.f32 0.0, %v4430
        %v4432 = vpop.f32.mrb[0].mxu0
        %4433 = vmatprep.mubr.bf16.mxu0 0
        %4434 = vmatmul.mubr.bf16.gmra.mrb[0].mxu0 %v4352
        %v4435 = vpop.f32.mrb[0].mxu0
        %v4436 = vadd.f32 0.0, %v4435
        %v4437 = vpop.f32.mrb[0].mxu0
        %v4438 = vpop.f32.mrb[0].mxu0
        %v4439 = vadd.f32 0.0, %v4438
        %v4440 = vpop.f32.mrb[0].mxu0
        %4441 = vmatprep.mubr.bf16.mxu0 0
        %4442 = vmatmul.mubr.bf16.gmra.mrb[0].mxu0 %v4355
        %v4443 = vpop.f32.mrb[0].mxu0
        %v4444 = vadd.f32 0.0, %v4443
        %v4445 = vpop.f32.mrb[0].mxu0
        %v4446 = vpop.f32.mrb[0].mxu0
        %v4447 = vadd.f32 0.0, %v4446
        %v4448 = vpop.f32.mrb[0].mxu0
        %4449 = vmatprep.mubr.bf16.mxu0 0
        %4450 = vmatmul.mubr.bf16.gmra.mrb[0].mxu0 %v4358
        %v4451 = vpop.f32.mrb[0].mxu0
        %v4452 = vadd.f32 0.0, %v4451
        %v4453 = vpop.f32.mrb[0].mxu0
        %v4454 = vpop.f32.mrb[0].mxu0
        %v4455 = vadd.f32 0.0, %v4454
        %v4456 = vpop.f32.mrb[0].mxu0
        %4457 = vmatprep.mubr.bf16.mxu0 0
        %4458 = vmatmul.mubr.bf16.gmra.mrb[0].mxu0 %v4361
        %v4459 = vpop.f32.mrb[0].mxu0
        %v4460 = vadd.f32 0.0, %v4459
        %v4461 = vpop.f32.mrb[0].mxu0
        %v4462 = vpop.f32.mrb[0].mxu0
        %v4463 = vadd.f32 0.0, %v4462
        %v4464 = vpop.f32.mrb[0].mxu0
        %4465 = vdwg.mxu0
        %v4467 = vsel %vm4338, %v4250, 0
        %v4470 = vsel %vm4338, %v4251, 0
        %v4473 = vsel %vm4338, %v4252, 0
        %v4476 = vsel %vm4338, %v4253, 0
        %v4479 = vsel %vm4338, %v4254, 0
        %v4482 = vsel %vm4338, %v4255, 0
        %v4485 = vsel %vm4338, %v4256, 0
        %v4488 = vsel %vm4338, %v4257, 0
        %v4491 = vand.u32 %v4240, %v4365
        %4493 = vmatprep.subr.bf16.mxu0 0
        %4494 = vmatpush1.bf16.msra.mxu0 %v4491
        %4495 = vmatprep.subr.bf16.mxu0 0
        %4496 = vmatpush1.bf16.msra.mxu0 0
        %4497 = vmatprep.subr.bf16.mxu0 0
        %4498 = vmatpush1.bf16.msra.mxu0 0
        %4499 = vmatprep.subr.bf16.mxu0 0
        %4500 = vmatpush1.bf16.msra.mxu0 0
        %4501 = vmatprep.subr.bf16.mxu0 0
        %4502 = vmatpush1.bf16.msra.mxu0 0
        %4503 = vmatprep.subr.bf16.mxu0 0
        %4504 = vmatpush1.bf16.msra.mxu0 0
        %4505 = vmatprep.subr.bf16.mxu0 0
        %4506 = vmatpush1.bf16.msra.mxu0 0
        %4507 = vmatprep.subr.bf16.mxu0 0
        %4508 = vmatpush1.bf16.msra.mxu0 0
        %4509 = vmatprep.subr.bf16.mxu0 0
        %4510 = vmatpush1.bf16.msra.mxu0 0
        %4511 = vmatprep.subr.bf16.mxu0 0
        %4512 = vmatpush1.bf16.msra.mxu0 0
        %4513 = vmatprep.subr.bf16.mxu0 0
        %4514 = vmatpush1.bf16.msra.mxu0 0
        %4515 = vmatprep.subr.bf16.mxu0 0
        %4516 = vmatpush1.bf16.msra.mxu0 0
        %4517 = vmatprep.subr.bf16.mxu0 0
        %4518 = vmatpush1.bf16.msra.mxu0 0
        %4519 = vmatprep.subr.bf16.mxu0 0
        %4520 = vmatpush1.bf16.msra.mxu0 0
        %4521 = vmatprep.subr.bf16.mxu0 0
        %4522 = vmatpush1.bf16.msra.mxu0 0
        %4523 = vmatprep.subr.bf16.mxu0 0
        %4524 = vmatpush1.bf16.msra.mxu0 0
        %4525 = vmatprep.mubr.bf16.mxu0 0
        %4526 = vmatmul.mubr.bf16.gmra.mrb[0].mxu0 %v4467
        %v4527 = vpop.f32.mrb[0].mxu0
        %v4528 = vadd.f32 %v4404, %v4527
        %v4529 = vpop.f32.mrb[0].mxu0
        %v4530 = vpop.f32.mrb[0].mxu0
        %v4531 = vadd.f32 %v4407, %v4530
        %v4532 = vpop.f32.mrb[0].mxu0
        %4533 = vmatprep.mubr.bf16.mxu0 0
        %4534 = vmatmul.mubr.bf16.gmra.mrb[0].mxu0 %v4470
        %v4535 = vpop.f32.mrb[0].mxu0
        %v4536 = vadd.f32 %v4412, %v4535
        %v4537 = vpop.f32.mrb[0].mxu0
        %v4538 = vpop.f32.mrb[0].mxu0
        %v4539 = vadd.f32 %v4415, %v4538
        %v4540 = vpop.f32.mrb[0].mxu0
        %4541 = vmatprep.mubr.bf16.mxu0 0
        %4542 = vmatmul.mubr.bf16.gmra.mrb[0].mxu0 %v4473
        %v4543 = vpop.f32.mrb[0].mxu0
        %v4544 = vadd.f32 %v4420, %v4543
        %v4545 = vpop.f32.mrb[0].mxu0
        %v4546 = vpop.f32.mrb[0].mxu0
        %v4547 = vadd.f32 %v4423, %v4546
        %v4548 = vpop.f32.mrb[0].mxu0
        %4549 = vmatprep.mubr.bf16.mxu0 0
        %4550 = vmatmul.mubr.bf16.gmra.mrb[0].mxu0 %v4476
        %v4551 = vpop.f32.mrb[0].mxu0
        %v4552 = vadd.f32 %v4428, %v4551
        %v4553 = vpop.f32.mrb[0].mxu0
        %v4554 = vpop.f32.mrb[0].mxu0
        %v4555 = vadd.f32 %v4431, %v4554
        %v4556 = vpop.f32.mrb[0].mxu0
        %4557 = vmatprep.mubr.bf16.mxu0 0
        %4558 = vmatmul.mubr.bf16.gmra.mrb[0].mxu0 %v4479
        %v4559 = vpop.f32.mrb[0].mxu0
        %v4560 = vadd.f32 %v4436, %v4559
        %v4561 = vpop.f32.mrb[0].mxu0
        %v4562 = vpop.f32.mrb[0].mxu0
        %v4563 = vadd.f32 %v4439, %v4562
        %v4564 = vpop.f32.mrb[0].mxu0
        %4565 = vmatprep.mubr.bf16.mxu0 0
        %4566 = vmatmul.mubr.bf16.gmra.mrb[0].mxu0 %v4482
        %v4567 = vpop.f32.mrb[0].mxu0
        %v4568 = vadd.f32 %v4444, %v4567
        %v4569 = vpop.f32.mrb[0].mxu0
        %v4570 = vpop.f32.mrb[0].mxu0
        %v4571 = vadd.f32 %v4447, %v4570
        %v4572 = vpop.f32.mrb[0].mxu0
        %4573 = vmatprep.mubr.bf16.mxu0 0
        %4574 = vmatmul.mubr.bf16.gmra.mrb[0].mxu0 %v4485
        %v4575 = vpop.f32.mrb[0].mxu0
        %v4576 = vadd.f32 %v4452, %v4575
        %v4577 = vpop.f32.mrb[0].mxu0
        %v4578 = vpop.f32.mrb[0].mxu0
        %v4579 = vadd.f32 %v4455, %v4578
        %v4580 = vpop.f32.mrb[0].mxu0
        %4581 = vmatprep.mubr.bf16.mxu0 0
        %4582 = vmatmul.mubr.bf16.gmra.mrb[0].mxu0 %v4488
        %v4583 = vpop.f32.mrb[0].mxu0
        %v4584 = vadd.f32 %v4460, %v4583
        %v4585 = vpop.f32.mrb[0].mxu0
        %v4586 = vpop.f32.mrb[0].mxu0
        %v4587 = vadd.f32 %v4463, %v4586
        %v4588 = vpop.f32.mrb[0].mxu0
        %4589 = vdwg.mxu0
        %v4590 = vrot.slane %v4220, 2
        %v4591 = vrot.slane %v4162, 2
        %v4592 = vsel %vm927, %v4590, %v4591
        %v4593 = vrot.slane %v4230, 2
        %v4594 = vsel %vm927, %v4591, %v4593
        %v4595 = vrot.slane %v4221, 2
        %v4596 = vrot.slane %v4165, 2
        %v4597 = vsel %vm927, %v4595, %v4596
        %v4598 = vrot.slane %v4231, 2
        %v4599 = vsel %vm927, %v4596, %v4598
        %v4600 = vrot.slane %v4222, 2
        %v4601 = vrot.slane %v4168, 2
        %v4602 = vsel %vm927, %v4600, %v4601
        %v4603 = vrot.slane %v4232, 2
        %v4604 = vsel %vm927, %v4601, %v4603
        %v4605 = vrot.slane %v4223, 2
        %v4606 = vrot.slane %v4171, 2
        %v4607 = vsel %vm927, %v4605, %v4606
        %v4608 = vrot.slane %v4233, 2
        %v4609 = vsel %vm927, %v4606, %v4608
        %v4610 = vrot.slane %v4224, 2
        %v4611 = vrot.slane %v4174, 2
        %v4612 = vsel %vm927, %v4610, %v4611
        %v4613 = vrot.slane %v4234, 2
        %v4614 = vsel %vm927, %v4611, %v4613
        %v4615 = vrot.slane %v4225, 2
        %v4616 = vrot.slane %v4177, 2
        %v4617 = vsel %vm927, %v4615, %v4616
        %v4618 = vrot.slane %v4235, 2
        %v4619 = vsel %vm927, %v4616, %v4618
        %v4620 = vrot.slane %v4226, 2
        %v4621 = vrot.slane %v4180, 2
        %v4622 = vsel %vm927, %v4620, %v4621
        %v4623 = vrot.slane %v4236, 2
        %v4624 = vsel %vm927, %v4621, %v4623
        %v4625 = vrot.slane %v4227, 2
        %v4626 = vrot.slane %v4183, 2
        %v4627 = vsel %vm927, %v4625, %v4626
        %v4628 = vrot.slane %v4237, 2
        %v4629 = vsel %vm927, %v4626, %v4628
        %v4646 = vpack.c.bf16 %v4594, %v4592
        %v4647 = vpack.c.bf16 %v4599, %v4597
        %v4648 = vpack.c.bf16 %v4604, %v4602
        %v4649 = vpack.c.bf16 %v4609, %v4607
        %v4650 = vpack.c.bf16 %v4614, %v4612
        %v4651 = vpack.c.bf16 %v4619, %v4617
        %v4652 = vpack.c.bf16 %v4624, %v4622
        %v4653 = vpack.c.bf16 %v4629, %v4627
        %v4655 = vsel %vm4338, %v4646, 0
        %v4658 = vsel %vm4338, %v4647, 0
        %v4661 = vsel %vm4338, %v4648, 0
        %v4664 = vsel %vm4338, %v4649, 0
        %v4667 = vsel %vm4338, %v4650, 0
        %v4670 = vsel %vm4338, %v4651, 0
        %v4673 = vsel %vm4338, %v4652, 0
        %v4676 = vsel %vm4338, %v4653, 0
        %v4679 = vand.u32 %v4242, %v4365
        %4681 = vmatprep.subr.bf16.mxu0 0
        %4682 = vmatpush1.bf16.msra.mxu0 %v4679
        %4683 = vmatprep.subr.bf16.mxu0 0
        %4684 = vmatpush1.bf16.msra.mxu0 0
        %4685 = vmatprep.subr.bf16.mxu0 0
        %4686 = vmatpush1.bf16.msra.mxu0 0
        %4687 = vmatprep.subr.bf16.mxu0 0
        %4688 = vmatpush1.bf16.msra.mxu0 0
        %4689 = vmatprep.subr.bf16.mxu0 0
        %4690 = vmatpush1.bf16.msra.mxu0 0
        %4691 = vmatprep.subr.bf16.mxu0 0
        %4692 = vmatpush1.bf16.msra.mxu0 0
        %4693 = vmatprep.subr.bf16.mxu0 0
        %4694 = vmatpush1.bf16.msra.mxu0 0
        %4695 = vmatprep.subr.bf16.mxu0 0
        %4696 = vmatpush1.bf16.msra.mxu0 0
        %4697 = vmatprep.subr.bf16.mxu0 0
        %4698 = vmatpush1.bf16.msra.mxu0 0
        %4699 = vmatprep.subr.bf16.mxu0 0
        %4700 = vmatpush1.bf16.msra.mxu0 0
        %4701 = vmatprep.subr.bf16.mxu0 0
        %4702 = vmatpush1.bf16.msra.mxu0 0
        %4703 = vmatprep.subr.bf16.mxu0 0
        %4704 = vmatpush1.bf16.msra.mxu0 0
        %4705 = vmatprep.subr.bf16.mxu0 0
        %4706 = vmatpush1.bf16.msra.mxu0 0
        %4707 = vmatprep.subr.bf16.mxu0 0
        %4708 = vmatpush1.bf16.msra.mxu0 0
        %4709 = vmatprep.subr.bf16.mxu0 0
        %4710 = vmatpush1.bf16.msra.mxu0 0
        %4711 = vmatprep.subr.bf16.mxu0 0
        %4712 = vmatpush1.bf16.msra.mxu0 0
        %4713 = vmatprep.mubr.bf16.mxu0 0
        %4714 = vmatmul.mubr.bf16.gmra.mrb[0].mxu0 %v4655
        %v4715 = vpop.f32.mrb[0].mxu0
        %v4716 = vadd.f32 0.0, %v4715
        %v4717 = vpop.f32.mrb[0].mxu0
        %v4718 = vpop.f32.mrb[0].mxu0
        %v4719 = vadd.f32 0.0, %v4718
        %v4720 = vpop.f32.mrb[0].mxu0
        %4721 = vmatprep.mubr.bf16.mxu0 0
        %4722 = vmatmul.mubr.bf16.gmra.mrb[0].mxu0 %v4658
        %v4723 = vpop.f32.mrb[0].mxu0
        %v4724 = vadd.f32 0.0, %v4723
        %v4725 = vpop.f32.mrb[0].mxu0
        %v4726 = vpop.f32.mrb[0].mxu0
        %v4727 = vadd.f32 0.0, %v4726
        %v4728 = vpop.f32.mrb[0].mxu0
        %4729 = vmatprep.mubr.bf16.mxu0 0
        %4730 = vmatmul.mubr.bf16.gmra.mrb[0].mxu0 %v4661
        %v4731 = vpop.f32.mrb[0].mxu0
        %v4732 = vadd.f32 0.0, %v4731
        %v4733 = vpop.f32.mrb[0].mxu0
        %v4734 = vpop.f32.mrb[0].mxu0
        %v4735 = vadd.f32 0.0, %v4734
        %v4736 = vpop.f32.mrb[0].mxu0
        %4737 = vmatprep.mubr.bf16.mxu0 0
        %4738 = vmatmul.mubr.bf16.gmra.mrb[0].mxu0 %v4664
        %v4739 = vpop.f32.mrb[0].mxu0
        %v4740 = vadd.f32 0.0, %v4739
        %v4741 = vpop.f32.mrb[0].mxu0
        %v4742 = vpop.f32.mrb[0].mxu0
        %v4743 = vadd.f32 0.0, %v4742
        %v4744 = vpop.f32.mrb[0].mxu0
        %4745 = vmatprep.mubr.bf16.mxu0 0
        %4746 = vmatmul.mubr.bf16.gmra.mrb[0].mxu0 %v4667
        %v4747 = vpop.f32.mrb[0].mxu0
        %v4748 = vadd.f32 0.0, %v4747
        %v4749 = vpop.f32.mrb[0].mxu0
        %v4750 = vpop.f32.mrb[0].mxu0
        %v4751 = vadd.f32 0.0, %v4750
        %v4752 = vpop.f32.mrb[0].mxu0
        %4753 = vmatprep.mubr.bf16.mxu0 0
        %4754 = vmatmul.mubr.bf16.gmra.mrb[0].mxu0 %v4670
        %v4755 = vpop.f32.mrb[0].mxu0
        %v4756 = vadd.f32 0.0, %v4755
        %v4757 = vpop.f32.mrb[0].mxu0
        %v4758 = vpop.f32.mrb[0].mxu0
        %v4759 = vadd.f32 0.0, %v4758
        %v4760 = vpop.f32.mrb[0].mxu0
        %4761 = vmatprep.mubr.bf16.mxu0 0
        %4762 = vmatmul.mubr.bf16.gmra.mrb[0].mxu0 %v4673
        %v4763 = vpop.f32.mrb[0].mxu0
        %v4764 = vadd.f32 0.0, %v4763
        %v4765 = vpop.f32.mrb[0].mxu0
        %v4766 = vpop.f32.mrb[0].mxu0
        %v4767 = vadd.f32 0.0, %v4766
        %v4768 = vpop.f32.mrb[0].mxu0
        %4769 = vmatprep.mubr.bf16.mxu0 0
        %4770 = vmatmul.mubr.bf16.gmra.mrb[0].mxu0 %v4676
        %v4771 = vpop.f32.mrb[0].mxu0
        %v4772 = vadd.f32 0.0, %v4771
        %v4773 = vpop.f32.mrb[0].mxu0
        %v4774 = vpop.f32.mrb[0].mxu0
        %v4775 = vadd.f32 0.0, %v4774
        %v4776 = vpop.f32.mrb[0].mxu0
        %4777 = vdwg.mxu0
        %v4778 = vadd.f32 %v4528, %v4716
        %v4779 = vadd.f32 %v4531, %v4719
        %v4780 = vadd.f32 %v4536, %v4724
        %v4781 = vadd.f32 %v4539, %v4727
        %v4782 = vadd.f32 %v4544, %v4732
        %v4783 = vadd.f32 %v4547, %v4735
        %v4784 = vadd.f32 %v4552, %v4740
        %v4785 = vadd.f32 %v4555, %v4743
        %v4786 = vadd.f32 %v4560, %v4748
        %v4787 = vadd.f32 %v4563, %v4751
        %v4788 = vadd.f32 %v4568, %v4756
        %v4789 = vadd.f32 %v4571, %v4759
        %v4790 = vadd.f32 %v4576, %v4764
        %v4791 = vadd.f32 %v4579, %v4767
        %v4792 = vadd.f32 %v4584, %v4772
        %v4793 = vadd.f32 %v4587, %v4775
        %v4794 = vpack.c.bf16 %v4186, %v4228
        %v4796 = vsel %vm4338, %v4794, 0
        %v4799 = vand.u32 %v4243, %v4365
        %4801 = vmatprep.subr.bf16.mxu0 0
        %4802 = vmatpush1.bf16.msra.mxu0 %v4799
        %4803 = vmatprep.subr.bf16.mxu0 0
        %4804 = vmatpush1.bf16.msra.mxu0 0
        %4805 = vmatprep.subr.bf16.mxu0 0
        %4806 = vmatpush1.bf16.msra.mxu0 0
        %4807 = vmatprep.subr.bf16.mxu0 0
        %4808 = vmatpush1.bf16.msra.mxu0 0
        %4809 = vmatprep.subr.bf16.mxu0 0
        %4810 = vmatpush1.bf16.msra.mxu0 0
        %4811 = vmatprep.subr.bf16.mxu0 0
        %4812 = vmatpush1.bf16.msra.mxu0 0
        %4813 = vmatprep.subr.bf16.mxu0 0
        %4814 = vmatpush1.bf16.msra.mxu0 0
        %4815 = vmatprep.subr.bf16.mxu0 0
        %4816 = vmatpush1.bf16.msra.mxu0 0
        %4817 = vmatprep.subr.bf16.mxu0 0
        %4818 = vmatpush1.bf16.msra.mxu0 0
        %4819 = vmatprep.subr.bf16.mxu0 0
        %4820 = vmatpush1.bf16.msra.mxu0 0
        %4821 = vmatprep.subr.bf16.mxu0 0
        %4822 = vmatpush1.bf16.msra.mxu0 0
        %4823 = vmatprep.subr.bf16.mxu0 0
        %4824 = vmatpush1.bf16.msra.mxu0 0
        %4825 = vmatprep.subr.bf16.mxu0 0
        %4826 = vmatpush1.bf16.msra.mxu0 0
        %4827 = vmatprep.subr.bf16.mxu0 0
        %4828 = vmatpush1.bf16.msra.mxu0 0
        %4829 = vmatprep.subr.bf16.mxu0 0
        %4830 = vmatpush1.bf16.msra.mxu0 0
        %4831 = vmatprep.subr.bf16.mxu0 0
        %4832 = vmatpush1.bf16.msra.mxu0 0
        %4833 = vmatprep.mubr.bf16.mxu0 0
        %4834 = vmatmul.mubr.bf16.gmra.mrb[0].mxu0 %v4470
        %v4835 = vpop.f32.mrb[0].mxu0
        %v4836 = vadd.f32 0.0, %v4835
        %v4837 = vpop.f32.mrb[0].mxu0
        %v4838 = vpop.f32.mrb[0].mxu0
        %v4839 = vadd.f32 0.0, %v4838
        %v4840 = vpop.f32.mrb[0].mxu0
        %4841 = vmatprep.mubr.bf16.mxu0 0
        %4842 = vmatmul.mubr.bf16.gmra.mrb[0].mxu0 %v4473
        %v4843 = vpop.f32.mrb[0].mxu0
        %v4844 = vadd.f32 0.0, %v4843
        %v4845 = vpop.f32.mrb[0].mxu0
        %v4846 = vpop.f32.mrb[0].mxu0
        %v4847 = vadd.f32 0.0, %v4846
        %v4848 = vpop.f32.mrb[0].mxu0
        %4849 = vmatprep.mubr.bf16.mxu0 0
        %4850 = vmatmul.mubr.bf16.gmra.mrb[0].mxu0 %v4476
        %v4851 = vpop.f32.mrb[0].mxu0
        %v4852 = vadd.f32 0.0, %v4851
        %v4853 = vpop.f32.mrb[0].mxu0
        %v4854 = vpop.f32.mrb[0].mxu0
        %v4855 = vadd.f32 0.0, %v4854
        %v4856 = vpop.f32.mrb[0].mxu0
        %4857 = vmatprep.mubr.bf16.mxu0 0
        %4858 = vmatmul.mubr.bf16.gmra.mrb[0].mxu0 %v4479
        %v4859 = vpop.f32.mrb[0].mxu0
        %v4860 = vadd.f32 0.0, %v4859
        %v4861 = vpop.f32.mrb[0].mxu0
        %v4862 = vpop.f32.mrb[0].mxu0
        %v4863 = vadd.f32 0.0, %v4862
        %v4864 = vpop.f32.mrb[0].mxu0
        %4865 = vmatprep.mubr.bf16.mxu0 0
        %4866 = vmatmul.mubr.bf16.gmra.mrb[0].mxu0 %v4482
        %v4867 = vpop.f32.mrb[0].mxu0
        %v4868 = vadd.f32 0.0, %v4867
        %v4869 = vpop.f32.mrb[0].mxu0
        %v4870 = vpop.f32.mrb[0].mxu0
        %v4871 = vadd.f32 0.0, %v4870
        %v4872 = vpop.f32.mrb[0].mxu0
        %4873 = vmatprep.mubr.bf16.mxu0 0
        %4874 = vmatmul.mubr.bf16.gmra.mrb[0].mxu0 %v4485
        %v4875 = vpop.f32.mrb[0].mxu0
        %v4876 = vadd.f32 0.0, %v4875
        %v4877 = vpop.f32.mrb[0].mxu0
        %v4878 = vpop.f32.mrb[0].mxu0
        %v4879 = vadd.f32 0.0, %v4878
        %v4880 = vpop.f32.mrb[0].mxu0
        %4881 = vmatprep.mubr.bf16.mxu0 0
        %4882 = vmatmul.mubr.bf16.gmra.mrb[0].mxu0 %v4488
        %v4883 = vpop.f32.mrb[0].mxu0
        %v4884 = vadd.f32 0.0, %v4883
        %v4885 = vpop.f32.mrb[0].mxu0
        %v4886 = vpop.f32.mrb[0].mxu0
        %v4887 = vadd.f32 0.0, %v4886
        %v4888 = vpop.f32.mrb[0].mxu0
        %4889 = vmatprep.mubr.bf16.mxu0 0
        %4890 = vmatmul.mubr.bf16.gmra.mrb[0].mxu0 %v4796
        %v4891 = vpop.f32.mrb[0].mxu0
        %v4892 = vadd.f32 0.0, %v4891
        %v4893 = vpop.f32.mrb[0].mxu0
        %v4894 = vpop.f32.mrb[0].mxu0
        %v4895 = vadd.f32 0.0, %v4894
        %v4896 = vpop.f32.mrb[0].mxu0
        %4897 = vdwg.mxu0
        %v4898 = vadd.f32 %v4778, %v4836
        %v4899 = vadd.f32 %v4779, %v4839
        %v4900 = vadd.f32 %v4780, %v4844
        %v4901 = vadd.f32 %v4781, %v4847
        %v4902 = vadd.f32 %v4782, %v4852
        %v4903 = vadd.f32 %v4783, %v4855
        %v4904 = vadd.f32 %v4784, %v4860
        %v4905 = vadd.f32 %v4785, %v4863
        %v4906 = vadd.f32 %v4786, %v4868
        %v4907 = vadd.f32 %v4787, %v4871
        %v4908 = vadd.f32 %v4788, %v4876
        %v4909 = vadd.f32 %v4789, %v4879
        %v4910 = vadd.f32 %v4790, %v4884
        %v4911 = vadd.f32 %v4791, %v4887
        %v4912 = vadd.f32 %v4792, %v4892
        %v4913 = vadd.f32 %v4793, %v4895
        %v4916 = vrot.slane %v4228, 1
        %v4917 = vrot.slane %v4186, 1
        %v4918 = vsel %vm489, %v4916, %v4917
        %v4919 = vrot.slane %v4238, 1
        %v4920 = vsel %vm489, %v4917, %v4919
        %v4923 = vpack.c.bf16 %v4920, %v4918
        %v4925 = vsel %vm4338, %v4923, 0
        %v4928 = vand.u32 %v4244, %v4365
        %4930 = vmatprep.subr.bf16.mxu0 0
        %4931 = vmatpush1.bf16.msra.mxu0 %v4928
        %4932 = vmatprep.subr.bf16.mxu0 0
        %4933 = vmatpush1.bf16.msra.mxu0 0
        %4934 = vmatprep.subr.bf16.mxu0 0
        %4935 = vmatpush1.bf16.msra.mxu0 0
        %4936 = vmatprep.subr.bf16.mxu0 0
        %4937 = vmatpush1.bf16.msra.mxu0 0
        %4938 = vmatprep.subr.bf16.mxu0 0
        %4939 = vmatpush1.bf16.msra.mxu0 0
        %4940 = vmatprep.subr.bf16.mxu0 0
        %4941 = vmatpush1.bf16.msra.mxu0 0
        %4942 = vmatprep.subr.bf16.mxu0 0
        %4943 = vmatpush1.bf16.msra.mxu0 0
        %4944 = vmatprep.subr.bf16.mxu0 0
        %4945 = vmatpush1.bf16.msra.mxu0 0
        %4946 = vmatprep.subr.bf16.mxu0 0
        %4947 = vmatpush1.bf16.msra.mxu0 0
        %4948 = vmatprep.subr.bf16.mxu0 0
        %4949 = vmatpush1.bf16.msra.mxu0 0
        %4950 = vmatprep.subr.bf16.mxu0 0
        %4951 = vmatpush1.bf16.msra.mxu0 0
        %4952 = vmatprep.subr.bf16.mxu0 0
        %4953 = vmatpush1.bf16.msra.mxu0 0
        %4954 = vmatprep.subr.bf16.mxu0 0
        %4955 = vmatpush1.bf16.msra.mxu0 0
        %4956 = vmatprep.subr.bf16.mxu0 0
        %4957 = vmatpush1.bf16.msra.mxu0 0
        %4958 = vmatprep.subr.bf16.mxu0 0
        %4959 = vmatpush1.bf16.msra.mxu0 0
        %4960 = vmatprep.subr.bf16.mxu0 0
        %4961 = vmatpush1.bf16.msra.mxu0 0
        %4962 = vmatprep.mubr.bf16.mxu0 0
        %4963 = vmatmul.mubr.bf16.gmra.mrb[0].mxu0 %v4343
        %v4964 = vpop.f32.mrb[0].mxu0
        %v4965 = vadd.f32 0.0, %v4964
        %v4966 = vpop.f32.mrb[0].mxu0
        %v4967 = vpop.f32.mrb[0].mxu0
        %v4968 = vadd.f32 0.0, %v4967
        %v4969 = vpop.f32.mrb[0].mxu0
        %4970 = vmatprep.mubr.bf16.mxu0 0
        %4971 = vmatmul.mubr.bf16.gmra.mrb[0].mxu0 %v4346
        %v4972 = vpop.f32.mrb[0].mxu0
        %v4973 = vadd.f32 0.0, %v4972
        %v4974 = vpop.f32.mrb[0].mxu0
        %v4975 = vpop.f32.mrb[0].mxu0
        %v4976 = vadd.f32 0.0, %v4975
        %v4977 = vpop.f32.mrb[0].mxu0
        %4978 = vmatprep.mubr.bf16.mxu0 0
        %4979 = vmatmul.mubr.bf16.gmra.mrb[0].mxu0 %v4349
        %v4980 = vpop.f32.mrb[0].mxu0
        %v4981 = vadd.f32 0.0, %v4980
        %v4982 = vpop.f32.mrb[0].mxu0
        %v4983 = vpop.f32.mrb[0].mxu0
        %v4984 = vadd.f32 0.0, %v4983
        %v4985 = vpop.f32.mrb[0].mxu0
        %4986 = vmatprep.mubr.bf16.mxu0 0
        %4987 = vmatmul.mubr.bf16.gmra.mrb[0].mxu0 %v4352
        %v4988 = vpop.f32.mrb[0].mxu0
        %v4989 = vadd.f32 0.0, %v4988
        %v4990 = vpop.f32.mrb[0].mxu0
        %v4991 = vpop.f32.mrb[0].mxu0
        %v4992 = vadd.f32 0.0, %v4991
        %v4993 = vpop.f32.mrb[0].mxu0
        %4994 = vmatprep.mubr.bf16.mxu0 0
        %4995 = vmatmul.mubr.bf16.gmra.mrb[0].mxu0 %v4355
        %v4996 = vpop.f32.mrb[0].mxu0
        %v4997 = vadd.f32 0.0, %v4996
        %v4998 = vpop.f32.mrb[0].mxu0
        %v4999 = vpop.f32.mrb[0].mxu0
        %v5000 = vadd.f32 0.0, %v4999
        %v5001 = vpop.f32.mrb[0].mxu0
        %5002 = vmatprep.mubr.bf16.mxu0 0
        %5003 = vmatmul.mubr.bf16.gmra.mrb[0].mxu0 %v4358
        %v5004 = vpop.f32.mrb[0].mxu0
        %v5005 = vadd.f32 0.0, %v5004
        %v5006 = vpop.f32.mrb[0].mxu0
        %v5007 = vpop.f32.mrb[0].mxu0
        %v5008 = vadd.f32 0.0, %v5007
        %v5009 = vpop.f32.mrb[0].mxu0
        %5010 = vmatprep.mubr.bf16.mxu0 0
        %5011 = vmatmul.mubr.bf16.gmra.mrb[0].mxu0 %v4361
        %v5012 = vpop.f32.mrb[0].mxu0
        %v5013 = vadd.f32 0.0, %v5012
        %v5014 = vpop.f32.mrb[0].mxu0
        %v5015 = vpop.f32.mrb[0].mxu0
        %v5016 = vadd.f32 0.0, %v5015
        %v5017 = vpop.f32.mrb[0].mxu0
        %5018 = vmatprep.mubr.bf16.mxu0 0
        %5019 = vmatmul.mubr.bf16.gmra.mrb[0].mxu0 %v4925
        %v5020 = vpop.f32.mrb[0].mxu0
        %v5021 = vadd.f32 0.0, %v5020
        %v5022 = vpop.f32.mrb[0].mxu0
        %v5023 = vpop.f32.mrb[0].mxu0
        %v5024 = vadd.f32 0.0, %v5023
        %v5025 = vpop.f32.mrb[0].mxu0
        %5026 = vdwg.mxu0
        %v5027 = vadd.f32 %v4898, %v4965
        %v5028 = vadd.f32 %v4899, %v4968
        %v5029 = vadd.f32 %v4900, %v4973
        %v5030 = vadd.f32 %v4901, %v4976
        %v5031 = vadd.f32 %v4902, %v4981
        %v5032 = vadd.f32 %v4903, %v4984
        %v5033 = vadd.f32 %v4904, %v4989
        %v5034 = vadd.f32 %v4905, %v4992
        %v5035 = vadd.f32 %v4906, %v4997
        %v5036 = vadd.f32 %v4907, %v5000
        %v5037 = vadd.f32 %v4908, %v5005
        %v5038 = vadd.f32 %v4909, %v5008
        %v5039 = vadd.f32 %v4910, %v5013
        %v5040 = vadd.f32 %v4911, %v5016
        %v5041 = vadd.f32 %v4912, %v5021
        %v5042 = vadd.f32 %v4913, %v5024
        %v5043 = vrot.slane %v4228, 2
        %v5044 = vrot.slane %v4186, 2
        %v5045 = vsel %vm927, %v5043, %v5044
        %v5046 = vrot.slane %v4238, 2
        %v5047 = vsel %vm927, %v5044, %v5046
        %v5050 = vpack.c.bf16 %v5047, %v5045
        %v5052 = vsel %vm4338, %v5050, 0
        %v5055 = vand.u32 %v4245, %v4365
        %5057 = vmatprep.subr.bf16.mxu0 0
        %5058 = vmatpush1.bf16.msra.mxu0 %v5055
        %5059 = vmatprep.subr.bf16.mxu0 0
        %5060 = vmatpush1.bf16.msra.mxu0 0
        %5061 = vmatprep.subr.bf16.mxu0 0
        %5062 = vmatpush1.bf16.msra.mxu0 0
        %5063 = vmatprep.subr.bf16.mxu0 0
        %5064 = vmatpush1.bf16.msra.mxu0 0
        %5065 = vmatprep.subr.bf16.mxu0 0
        %5066 = vmatpush1.bf16.msra.mxu0 0
        %5067 = vmatprep.subr.bf16.mxu0 0
        %5068 = vmatpush1.bf16.msra.mxu0 0
        %5069 = vmatprep.subr.bf16.mxu0 0
        %5070 = vmatpush1.bf16.msra.mxu0 0
        %5071 = vmatprep.subr.bf16.mxu0 0
        %5072 = vmatpush1.bf16.msra.mxu0 0
        %5073 = vmatprep.subr.bf16.mxu0 0
        %5074 = vmatpush1.bf16.msra.mxu0 0
        %5075 = vmatprep.subr.bf16.mxu0 0
        %5076 = vmatpush1.bf16.msra.mxu0 0
        %5077 = vmatprep.subr.bf16.mxu0 0
        %5078 = vmatpush1.bf16.msra.mxu0 0
        %5079 = vmatprep.subr.bf16.mxu0 0
        %5080 = vmatpush1.bf16.msra.mxu0 0
        %5081 = vmatprep.subr.bf16.mxu0 0
        %5082 = vmatpush1.bf16.msra.mxu0 0
        %5083 = vmatprep.subr.bf16.mxu0 0
        %5084 = vmatpush1.bf16.msra.mxu0 0
        %5085 = vmatprep.subr.bf16.mxu0 0
        %5086 = vmatpush1.bf16.msra.mxu0 0
        %5087 = vmatprep.subr.bf16.mxu0 0
        %5088 = vmatpush1.bf16.msra.mxu0 0
        %5089 = vmatprep.mubr.bf16.mxu0 0
        %5090 = vmatmul.mubr.bf16.gmra.mrb[0].mxu0 %v4658
        %v5091 = vpop.f32.mrb[0].mxu0
        %v5092 = vadd.f32 0.0, %v5091
        %v5093 = vpop.f32.mrb[0].mxu0
        %v5094 = vpop.f32.mrb[0].mxu0
        %v5095 = vadd.f32 0.0, %v5094
        %v5096 = vpop.f32.mrb[0].mxu0
        %5097 = vmatprep.mubr.bf16.mxu0 0
        %5098 = vmatmul.mubr.bf16.gmra.mrb[0].mxu0 %v4661
        %v5099 = vpop.f32.mrb[0].mxu0
        %v5100 = vadd.f32 0.0, %v5099
        %v5101 = vpop.f32.mrb[0].mxu0
        %v5102 = vpop.f32.mrb[0].mxu0
        %v5103 = vadd.f32 0.0, %v5102
        %v5104 = vpop.f32.mrb[0].mxu0
        %5105 = vmatprep.mubr.bf16.mxu0 0
        %5106 = vmatmul.mubr.bf16.gmra.mrb[0].mxu0 %v4664
        %v5107 = vpop.f32.mrb[0].mxu0
        %v5108 = vadd.f32 0.0, %v5107
        %v5109 = vpop.f32.mrb[0].mxu0
        %v5110 = vpop.f32.mrb[0].mxu0
        %v5111 = vadd.f32 0.0, %v5110
        %v5112 = vpop.f32.mrb[0].mxu0
        %5113 = vmatprep.mubr.bf16.mxu0 0
        %5114 = vmatmul.mubr.bf16.gmra.mrb[0].mxu0 %v4667
        %v5115 = vpop.f32.mrb[0].mxu0
        %v5116 = vadd.f32 0.0, %v5115
        %v5117 = vpop.f32.mrb[0].mxu0
        %v5118 = vpop.f32.mrb[0].mxu0
        %v5119 = vadd.f32 0.0, %v5118
        %v5120 = vpop.f32.mrb[0].mxu0
        %5121 = vmatprep.mubr.bf16.mxu0 0
        %5122 = vmatmul.mubr.bf16.gmra.mrb[0].mxu0 %v4670
        %v5123 = vpop.f32.mrb[0].mxu0
        %v5124 = vadd.f32 0.0, %v5123
        %v5125 = vpop.f32.mrb[0].mxu0
        %v5126 = vpop.f32.mrb[0].mxu0
        %v5127 = vadd.f32 0.0, %v5126
        %v5128 = vpop.f32.mrb[0].mxu0
        %5129 = vmatprep.mubr.bf16.mxu0 0
        %5130 = vmatmul.mubr.bf16.gmra.mrb[0].mxu0 %v4673
        %v5131 = vpop.f32.mrb[0].mxu0
        %v5132 = vadd.f32 0.0, %v5131
        %v5133 = vpop.f32.mrb[0].mxu0
        %v5134 = vpop.f32.mrb[0].mxu0
        %v5135 = vadd.f32 0.0, %v5134
        %v5136 = vpop.f32.mrb[0].mxu0
        %5137 = vmatprep.mubr.bf16.mxu0 0
        %5138 = vmatmul.mubr.bf16.gmra.mrb[0].mxu0 %v4676
        %v5139 = vpop.f32.mrb[0].mxu0
        %v5140 = vadd.f32 0.0, %v5139
        %v5141 = vpop.f32.mrb[0].mxu0
        %v5142 = vpop.f32.mrb[0].mxu0
        %v5143 = vadd.f32 0.0, %v5142
        %v5144 = vpop.f32.mrb[0].mxu0
        %5145 = vmatprep.mubr.bf16.mxu0 0
        %5146 = vmatmul.mubr.bf16.gmra.mrb[0].mxu0 %v5052
        %v5147 = vpop.f32.mrb[0].mxu0
        %v5148 = vadd.f32 0.0, %v5147
        %v5149 = vpop.f32.mrb[0].mxu0
        %v5150 = vpop.f32.mrb[0].mxu0
        %v5151 = vadd.f32 0.0, %v5150
        %v5152 = vpop.f32.mrb[0].mxu0
        %5153 = vdwg.mxu0
        %v5154 = vadd.f32 %v5027, %v5092
        %v5155 = vadd.f32 %v5028, %v5095
        %v5156 = vadd.f32 %v5029, %v5100
        %v5157 = vadd.f32 %v5030, %v5103
        %v5158 = vadd.f32 %v5031, %v5108
        %v5159 = vadd.f32 %v5032, %v5111
        %v5160 = vadd.f32 %v5033, %v5116
        %v5161 = vadd.f32 %v5034, %v5119
        %v5162 = vadd.f32 %v5035, %v5124
        %v5163 = vadd.f32 %v5036, %v5127
        %v5164 = vadd.f32 %v5037, %v5132
        %v5165 = vadd.f32 %v5038, %v5135
        %v5166 = vadd.f32 %v5039, %v5140
        %v5167 = vadd.f32 %v5040, %v5143
        %v5168 = vadd.f32 %v5041, %v5148
        %v5169 = vadd.f32 %v5042, %v5151
        %v5170 = vpack.c.bf16 %v4189, %v4229
        %v5172 = vsel %vm4338, %v5170, 0
        %v5175 = vand.u32 %v4246, %v4365
        %5177 = vmatprep.subr.bf16.mxu0 0
        %5178 = vmatpush1.bf16.msra.mxu0 %v5175
        %5179 = vmatprep.subr.bf16.mxu0 0
        %5180 = vmatpush1.bf16.msra.mxu0 0
        %5181 = vmatprep.subr.bf16.mxu0 0
        %5182 = vmatpush1.bf16.msra.mxu0 0
        %5183 = vmatprep.subr.bf16.mxu0 0
        %5184 = vmatpush1.bf16.msra.mxu0 0
        %5185 = vmatprep.subr.bf16.mxu0 0
        %5186 = vmatpush1.bf16.msra.mxu0 0
        %5187 = vmatprep.subr.bf16.mxu0 0
        %5188 = vmatpush1.bf16.msra.mxu0 0
        %5189 = vmatprep.subr.bf16.mxu0 0
        %5190 = vmatpush1.bf16.msra.mxu0 0
        %5191 = vmatprep.subr.bf16.mxu0 0
        %5192 = vmatpush1.bf16.msra.mxu0 0
        %5193 = vmatprep.subr.bf16.mxu0 0
        %5194 = vmatpush1.bf16.msra.mxu0 0
        %5195 = vmatprep.subr.bf16.mxu0 0
        %5196 = vmatpush1.bf16.msra.mxu0 0
        %5197 = vmatprep.subr.bf16.mxu0 0
        %5198 = vmatpush1.bf16.msra.mxu0 0
        %5199 = vmatprep.subr.bf16.mxu0 0
        %5200 = vmatpush1.bf16.msra.mxu0 0
        %5201 = vmatprep.subr.bf16.mxu0 0
        %5202 = vmatpush1.bf16.msra.mxu0 0
        %5203 = vmatprep.subr.bf16.mxu0 0
        %5204 = vmatpush1.bf16.msra.mxu0 0
        %5205 = vmatprep.subr.bf16.mxu0 0
        %5206 = vmatpush1.bf16.msra.mxu0 0
        %5207 = vmatprep.subr.bf16.mxu0 0
        %5208 = vmatpush1.bf16.msra.mxu0 0
        %5209 = vmatprep.mubr.bf16.mxu0 0
        %5210 = vmatmul.mubr.bf16.gmra.mrb[0].mxu0 %v4473
        %v5211 = vpop.f32.mrb[0].mxu0
        %v5212 = vadd.f32 0.0, %v5211
        %v5213 = vpop.f32.mrb[0].mxu0
        %v5214 = vpop.f32.mrb[0].mxu0
        %v5215 = vadd.f32 0.0, %v5214
        %v5216 = vpop.f32.mrb[0].mxu0
        %5217 = vmatprep.mubr.bf16.mxu0 0
        %5218 = vmatmul.mubr.bf16.gmra.mrb[0].mxu0 %v4476
        %v5219 = vpop.f32.mrb[0].mxu0
        %v5220 = vadd.f32 0.0, %v5219
        %v5221 = vpop.f32.mrb[0].mxu0
        %v5222 = vpop.f32.mrb[0].mxu0
        %v5223 = vadd.f32 0.0, %v5222
        %v5224 = vpop.f32.mrb[0].mxu0
        %5225 = vmatprep.mubr.bf16.mxu0 0
        %5226 = vmatmul.mubr.bf16.gmra.mrb[0].mxu0 %v4479
        %v5227 = vpop.f32.mrb[0].mxu0
        %v5228 = vadd.f32 0.0, %v5227
        %v5229 = vpop.f32.mrb[0].mxu0
        %v5230 = vpop.f32.mrb[0].mxu0
        %v5231 = vadd.f32 0.0, %v5230
        %v5232 = vpop.f32.mrb[0].mxu0
        %5233 = vmatprep.mubr.bf16.mxu0 0
        %5234 = vmatmul.mubr.bf16.gmra.mrb[0].mxu0 %v4482
        %v5235 = vpop.f32.mrb[0].mxu0
        %v5236 = vadd.f32 0.0, %v5235
        %v5237 = vpop.f32.mrb[0].mxu0
        %v5238 = vpop.f32.mrb[0].mxu0
        %v5239 = vadd.f32 0.0, %v5238
        %v5240 = vpop.f32.mrb[0].mxu0
        %5241 = vmatprep.mubr.bf16.mxu0 0
        %5242 = vmatmul.mubr.bf16.gmra.mrb[0].mxu0 %v4485
        %v5243 = vpop.f32.mrb[0].mxu0
        %v5244 = vadd.f32 0.0, %v5243
        %v5245 = vpop.f32.mrb[0].mxu0
        %v5246 = vpop.f32.mrb[0].mxu0
        %v5247 = vadd.f32 0.0, %v5246
        %v5248 = vpop.f32.mrb[0].mxu0
        %5249 = vmatprep.mubr.bf16.mxu0 0
        %5250 = vmatmul.mubr.bf16.gmra.mrb[0].mxu0 %v4488
        %v5251 = vpop.f32.mrb[0].mxu0
        %v5252 = vadd.f32 0.0, %v5251
        %v5253 = vpop.f32.mrb[0].mxu0
        %v5254 = vpop.f32.mrb[0].mxu0
        %v5255 = vadd.f32 0.0, %v5254
        %v5256 = vpop.f32.mrb[0].mxu0
        %5257 = vmatprep.mubr.bf16.mxu0 0
        %5258 = vmatmul.mubr.bf16.gmra.mrb[0].mxu0 %v4796
        %v5259 = vpop.f32.mrb[0].mxu0
        %v5260 = vadd.f32 0.0, %v5259
        %v5261 = vpop.f32.mrb[0].mxu0
        %v5262 = vpop.f32.mrb[0].mxu0
        %v5263 = vadd.f32 0.0, %v5262
        %v5264 = vpop.f32.mrb[0].mxu0
        %5265 = vmatprep.mubr.bf16.mxu0 0
        %5266 = vmatmul.mubr.bf16.gmra.mrb[0].mxu0 %v5172
        %v5267 = vpop.f32.mrb[0].mxu0
        %v5268 = vadd.f32 0.0, %v5267
        %v5269 = vpop.f32.mrb[0].mxu0
        %v5270 = vpop.f32.mrb[0].mxu0
        %v5271 = vadd.f32 0.0, %v5270
        %v5272 = vpop.f32.mrb[0].mxu0
        %5273 = vdwg.mxu0
        %v5274 = vadd.f32 %v5154, %v5212
        %v5275 = vadd.f32 %v5155, %v5215
        %v5276 = vadd.f32 %v5156, %v5220
        %v5277 = vadd.f32 %v5157, %v5223
        %v5278 = vadd.f32 %v5158, %v5228
        %v5279 = vadd.f32 %v5159, %v5231
        %v5280 = vadd.f32 %v5160, %v5236
        %v5281 = vadd.f32 %v5161, %v5239
        %v5282 = vadd.f32 %v5162, %v5244
        %v5283 = vadd.f32 %v5163, %v5247
        %v5284 = vadd.f32 %v5164, %v5252
        %v5285 = vadd.f32 %v5165, %v5255
        %v5286 = vadd.f32 %v5166, %v5260
        %v5287 = vadd.f32 %v5167, %v5263
        %v5288 = vadd.f32 %v5168, %v5268
        %v5289 = vadd.f32 %v5169, %v5271
        %v5292 = vrot.slane %v4229, 1
        %v5293 = vrot.slane %v4189, 1
        %v5294 = vsel %vm489, %v5292, %v5293
        %v5295 = vrot.slane %v4239, 1
        %v5296 = vsel %vm489, %v5293, %v5295
        %v5299 = vpack.c.bf16 %v5296, %v5294
        %v5301 = vsel %vm4338, %v5299, 0
        %v5304 = vand.u32 %v4247, %v4365
        %5306 = vmatprep.subr.bf16.mxu0 0
        %5307 = vmatpush1.bf16.msra.mxu0 %v5304
        %5308 = vmatprep.subr.bf16.mxu0 0
        %5309 = vmatpush1.bf16.msra.mxu0 0
        %5310 = vmatprep.subr.bf16.mxu0 0
        %5311 = vmatpush1.bf16.msra.mxu0 0
        %5312 = vmatprep.subr.bf16.mxu0 0
        %5313 = vmatpush1.bf16.msra.mxu0 0
        %5314 = vmatprep.subr.bf16.mxu0 0
        %5315 = vmatpush1.bf16.msra.mxu0 0
        %5316 = vmatprep.subr.bf16.mxu0 0
        %5317 = vmatpush1.bf16.msra.mxu0 0
        %5318 = vmatprep.subr.bf16.mxu0 0
        %5319 = vmatpush1.bf16.msra.mxu0 0
        %5320 = vmatprep.subr.bf16.mxu0 0
        %5321 = vmatpush1.bf16.msra.mxu0 0
        %5322 = vmatprep.subr.bf16.mxu0 0
        %5323 = vmatpush1.bf16.msra.mxu0 0
        %5324 = vmatprep.subr.bf16.mxu0 0
        %5325 = vmatpush1.bf16.msra.mxu0 0
        %5326 = vmatprep.subr.bf16.mxu0 0
        %5327 = vmatpush1.bf16.msra.mxu0 0
        %5328 = vmatprep.subr.bf16.mxu0 0
        %5329 = vmatpush1.bf16.msra.mxu0 0
        %5330 = vmatprep.subr.bf16.mxu0 0
        %5331 = vmatpush1.bf16.msra.mxu0 0
        %5332 = vmatprep.subr.bf16.mxu0 0
        %5333 = vmatpush1.bf16.msra.mxu0 0
        %5334 = vmatprep.subr.bf16.mxu0 0
        %5335 = vmatpush1.bf16.msra.mxu0 0
        %5336 = vmatprep.subr.bf16.mxu0 0
        %5337 = vmatpush1.bf16.msra.mxu0 0
        %5338 = vmatprep.mubr.bf16.mxu0 0
        %5339 = vmatmul.mubr.bf16.gmra.mrb[0].mxu0 %v4346
        %v5340 = vpop.f32.mrb[0].mxu0
        %v5341 = vadd.f32 0.0, %v5340
        %v5342 = vpop.f32.mrb[0].mxu0
        %v5343 = vpop.f32.mrb[0].mxu0
        %v5344 = vadd.f32 0.0, %v5343
        %v5345 = vpop.f32.mrb[0].mxu0
        %5346 = vmatprep.mubr.bf16.mxu0 0
        %5347 = vmatmul.mubr.bf16.gmra.mrb[0].mxu0 %v4349
        %v5348 = vpop.f32.mrb[0].mxu0
        %v5349 = vadd.f32 0.0, %v5348
        %v5350 = vpop.f32.mrb[0].mxu0
        %v5351 = vpop.f32.mrb[0].mxu0
        %v5352 = vadd.f32 0.0, %v5351
        %v5353 = vpop.f32.mrb[0].mxu0
        %5354 = vmatprep.mubr.bf16.mxu0 0
        %5355 = vmatmul.mubr.bf16.gmra.mrb[0].mxu0 %v4352
        %v5356 = vpop.f32.mrb[0].mxu0
        %v5357 = vadd.f32 0.0, %v5356
        %v5358 = vpop.f32.mrb[0].mxu0
        %v5359 = vpop.f32.mrb[0].mxu0
        %v5360 = vadd.f32 0.0, %v5359
        %v5361 = vpop.f32.mrb[0].mxu0
        %5362 = vmatprep.mubr.bf16.mxu0 0
        %5363 = vmatmul.mubr.bf16.gmra.mrb[0].mxu0 %v4355
        %v5364 = vpop.f32.mrb[0].mxu0
        %v5365 = vadd.f32 0.0, %v5364
        %v5366 = vpop.f32.mrb[0].mxu0
        %v5367 = vpop.f32.mrb[0].mxu0
        %v5368 = vadd.f32 0.0, %v5367
        %v5369 = vpop.f32.mrb[0].mxu0
        %5370 = vmatprep.mubr.bf16.mxu0 0
        %5371 = vmatmul.mubr.bf16.gmra.mrb[0].mxu0 %v4358
        %v5372 = vpop.f32.mrb[0].mxu0
        %v5373 = vadd.f32 0.0, %v5372
        %v5374 = vpop.f32.mrb[0].mxu0
        %v5375 = vpop.f32.mrb[0].mxu0
        %v5376 = vadd.f32 0.0, %v5375
        %v5377 = vpop.f32.mrb[0].mxu0
        %5378 = vmatprep.mubr.bf16.mxu0 0
        %5379 = vmatmul.mubr.bf16.gmra.mrb[0].mxu0 %v4361
        %v5380 = vpop.f32.mrb[0].mxu0
        %v5381 = vadd.f32 0.0, %v5380
        %v5382 = vpop.f32.mrb[0].mxu0
        %v5383 = vpop.f32.mrb[0].mxu0
        %v5384 = vadd.f32 0.0, %v5383
        %v5385 = vpop.f32.mrb[0].mxu0
        %5386 = vmatprep.mubr.bf16.mxu0 0
        %5387 = vmatmul.mubr.bf16.gmra.mrb[0].mxu0 %v4925
        %v5388 = vpop.f32.mrb[0].mxu0
        %v5389 = vadd.f32 0.0, %v5388
        %v5390 = vpop.f32.mrb[0].mxu0
        %v5391 = vpop.f32.mrb[0].mxu0
        %v5392 = vadd.f32 0.0, %v5391
        %v5393 = vpop.f32.mrb[0].mxu0
        %5394 = vmatprep.mubr.bf16.mxu0 0
        %5395 = vmatmul.mubr.bf16.gmra.mrb[0].mxu0 %v5301
        %v5396 = vpop.f32.mrb[0].mxu0
        %v5397 = vadd.f32 0.0, %v5396
        %v5398 = vpop.f32.mrb[0].mxu0
        %v5399 = vpop.f32.mrb[0].mxu0
        %v5400 = vadd.f32 0.0, %v5399
        %v5401 = vpop.f32.mrb[0].mxu0
        %5402 = vdwg.mxu0
        %v5403 = vadd.f32 %v5274, %v5341
        %v5404 = vadd.f32 %v5275, %v5344
        %v5405 = vadd.f32 %v5276, %v5349
        %v5406 = vadd.f32 %v5277, %v5352
        %v5407 = vadd.f32 %v5278, %v5357
        %v5408 = vadd.f32 %v5279, %v5360
        %v5409 = vadd.f32 %v5280, %v5365
        %v5410 = vadd.f32 %v5281, %v5368
        %v5411 = vadd.f32 %v5282, %v5373
        %v5412 = vadd.f32 %v5283, %v5376
        %v5413 = vadd.f32 %v5284, %v5381
        %v5414 = vadd.f32 %v5285, %v5384
        %v5415 = vadd.f32 %v5286, %v5389
        %v5416 = vadd.f32 %v5287, %v5392
        %v5417 = vadd.f32 %v5288, %v5397
        %v5418 = vadd.f32 %v5289, %v5400
        %v5419 = vrot.slane %v4229, 2
        %v5420 = vrot.slane %v4189, 2
        %v5421 = vsel %vm927, %v5419, %v5420
        %v5422 = vrot.slane %v4239, 2
        %v5423 = vsel %vm927, %v5420, %v5422
        %v5426 = vpack.c.bf16 %v5423, %v5421
        %v5428 = vsel %vm4338, %v5426, 0
        %v5431 = vand.u32 %v4248, %v4365
        %5433 = vmatprep.subr.bf16.mxu0 0
        %5434 = vmatpush1.bf16.msra.mxu0 %v5431
        %5435 = vmatprep.subr.bf16.mxu0 0
        %5436 = vmatpush1.bf16.msra.mxu0 0
        %5437 = vmatprep.subr.bf16.mxu0 0
        %5438 = vmatpush1.bf16.msra.mxu0 0
        %5439 = vmatprep.subr.bf16.mxu0 0
        %5440 = vmatpush1.bf16.msra.mxu0 0
        %5441 = vmatprep.subr.bf16.mxu0 0
        %5442 = vmatpush1.bf16.msra.mxu0 0
        %5443 = vmatprep.subr.bf16.mxu0 0
        %5444 = vmatpush1.bf16.msra.mxu0 0
        %5445 = vmatprep.subr.bf16.mxu0 0
        %5446 = vmatpush1.bf16.msra.mxu0 0
        %5447 = vmatprep.subr.bf16.mxu0 0
        %5448 = vmatpush1.bf16.msra.mxu0 0
        %5449 = vmatprep.subr.bf16.mxu0 0
        %5450 = vmatpush1.bf16.msra.mxu0 0
        %5451 = vmatprep.subr.bf16.mxu0 0
        %5452 = vmatpush1.bf16.msra.mxu0 0
        %5453 = vmatprep.subr.bf16.mxu0 0
        %5454 = vmatpush1.bf16.msra.mxu0 0
        %5455 = vmatprep.subr.bf16.mxu0 0
        %5456 = vmatpush1.bf16.msra.mxu0 0
        %5457 = vmatprep.subr.bf16.mxu0 0
        %5458 = vmatpush1.bf16.msra.mxu0 0
        %5459 = vmatprep.subr.bf16.mxu0 0
        %5460 = vmatpush1.bf16.msra.mxu0 0
        %5461 = vmatprep.subr.bf16.mxu0 0
        %5462 = vmatpush1.bf16.msra.mxu0 0
        %5463 = vmatprep.subr.bf16.mxu0 0
        %5464 = vmatpush1.bf16.msra.mxu0 0
        %5465 = vmatprep.mubr.bf16.mxu0 0
        %5466 = vmatmul.mubr.bf16.gmra.mrb[0].mxu0 %v4661
        %v5467 = vpop.f32.mrb[0].mxu0
        %v5468 = vadd.f32 0.0, %v5467
        %v5469 = vpop.f32.mrb[0].mxu0
        %v5470 = vpop.f32.mrb[0].mxu0
        %v5471 = vadd.f32 0.0, %v5470
        %v5472 = vpop.f32.mrb[0].mxu0
        %5473 = vmatprep.mubr.bf16.mxu0 0
        %5474 = vmatmul.mubr.bf16.gmra.mrb[0].mxu0 %v4664
        %v5475 = vpop.f32.mrb[0].mxu0
        %v5476 = vadd.f32 0.0, %v5475
        %v5477 = vpop.f32.mrb[0].mxu0
        %v5478 = vpop.f32.mrb[0].mxu0
        %v5479 = vadd.f32 0.0, %v5478
        %v5480 = vpop.f32.mrb[0].mxu0
        %5481 = vmatprep.mubr.bf16.mxu0 0
        %5482 = vmatmul.mubr.bf16.gmra.mrb[0].mxu0 %v4667
        %v5483 = vpop.f32.mrb[0].mxu0
        %v5484 = vadd.f32 0.0, %v5483
        %v5485 = vpop.f32.mrb[0].mxu0
        %v5486 = vpop.f32.mrb[0].mxu0
        %v5487 = vadd.f32 0.0, %v5486
        %v5488 = vpop.f32.mrb[0].mxu0
        %5489 = vmatprep.mubr.bf16.mxu0 0
        %5490 = vmatmul.mubr.bf16.gmra.mrb[0].mxu0 %v4670
        %v5491 = vpop.f32.mrb[0].mxu0
        %v5492 = vadd.f32 0.0, %v5491
        %v5493 = vpop.f32.mrb[0].mxu0
        %v5494 = vpop.f32.mrb[0].mxu0
        %v5495 = vadd.f32 0.0, %v5494
        %v5496 = vpop.f32.mrb[0].mxu0
        %5497 = vmatprep.mubr.bf16.mxu0 0
        %5498 = vmatmul.mubr.bf16.gmra.mrb[0].mxu0 %v4673
        %v5499 = vpop.f32.mrb[0].mxu0
        %v5500 = vadd.f32 0.0, %v5499
        %v5501 = vpop.f32.mrb[0].mxu0
        %v5502 = vpop.f32.mrb[0].mxu0
        %v5503 = vadd.f32 0.0, %v5502
        %v5504 = vpop.f32.mrb[0].mxu0
        %5505 = vmatprep.mubr.bf16.mxu0 0
        %5506 = vmatmul.mubr.bf16.gmra.mrb[0].mxu0 %v4676
        %v5507 = vpop.f32.mrb[0].mxu0
        %v5508 = vadd.f32 0.0, %v5507
        %v5509 = vpop.f32.mrb[0].mxu0
        %v5510 = vpop.f32.mrb[0].mxu0
        %v5511 = vadd.f32 0.0, %v5510
        %v5512 = vpop.f32.mrb[0].mxu0
        %5513 = vmatprep.mubr.bf16.mxu0 0
        %5514 = vmatmul.mubr.bf16.gmra.mrb[0].mxu0 %v5052
        %v5515 = vpop.f32.mrb[0].mxu0
        %v5516 = vadd.f32 0.0, %v5515
        %v5517 = vpop.f32.mrb[0].mxu0
        %v5518 = vpop.f32.mrb[0].mxu0
        %v5519 = vadd.f32 0.0, %v5518
        %v5520 = vpop.f32.mrb[0].mxu0
        %5521 = vmatprep.mubr.bf16.mxu0 0
        %5522 = vmatmul.mubr.bf16.gmra.mrb[0].mxu0 %v5428
        %v5523 = vpop.f32.mrb[0].mxu0
        %v5524 = vadd.f32 0.0, %v5523
        %v5525 = vpop.f32.mrb[0].mxu0
        %v5526 = vpop.f32.mrb[0].mxu0
        %v5527 = vadd.f32 0.0, %v5526
        %v5528 = vpop.f32.mrb[0].mxu0
        %5529 = vdwg.mxu0
        %v5530 = vadd.f32 %v5403, %v5468
        %v5531 = vadd.f32 %v5404, %v5471
        %v5532 = vadd.f32 %v5405, %v5476
        %v5533 = vadd.f32 %v5406, %v5479
        %v5534 = vadd.f32 %v5407, %v5484
        %v5535 = vadd.f32 %v5408, %v5487
        %v5536 = vadd.f32 %v5409, %v5492
        %v5537 = vadd.f32 %v5410, %v5495
        %v5538 = vadd.f32 %v5411, %v5500
        %v5539 = vadd.f32 %v5412, %v5503
        %v5540 = vadd.f32 %v5413, %v5508
        %v5541 = vadd.f32 %v5414, %v5511
        %v5542 = vadd.f32 %v5415, %v5516
        %v5543 = vadd.f32 %v5416, %v5519
        %v5544 = vadd.f32 %v5417, %v5524
        %v5545 = vadd.f32 %v5418, %v5527
        %v5547 = vlaneseq
        %v5548 = vshrl.u32 %v5547, 7
        %v5549 = vsub.s32 0, %v5548
        %v5550 = vrot.slane %v4249, %v5549
        %v5552 = vadd.f32 %v5530, %v5550
        %v5553 = vadd.f32 %v5531, %v5550
        %v5554 = vadd.f32 %v5532, %v5550
        %v5555 = vadd.f32 %v5533, %v5550
        %v5556 = vadd.f32 %v5534, %v5550
        %v5557 = vadd.f32 %v5535, %v5550
        %v5558 = vadd.f32 %v5536, %v5550
        %v5559 = vadd.f32 %v5537, %v5550
        %v5560 = vadd.f32 %v5538, %v5550
        %v5561 = vadd.f32 %v5539, %v5550
        %v5562 = vadd.f32 %v5540, %v5550
        %v5563 = vadd.f32 %v5541, %v5550
        %v5564 = vadd.f32 %v5542, %v5550
        %v5565 = vadd.f32 %v5543, %v5550
        %v5566 = vadd.f32 %v5544, %v5550
        %v5567 = vadd.f32 %v5545, %v5550
        %v5568 = vmax.f32 %v5552, 0.0
        %v5569 = vmax.f32 %v5553, 0.0
        %v5570 = vmax.f32 %v5554, 0.0
        %v5571 = vmax.f32 %v5555, 0.0
        %v5572 = vmax.f32 %v5556, 0.0
        %v5573 = vmax.f32 %v5557, 0.0
        %v5574 = vmax.f32 %v5558, 0.0
        %v5575 = vmax.f32 %v5559, 0.0
        %v5576 = vmax.f32 %v5560, 0.0
        %v5577 = vmax.f32 %v5561, 0.0
        %v5578 = vmax.f32 %v5562, 0.0
        %v5579 = vmax.f32 %v5563, 0.0
        %v5580 = vmax.f32 %v5564, 0.0
        %v5581 = vmax.f32 %v5565, 0.0
        %v5582 = vmax.f32 %v5566, 0.0
        %v5583 = vmax.f32 %v5567, 0.0
        %vm5584 = vcmask 261120
        %v5585 = vsel %vm5584, %v5568, 0.0
        %v5586 = vsel %vm5584, %v5569, 0.0
        %v5587 = vadd.f32 %v5585, %v5586
        %v5588 = vsel %vm5584, %v5570, 0.0
        %v5589 = vadd.f32 %v5587, %v5588
        %v5590 = vsel %vm5584, %v5571, 0.0
        %v5591 = vadd.f32 %v5589, %v5590
        %v5592 = vsel %vm5584, %v5572, 0.0
        %v5593 = vadd.f32 %v5591, %v5592
        %v5594 = vsel %vm5584, %v5573, 0.0
        %v5595 = vadd.f32 %v5593, %v5594
        %v5596 = vsel %vm5584, %v5574, 0.0
        %v5597 = vadd.f32 %v5595, %v5596
        %v5598 = vsel %vm5584, %v5575, 0.0
        %v5599 = vadd.f32 %v5597, %v5598
        %v5600 = vsel %vm5584, %v5576, 0.0
        %v5601 = vadd.f32 %v5599, %v5600
        %v5602 = vsel %vm5584, %v5577, 0.0
        %v5603 = vadd.f32 %v5601, %v5602
        %v5604 = vsel %vm5584, %v5578, 0.0
        %v5605 = vadd.f32 %v5603, %v5604
        %v5606 = vsel %vm5584, %v5579, 0.0
        %v5607 = vadd.f32 %v5605, %v5606
        %v5608 = vsel %vm5584, %v5580, 0.0
        %v5609 = vadd.f32 %v5607, %v5608
        %v5610 = vsel %vm5584, %v5581, 0.0
        %v5611 = vadd.f32 %v5609, %v5610
        %v5612 = vsel %vm5584, %v5582, 0.0
        %v5613 = vadd.f32 %v5611, %v5612
        %v5614 = vsel %vm5584, %v5583, 0.0
        %v5615 = vadd.f32 %v5613, %v5614
        %v5616 = vrot.slane %v5615, 4
        %v5617 = vadd.f32 %v5615, %v5616
        %v5618 = vrot.slane %v5617, 2
        %v5619 = vadd.f32 %v5617, %v5618
        %v5620 = vrot.slane %v5619, 1
        %v5621 = vadd.f32 %v5619, %v5620
        %p5622 = scmp.eq.s32.totalorder %s28, 0
        // Predicated region
        $region57: #{_lambda_.1} parent=55 // pred_check
          %p5623 = pneg %p5622
        $region58: #{_lambda_.1} parent=55 // pred_check_branch
          %5625 = sbr.rel (%p5623) target = $region60
        $region59: #{_lambda_.1} parent=55 // pred_region
          %vm5626 = vcmask 253952
          %5627 = vst.msk [vmem:[#allocation2] sm:$0x1] %vm5626, 0.0
        $region60: #{_lambda_.1} parent=55 // pred_fallthru
          _
        %v5628 = vld [vmem:[#allocation2] sm:$0x1]
        %v5629 = vadd.f32 %v5628, %v5621
        %vm5630 = vcmask 253952
        %5631 = vst.msk [vmem:[#allocation2] sm:$0x1] %vm5630, %v5629
        %p5632 = scmp.eq.s32.totalorder %s28, 1
        // Predicated region
        $region61: #{_lambda_.1} parent=55 // pred_check
          %p5633 = pneg %p5632
        $region62: #{_lambda_.1} parent=55 // pred_check_branch
          %5635 = sbr.rel (%p5633) target = $region64
        $region63: #{_lambda_.1} parent=55 // pred_region
          %v5636 = vld [vmem:[#allocation2] sm:$0x1]
          %v5637 = vmul.f32 %v5636, 0.00390625
          %v5638 = vpack.c.bf16 %v5637, %v5637
          %v5639 = vld [vmem:[%s7] sm:$0xf]
          %v5640 = vld [vmem:[%s7 + $0x4] sm:$0xf]
          %v5641 = vld [vmem:[%s7 + $0x8] sm:$0xf]
          %v5642 = vld [vmem:[%s7 + $0xc] sm:$0xf]
          %v5643 = vld [vmem:[%s8] sm:$0x1]
          %v5648 = vunpack.c.l.b16 %v5639
          %v5649 = vunpack.c.l.b16 %v5640
          %v5650 = vunpack.c.l.b16 %v5641
          %v5651 = vunpack.c.l.b16 %v5642
          %v5652 = vpack.c.b16 %v5649, %v5648
          %v5653 = vpack.c.b16 %v5651, %v5650
          %v5657 = vsel %vm5584, %v5638, 0
          %5659 = vmatprep.subr.bf16.mxu0 0
          %5660 = vmatpush1.bf16.msra.mxu0 %v5652
          %5661 = vmatprep.subr.bf16.mxu0 0
          %5662 = vmatpush1.bf16.msra.mxu0 %v5653
          %5663 = vmatprep.subr.bf16.mxu0 0
          %5664 = vmatpush1.bf16.msra.mxu0 0
          %5665 = vmatprep.subr.bf16.mxu0 0
          %5666 = vmatpush1.bf16.msra.mxu0 0
          %5667 = vmatprep.subr.bf16.mxu0 0
          %5668 = vmatpush1.bf16.msra.mxu0 0
          %5669 = vmatprep.subr.bf16.mxu0 0
          %5670 = vmatpush1.bf16.msra.mxu0 0
          %5671 = vmatprep.subr.bf16.mxu0 0
          %5672 = vmatpush1.bf16.msra.mxu0 0
          %5673 = vmatprep.subr.bf16.mxu0 0
          %5674 = vmatpush1.bf16.msra.mxu0 0
          %5675 = vmatprep.subr.bf16.mxu0 0
          %5676 = vmatpush1.bf16.msra.mxu0 0
          %5677 = vmatprep.subr.bf16.mxu0 0
          %5678 = vmatpush1.bf16.msra.mxu0 0
          %5679 = vmatprep.subr.bf16.mxu0 0
          %5680 = vmatpush1.bf16.msra.mxu0 0
          %5681 = vmatprep.subr.bf16.mxu0 0
          %5682 = vmatpush1.bf16.msra.mxu0 0
          %5683 = vmatprep.subr.bf16.mxu0 0
          %5684 = vmatpush1.bf16.msra.mxu0 0
          %5685 = vmatprep.subr.bf16.mxu0 0
          %5686 = vmatpush1.bf16.msra.mxu0 0
          %5687 = vmatprep.subr.bf16.mxu0 0
          %5688 = vmatpush1.bf16.msra.mxu0 0
          %5689 = vmatprep.subr.bf16.mxu0 0
          %5690 = vmatpush1.bf16.msra.mxu0 0
          %5691 = vmatprep.mubr.bf16.mxu0 0
          %5692 = vmatmul.mubr.bf16.gmra.mrb[0].mxu0 %v5657
          %v5693 = vpop.f32.mrb[0].mxu0
          %v5694 = vadd.f32 %v5643, %v5693
          %v5695 = vpop.f32.mrb[0].mxu0
          %v5696 = vpop.f32.mrb[0].mxu0
          %v5697 = vpop.f32.mrb[0].mxu0
          %5698 = vdwg.mxu0
          %vm5699 = vcmask 81920
          %5700 = vst.msk [vmem:[%s336] sm:$0x1] %vm5699, %v5694
        $region64: #{_lambda_.1} parent=55 // pred_fallthru
          _
        %s5701 = sand.u32 %s237, 1
        %s5702 = scalar_lea.sflag [#allocation4], %s5701
        %s5703 = sand.u32 %s237, 1
        %s5704 = scalar_lea.vmem [#allocation3], %s5703
        // Predicated region
        $region65: #{_lambda_.1} parent=55 // pred_check
          %p5705 = pneg %p247
        $region66: #{_lambda_.1} parent=55 // pred_check_branch
          %5707 = sbr.rel (%p5705) target = $region68
        $region67: #{_lambda_.1} parent=55 // pred_region
          %s5709 = ssub.s32 16, 16
          %5710 = vsyncadd %s5702, %s5709
          %s5711 = smul.addr %s27, 16
          %s5712 = scalar_lea.hbm %s9, %s5711
          %s5714 = sshll.u32 %s5704, 4
          %s5715 = int_to_ptr.vmem [resolvable:$true] %s5714
          %5717 = dma.vmem_to_hbm [thread:$0]  %s5715, 16, %s5712, %s5702
        $region68: #{_lambda_.1} parent=55 // pred_fallthru
          _
      $region56: #{_lambda_.1} parent=5 // pred_fallthru
        _
      %p5718 = scmp.le.s32.totalorder 2, %s18
      // Predicated region
      $region69: #{_lambda_.1} parent=5 // pred_check
        %p5719 = pneg %p5718
      $region70: #{_lambda_.1} parent=5 // pred_check_branch
        %5721 = sbr.rel (%p5719) target = $region72
      $region71: #{_lambda_.1} parent=5 // pred_region
        %s5722 = ssub.s32 %s18, 2
        // Predicated region
        $region73: #{_lambda_.1} parent=71 // pred_check
          %p5723 = pneg %p253
        $region74: #{_lambda_.1} parent=71 // pred_check_branch
          %5725 = sbr.rel (%p5723) target = $region76
        $region75: #{_lambda_.1} parent=71 // pred_region
          %s5726 = sand.u32 %s238, 1
          %s5727 = scalar_lea.sflag [#allocation4], %s5726
          %s5728 = sand.u32 %s238, 1
          %s5729 = scalar_lea.vmem [#allocation3], %s5728
          %5730 = dma.done %s5727, 16
        $region76: #{_lambda_.1} parent=71 // pred_fallthru
          _
      $region72: #{_lambda_.1} parent=5 // pred_fallthru
        _
    $region6: #{_lambda_.1} parent=1 // loop_footer
      %s22 = sadd.s32 1, %s18
    $region7: #{_lambda_.1} parent=1 // loop_footer_branch
      %17 = sbr.rel target = $region3
    $region8: #{_lambda_.1} parent=1 // loop_exit
      _
    %5731 = vsyncpa [#allocation4], 1
    %s5732 = scalar_lea.sflag [#allocation4], 1
    %5733 = vsyncpa %s5732, 1

</llo_original>
